<compile_context>
chip_gen: v6e
topology: v6e:2x2x1
jax: 0.10.0
libtpu: 0.0.40
codegen_flags: <defaults>
</compile_context>

<pallas_src>
from functools import partial

import jax
import jax.numpy as jnp
import numpy as np
from jax import lax
from jax.experimental import pallas as pl
from jax.experimental.pallas import tpu as pltpu


def _make_conv_kernel(TR, OW, C, compute_dtype, fuse_taps):
    C2 = 2 * C

    def conv_kernel(xa_ref, xb_ref, w_ref, b_ref, o_ref):
        # xa_ref: (1, 2*TR, OW+1, 2C)   padded rows [2*TR*r, 2*TR*r + 2*TR)
        # xb_ref: (1, 2,    OW+1, 2C)   2-row halo (shared with the next row tile)
        # w_ref : (16*C, C)             row index = kh*4C + kw*C + ci
        # b_ref : (1, C)
        # o_ref : (1, TR, OW, C)
        w = w_ref[...]
        bias = b_ref[...]                                    # (1, C), f32

        def slab(i, kh):
            # Padded row 2*i + kh (column pairs already folded into lanes).
            pr = 2 * i + kh
            if pr < 2 * TR:
                s = xa_ref[0, pr]                            # (OW+1, 2C)
            else:
                s = xb_ref[0, pr - 2 * TR]                   # halo rows
            return s.astype(compute_dtype)

        for i in range(TR):                                  # static unroll, TR small
            parts = []
            for kh in range(4):
                s = slab(i, kh)                              # (OW+1, 2C)
                parts.append(s[:OW, :])                      # kw in {0, 1}
                parts.append(s[1:, :])                       # kw in {2, 3}

            if fuse_taps:
                # Lane-aligned pieces -> single K = 16*C contraction (one MXU pass,
                # accumulation inside the MXU).
                lhs = jnp.concatenate(parts, axis=-1)        # (OW, 16C)
                acc = jnp.dot(lhs, w, preferred_element_type=jnp.float32)
            else:
                # Small C: accumulate 8 matmuls of K = 2*C (sublane-aligned slices
                # of the fused weight).
                acc = jnp.zeros((OW, C), jnp.float32)
                for p, part in enumerate(parts):
                    w_p = w[p * C2:(p + 1) * C2, :]          # (2C, C)
                    acc = acc + jnp.dot(part, w_p,
                                        preferred_element_type=jnp.float32)

            o_ref[0, i] = (acc + bias).astype(o_ref.dtype)   # (OW, C)

    return conv_kernel


def _pick_row_tile(OH):
    for cand in (8, 4, 2, 1):
        if OH % cand == 0:
            return cand
    return 1


@partial(jax.jit, static_argnames=("row_tile", "compute_dtype"))
def downsample_forward(x_nchw, t, w_oihw, b, *, row_tile=None, compute_dtype=None):
    """Downsample.forward: Conv2d(C, C, k=4, s=2, p=1).  `t` is accepted and ignored."""
    del t
    N, C, H, W = x_nchw.shape
    assert H % 2 == 0 and W % 2 == 0, "kernel 4 / stride 2 / pad 1 path assumes even H, W"
    OH, OW = H // 2, W // 2
    TR = row_tile if row_tile is not None else _pick_row_tile(OH)
    assert OH % TR == 0, f"row_tile={TR} must divide OH={OH}"
    cdt = compute_dtype if compute_dtype is not None else x_nchw.dtype
    fuse_taps = (2 * C) % 128 == 0       # lane-aligned pieces -> single K=16C matmul

    # NCHW -> NHWC (channels on lanes), zero-pad, fold column pairs into lanes.
    # The reshape below is contiguous (metadata only, no extra HBM pass).
    x = jnp.transpose(x_nchw, (0, 2, 3, 1))                      # (N, H, W, C)
    xpad = jnp.pad(x, ((0, 0), (1, 1), (1, 1), (0, 0)))          # (N, H+2, W+2, C)
    x2 = xpad.reshape(N, H + 2, OW + 1, 2 * C)                   # (N, H+2, OW+1, 2C)

    # PyTorch OIHW -> HWIO -> fused (16C, C); row index = kh*4C + kw*C + ci.
    w_hwio = jnp.transpose(w_oihw, (2, 3, 1, 0))                 # (4, 4, Cin, Cout)
    w_fused = w_hwio.reshape(16 * C, C).astype(cdt)
    b2 = b.reshape(1, C).astype(jnp.float32)

    kernel = _make_conv_kernel(TR, OW, C, cdt, fuse_taps)
    out_nhwc = pl.pallas_call(
        kernel,
        out_shape=jax.ShapeDtypeStruct((N, OH, OW, C), x_nchw.dtype),
        grid=(N, OH // TR),
        in_specs=[
            # main rows of the tile: padded rows [2*TR*r, 2*TR*r + 2*TR)
            pl.BlockSpec((1, 2 * TR, OW + 1, 2 * C), lambda n, r: (n, r, 0, 0)),
            # 2-row halo: padded rows [2*TR*(r+1), 2*TR*(r+1) + 2)
            pl.BlockSpec((1, 2, OW + 1, 2 * C), lambda n, r: (n, TR * (r + 1), 0, 0)),
            # weights / bias: constant index_map -> fetched once, stays resident
            pl.BlockSpec((16 * C, C), lambda n, r: (0, 0)),
            pl.BlockSpec((1, C), lambda n, r: (0, 0)),
        ],
        out_specs=pl.BlockSpec((1, TR, OW, C), lambda n, r: (n, r, 0, 0)),
        compiler_params=pltpu.CompilerParams(
            dimension_semantics=("parallel", "parallel")),
    )(x2, x2, w_fused, b2)

    return jnp.transpose(out_nhwc, (0, 3, 1, 2))                 # back to NCHW


def _reference_conv(x_nchw, w_oihw, b):
    out = lax.conv_general_dilated(
        x_nchw, w_oihw, window_strides=(2, 2), padding=[(1, 1), (1, 1)],
        dimension_numbers=("NCHW", "OIHW", "NCHW"))
    return out + b[None, :, None, None]


if __name__ == "__main__":
    key = jax.random.PRNGKey(0)
    k_x, k_w, k_b, k_t = jax.random.split(key, 4)

    # --- Primary test: the module's shapes (small C -> K=2C accumulation path).
    N, C, H, W = 2, 4, 16, 16
    x = jax.random.normal(k_x, (N, C, H, W), dtype=jnp.float32)
    t = jax.random.normal(k_t, (N,), dtype=jnp.float32)          # unused by forward

    fan_in = C * 4 * 4
    bound = 1.0 / np.sqrt(fan_in)
    w_oihw = jax.random.uniform(k_w, (C, C, 4, 4), jnp.float32, -bound, bound)
    b = jax.random.uniform(k_b, (C,), jnp.float32, -bound, bound)

    ref = _reference_conv(x, w_oihw, b)

    # f32 operands, two row tiles per image (exercises the halo block).
    out = jax.block_until_ready(downsample_forward(x, t, w_oihw, b, row_tile=4))
    assert out.shape == (N, C, H // 2, W // 2), out.shape
    # Tolerances cover default MXU f32 precision (bf16-pass matmuls).
    np.testing.assert_allclose(np.asarray(out), np.asarray(ref), rtol=2e-2, atol=2e-2)

    # bf16 operands, f32 accumulation (v6e/v7x MXU path), different row tiling.
    out_bf16 = jax.block_until_ready(
        downsample_forward(x, t, w_oihw, b, row_tile=2, compute_dtype=jnp.bfloat16))
    np.testing.assert_allclose(np.asarray(out_bf16), np.asarray(ref), rtol=5e-2, atol=5e-2)

    # --- Larger-channel config: exercises the fused single K = 16*C matmul path.
    Nb, Cb, Hb, Wb = 1, 64, 8, 8
    xb_ = jax.random.normal(k_x, (Nb, Cb, Hb, Wb), dtype=jnp.float32)
    bound_b = 1.0 / np.sqrt(Cb * 16)
    wb = jax.random.uniform(k_w, (Cb, Cb, 4, 4), jnp.float32, -bound_b, bound_b)
    bb = jax.random.uniform(k_b, (Cb,), jnp.float32, -bound_b, bound_b)
    ref_b = _reference_conv(xb_, wb, bb)
    out_b = jax.block_until_ready(downsample_forward(xb_, None, wb, bb, row_tile=2))
    np.testing.assert_allclose(np.asarray(out_b), np.asarray(ref_b), rtol=2e-2, atol=2e-2)

    print("KERNEL_OK")
</pallas_src>

<mosaic_0001>
module attributes {stable_mosaic.version = 11 : i64} {
  func.func @conv_kernel(%arg0: i32, %arg1: i32, %arg2: memref<1x8x9x8xf32, #tpu.memory_space<vmem>>, %arg3: memref<1x2x9x8xf32, #tpu.memory_space<vmem>>, %arg4: memref<64x4xf32, #tpu.memory_space<vmem>>, %arg5: memref<1x4xf32, #tpu.memory_space<vmem>>, %arg6: memref<1x4x8x4xf32, #tpu.memory_space<vmem>>) attributes {dimension_semantics = [#tpu.dimension_semantics<parallel>, #tpu.dimension_semantics<parallel>], iteration_bounds = array<i64: 2, 2>, scalar_prefetch = 0 : i64, scratch_operands = 0 : i64, tpu.core_type = #tpu.core_type<tc>, window_params = [{transform_indices = @transform_0, window_bounds = array<i64: 1, 8, 9, 8>}, {transform_indices = @transform_1, window_bounds = array<i64: 1, 2, 9, 8>}, {pipeline_mode = #tpu.pipeline_mode<synchronous>, transform_indices = @transform_2, window_bounds = array<i64: 64, 4>}, {pipeline_mode = #tpu.pipeline_mode<synchronous>, transform_indices = @transform_3, window_bounds = array<i64: 1, 4>}, {transform_indices = @transform_4, window_bounds = array<i64: 1, 4, 8, 4>}]} {
    %c0 = arith.constant 0 : index
    %c0_0 = arith.constant 0 : index
    %0 = vector.load %arg4[%c0, %c0_0] : memref<64x4xf32, #tpu.memory_space<vmem>>, vector<64x4xf32>
    %c0_1 = arith.constant 0 : index
    %c0_2 = arith.constant 0 : index
    %1 = vector.load %arg5[%c0_1, %c0_2] : memref<1x4xf32, #tpu.memory_space<vmem>>, vector<1x4xf32>
    %c0_3 = arith.constant 0 : index
    %c0_4 = arith.constant 0 : index
    %c0_5 = arith.constant 0 : index
    %c0_6 = arith.constant 0 : index
    %2 = vector.load %arg2[%c0_3, %c0_4, %c0_5, %c0_6] : memref<1x8x9x8xf32, #tpu.memory_space<vmem>>, vector<1x1x9x8xf32>
    %3 = vector.shape_cast %2 : vector<1x1x9x8xf32> to vector<9x8xf32>
    %4 = vector.extract_strided_slice %3 {offsets = [0, 0], sizes = [8, 8], strides = [1, 1]} : vector<9x8xf32> to vector<8x8xf32>
    %5 = vector.extract_strided_slice %3 {offsets = [1, 0], sizes = [8, 8], strides = [1, 1]} : vector<9x8xf32> to vector<8x8xf32>
    %c0_7 = arith.constant 0 : index
    %c1 = arith.constant 1 : index
    %c0_8 = arith.constant 0 : index
    %c0_9 = arith.constant 0 : index
    %6 = vector.load %arg2[%c0_7, %c1, %c0_8, %c0_9] : memref<1x8x9x8xf32, #tpu.memory_space<vmem>>, vector<1x1x9x8xf32>
    %7 = vector.shape_cast %6 : vector<1x1x9x8xf32> to vector<9x8xf32>
    %8 = vector.extract_strided_slice %7 {offsets = [0, 0], sizes = [8, 8], strides = [1, 1]} : vector<9x8xf32> to vector<8x8xf32>
    %9 = vector.extract_strided_slice %7 {offsets = [1, 0], sizes = [8, 8], strides = [1, 1]} : vector<9x8xf32> to vector<8x8xf32>
    %c0_10 = arith.constant 0 : index
    %c2 = arith.constant 2 : index
    %c0_11 = arith.constant 0 : index
    %c0_12 = arith.constant 0 : index
    %10 = vector.load %arg2[%c0_10, %c2, %c0_11, %c0_12] : memref<1x8x9x8xf32, #tpu.memory_space<vmem>>, vector<1x1x9x8xf32>
    %11 = vector.shape_cast %10 : vector<1x1x9x8xf32> to vector<9x8xf32>
    %12 = vector.extract_strided_slice %11 {offsets = [0, 0], sizes = [8, 8], strides = [1, 1]} : vector<9x8xf32> to vector<8x8xf32>
    %13 = vector.extract_strided_slice %11 {offsets = [1, 0], sizes = [8, 8], strides = [1, 1]} : vector<9x8xf32> to vector<8x8xf32>
    %c0_13 = arith.constant 0 : index
    %c3 = arith.constant 3 : index
    %c0_14 = arith.constant 0 : index
    %c0_15 = arith.constant 0 : index
    %14 = vector.load %arg2[%c0_13, %c3, %c0_14, %c0_15] : memref<1x8x9x8xf32, #tpu.memory_space<vmem>>, vector<1x1x9x8xf32>
    %15 = vector.shape_cast %14 : vector<1x1x9x8xf32> to vector<9x8xf32>
    %16 = vector.extract_strided_slice %15 {offsets = [0, 0], sizes = [8, 8], strides = [1, 1]} : vector<9x8xf32> to vector<8x8xf32>
    %17 = vector.extract_strided_slice %15 {offsets = [1, 0], sizes = [8, 8], strides = [1, 1]} : vector<9x8xf32> to vector<8x8xf32>
    %cst = arith.constant 0.000000e+00 : f32
    %18 = vector.broadcast %cst : f32 to vector<8x4xf32>
    %19 = vector.extract_strided_slice %0 {offsets = [0, 0], sizes = [8, 4], strides = [1, 1]} : vector<64x4xf32> to vector<8x4xf32>
    %cst_16 = arith.constant dense<0.000000e+00> : vector<8x4xf32>
    %20 = tpu.matmul %4, %19, %cst_16 {dimension_numbers = #tpu.dot_dimension_numbers<[1], [0], [0], [1], [0, 0, 1, 1], [], []>} : vector<8x8xf32>, vector<8x4xf32>, vector<8x4xf32> -> vector<8x4xf32>
    %21 = arith.addf %18, %20 : vector<8x4xf32>
    %22 = vector.extract_strided_slice %0 {offsets = [8, 0], sizes = [8, 4], strides = [1, 1]} : vector<64x4xf32> to vector<8x4xf32>
    %cst_17 = arith.constant dense<0.000000e+00> : vector<8x4xf32>
    %23 = tpu.matmul %5, %22, %cst_17 {dimension_numbers = #tpu.dot_dimension_numbers<[1], [0], [0], [1], [0, 0, 1, 1], [], []>} : vector<8x8xf32>, vector<8x4xf32>, vector<8x4xf32> -> vector<8x4xf32>
    %24 = arith.addf %21, %23 : vector<8x4xf32>
    %25 = vector.extract_strided_slice %0 {offsets = [16, 0], sizes = [8, 4], strides = [1, 1]} : vector<64x4xf32> to vector<8x4xf32>
    %cst_18 = arith.constant dense<0.000000e+00> : vector<8x4xf32>
    %26 = tpu.matmul %8, %25, %cst_18 {dimension_numbers = #tpu.dot_dimension_numbers<[1], [0], [0], [1], [0, 0, 1, 1], [], []>} : vector<8x8xf32>, vector<8x4xf32>, vector<8x4xf32> -> vector<8x4xf32>
    %27 = arith.addf %24, %26 : vector<8x4xf32>
    %28 = vector.extract_strided_slice %0 {offsets = [24, 0], sizes = [8, 4], strides = [1, 1]} : vector<64x4xf32> to vector<8x4xf32>
    %cst_19 = arith.constant dense<0.000000e+00> : vector<8x4xf32>
    %29 = tpu.matmul %9, %28, %cst_19 {dimension_numbers = #tpu.dot_dimension_numbers<[1], [0], [0], [1], [0, 0, 1, 1], [], []>} : vector<8x8xf32>, vector<8x4xf32>, vector<8x4xf32> -> vector<8x4xf32>
    %30 = arith.addf %27, %29 : vector<8x4xf32>
    %31 = vector.extract_strided_slice %0 {offsets = [32, 0], sizes = [8, 4], strides = [1, 1]} : vector<64x4xf32> to vector<8x4xf32>
    %cst_20 = arith.constant dense<0.000000e+00> : vector<8x4xf32>
    %32 = tpu.matmul %12, %31, %cst_20 {dimension_numbers = #tpu.dot_dimension_numbers<[1], [0], [0], [1], [0, 0, 1, 1], [], []>} : vector<8x8xf32>, vector<8x4xf32>, vector<8x4xf32> -> vector<8x4xf32>
    %33 = arith.addf %30, %32 : vector<8x4xf32>
    %34 = vector.extract_strided_slice %0 {offsets = [40, 0], sizes = [8, 4], strides = [1, 1]} : vector<64x4xf32> to vector<8x4xf32>
    %cst_21 = arith.constant dense<0.000000e+00> : vector<8x4xf32>
    %35 = tpu.matmul %13, %34, %cst_21 {dimension_numbers = #tpu.dot_dimension_numbers<[1], [0], [0], [1], [0, 0, 1, 1], [], []>} : vector<8x8xf32>, vector<8x4xf32>, vector<8x4xf32> -> vector<8x4xf32>
    %36 = arith.addf %33, %35 : vector<8x4xf32>
    %37 = vector.extract_strided_slice %0 {offsets = [48, 0], sizes = [8, 4], strides = [1, 1]} : vector<64x4xf32> to vector<8x4xf32>
    %cst_22 = arith.constant dense<0.000000e+00> : vector<8x4xf32>
    %38 = tpu.matmul %16, %37, %cst_22 {dimension_numbers = #tpu.dot_dimension_numbers<[1], [0], [0], [1], [0, 0, 1, 1], [], []>} : vector<8x8xf32>, vector<8x4xf32>, vector<8x4xf32> -> vector<8x4xf32>
    %39 = arith.addf %36, %38 : vector<8x4xf32>
    %40 = vector.extract_strided_slice %0 {offsets = [56, 0], sizes = [8, 4], strides = [1, 1]} : vector<64x4xf32> to vector<8x4xf32>
    %cst_23 = arith.constant dense<0.000000e+00> : vector<8x4xf32>
    %41 = tpu.matmul %17, %40, %cst_23 {dimension_numbers = #tpu.dot_dimension_numbers<[1], [0], [0], [1], [0, 0, 1, 1], [], []>} : vector<8x8xf32>, vector<8x4xf32>, vector<8x4xf32> -> vector<8x4xf32>
    %42 = arith.addf %39, %41 : vector<8x4xf32>
    %43 = vector.broadcast %1 : vector<1x4xf32> to vector<8x4xf32>
    %44 = arith.addf %42, %43 : vector<8x4xf32>
    %c0_24 = arith.constant 0 : index
    %c0_25 = arith.constant 0 : index
    %c0_26 = arith.constant 0 : index
    %c0_27 = arith.constant 0 : index
    %45 = vector.load %arg6[%c0_24, %c0_25, %c0_26, %c0_27] : memref<1x4x8x4xf32, #tpu.memory_space<vmem>>, vector<1x1x8x4xf32>
    %46 = vector.shape_cast %45 : vector<1x1x8x4xf32> to vector<8x4xf32>
    %47 = vector.shape_cast %44 : vector<8x4xf32> to vector<1x1x8x4xf32>
    tpu.vector_store %arg6[%c0_24, %c0_25, %c0_26, %c0_27], %47 {strides = array<i32>} : memref<1x4x8x4xf32, #tpu.memory_space<vmem>>, vector<1x1x8x4xf32>,
    %c0_28 = arith.constant 0 : index
    %c2_29 = arith.constant 2 : index
    %c0_30 = arith.constant 0 : index
    %c0_31 = arith.constant 0 : index
    %48 = vector.load %arg2[%c0_28, %c2_29, %c0_30, %c0_31] : memref<1x8x9x8xf32, #tpu.memory_space<vmem>>, vector<1x1x9x8xf32>
    %49 = vector.shape_cast %48 : vector<1x1x9x8xf32> to vector<9x8xf32>
    %50 = vector.extract_strided_slice %49 {offsets = [0, 0], sizes = [8, 8], strides = [1, 1]} : vector<9x8xf32> to vector<8x8xf32>
    %51 = vector.extract_strided_slice %49 {offsets = [1, 0], sizes = [8, 8], strides = [1, 1]} : vector<9x8xf32> to vector<8x8xf32>
    %c0_32 = arith.constant 0 : index
    %c3_33 = arith.constant 3 : index
    %c0_34 = arith.constant 0 : index
    %c0_35 = arith.constant 0 : index
    %52 = vector.load %arg2[%c0_32, %c3_33, %c0_34, %c0_35] : memref<1x8x9x8xf32, #tpu.memory_space<vmem>>, vector<1x1x9x8xf32>
    %53 = vector.shape_cast %52 : vector<1x1x9x8xf32> to vector<9x8xf32>
    %54 = vector.extract_strided_slice %53 {offsets = [0, 0], sizes = [8, 8], strides = [1, 1]} : vector<9x8xf32> to vector<8x8xf32>
    %55 = vector.extract_strided_slice %53 {offsets = [1, 0], sizes = [8, 8], strides = [1, 1]} : vector<9x8xf32> to vector<8x8xf32>
    %c0_36 = arith.constant 0 : index
    %c4 = arith.constant 4 : index
    %c0_37 = arith.constant 0 : index
    %c0_38 = arith.constant 0 : index
    %56 = vector.load %arg2[%c0_36, %c4, %c0_37, %c0_38] : memref<1x8x9x8xf32, #tpu.memory_space<vmem>>, vector<1x1x9x8xf32>
    %57 = vector.shape_cast %56 : vector<1x1x9x8xf32> to vector<9x8xf32>
    %58 = vector.extract_strided_slice %57 {offsets = [0, 0], sizes = [8, 8], strides = [1, 1]} : vector<9x8xf32> to vector<8x8xf32>
    %59 = vector.extract_strided_slice %57 {offsets = [1, 0], sizes = [8, 8], strides = [1, 1]} : vector<9x8xf32> to vector<8x8xf32>
    %c0_39 = arith.constant 0 : index
    %c5 = arith.constant 5 : index
    %c0_40 = arith.constant 0 : index
    %c0_41 = arith.constant 0 : index
    %60 = vector.load %arg2[%c0_39, %c5, %c0_40, %c0_41] : memref<1x8x9x8xf32, #tpu.memory_space<vmem>>, vector<1x1x9x8xf32>
    %61 = vector.shape_cast %60 : vector<1x1x9x8xf32> to vector<9x8xf32>
    %62 = vector.extract_strided_slice %61 {offsets = [0, 0], sizes = [8, 8], strides = [1, 1]} : vector<9x8xf32> to vector<8x8xf32>
    %63 = vector.extract_strided_slice %61 {offsets = [1, 0], sizes = [8, 8], strides = [1, 1]} : vector<9x8xf32> to vector<8x8xf32>
    %cst_42 = arith.constant 0.000000e+00 : f32
    %64 = vector.broadcast %cst_42 : f32 to vector<8x4xf32>
    %65 = vector.extract_strided_slice %0 {offsets = [0, 0], sizes = [8, 4], strides = [1, 1]} : vector<64x4xf32> to vector<8x4xf32>
    %cst_43 = arith.constant dense<0.000000e+00> : vector<8x4xf32>
    %66 = tpu.matmul %50, %65, %cst_43 {dimension_numbers = #tpu.dot_dimension_numbers<[1], [0], [0], [1], [0, 0, 1, 1], [], []>} : vector<8x8xf32>, vector<8x4xf32>, vector<8x4xf32> -> vector<8x4xf32>
    %67 = arith.addf %64, %66 : vector<8x4xf32>
    %68 = vector.extract_strided_slice %0 {offsets = [8, 0], sizes = [8, 4], strides = [1, 1]} : vector<64x4xf32> to vector<8x4xf32>
    %cst_44 = arith.constant dense<0.000000e+00> : vector<8x4xf32>
    %69 = tpu.matmul %51, %68, %cst_44 {dimension_numbers = #tpu.dot_dimension_numbers<[1], [0], [0], [1], [0, 0, 1, 1], [], []>} : vector<8x8xf32>, vector<8x4xf32>, vector<8x4xf32> -> vector<8x4xf32>
    %70 = arith.addf %67, %69 : vector<8x4xf32>
    %71 = vector.extract_strided_slice %0 {offsets = [16, 0], sizes = [8, 4], strides = [1, 1]} : vector<64x4xf32> to vector<8x4xf32>
    %cst_45 = arith.constant dense<0.000000e+00> : vector<8x4xf32>
    %72 = tpu.matmul %54, %71, %cst_45 {dimension_numbers = #tpu.dot_dimension_numbers<[1], [0], [0], [1], [0, 0, 1, 1], [], []>} : vector<8x8xf32>, vector<8x4xf32>, vector<8x4xf32> -> vector<8x4xf32>
    %73 = arith.addf %70, %72 : vector<8x4xf32>
    %74 = vector.extract_strided_slice %0 {offsets = [24, 0], sizes = [8, 4], strides = [1, 1]} : vector<64x4xf32> to vector<8x4xf32>
    %cst_46 = arith.constant dense<0.000000e+00> : vector<8x4xf32>
    %75 = tpu.matmul %55, %74, %cst_46 {dimension_numbers = #tpu.dot_dimension_numbers<[1], [0], [0], [1], [0, 0, 1, 1], [], []>} : vector<8x8xf32>, vector<8x4xf32>, vector<8x4xf32> -> vector<8x4xf32>
    %76 = arith.addf %73, %75 : vector<8x4xf32>
    %77 = vector.extract_strided_slice %0 {offsets = [32, 0], sizes = [8, 4], strides = [1, 1]} : vector<64x4xf32> to vector<8x4xf32>
    %cst_47 = arith.constant dense<0.000000e+00> : vector<8x4xf32>
    %78 = tpu.matmul %58, %77, %cst_47 {dimension_numbers = #tpu.dot_dimension_numbers<[1], [0], [0], [1], [0, 0, 1, 1], [], []>} : vector<8x8xf32>, vector<8x4xf32>, vector<8x4xf32> -> vector<8x4xf32>
    %79 = arith.addf %76, %78 : vector<8x4xf32>
    %80 = vector.extract_strided_slice %0 {offsets = [40, 0], sizes = [8, 4], strides = [1, 1]} : vector<64x4xf32> to vector<8x4xf32>
    %cst_48 = arith.constant dense<0.000000e+00> : vector<8x4xf32>
    %81 = tpu.matmul %59, %80, %cst_48 {dimension_numbers = #tpu.dot_dimension_numbers<[1], [0], [0], [1], [0, 0, 1, 1], [], []>} : vector<8x8xf32>, vector<8x4xf32>, vector<8x4xf32> -> vector<8x4xf32>
    %82 = arith.addf %79, %81 : vector<8x4xf32>
    %83 = vector.extract_strided_slice %0 {offsets = [48, 0], sizes = [8, 4], strides = [1, 1]} : vector<64x4xf32> to vector<8x4xf32>
    %cst_49 = arith.constant dense<0.000000e+00> : vector<8x4xf32>
    %84 = tpu.matmul %62, %83, %cst_49 {dimension_numbers = #tpu.dot_dimension_numbers<[1], [0], [0], [1], [0, 0, 1, 1], [], []>} : vector<8x8xf32>, vector<8x4xf32>, vector<8x4xf32> -> vector<8x4xf32>
    %85 = arith.addf %82, %84 : vector<8x4xf32>
    %86 = vector.extract_strided_slice %0 {offsets = [56, 0], sizes = [8, 4], strides = [1, 1]} : vector<64x4xf32> to vector<8x4xf32>
    %cst_50 = arith.constant dense<0.000000e+00> : vector<8x4xf32>
    %87 = tpu.matmul %63, %86, %cst_50 {dimension_numbers = #tpu.dot_dimension_numbers<[1], [0], [0], [1], [0, 0, 1, 1], [], []>} : vector<8x8xf32>, vector<8x4xf32>, vector<8x4xf32> -> vector<8x4xf32>
    %88 = arith.addf %85, %87 : vector<8x4xf32>
    %89 = vector.broadcast %1 : vector<1x4xf32> to vector<8x4xf32>
    %90 = arith.addf %88, %89 : vector<8x4xf32>
    %c0_51 = arith.constant 0 : index
    %c1_52 = arith.constant 1 : index
    %c0_53 = arith.constant 0 : index
    %c0_54 = arith.constant 0 : index
    %91 = vector.load %arg6[%c0_51, %c1_52, %c0_53, %c0_54] : memref<1x4x8x4xf32, #tpu.memory_space<vmem>>, vector<1x1x8x4xf32>
    %92 = vector.shape_cast %91 : vector<1x1x8x4xf32> to vector<8x4xf32>
    %93 = vector.shape_cast %90 : vector<8x4xf32> to vector<1x1x8x4xf32>
    tpu.vector_store %arg6[%c0_51, %c1_52, %c0_53, %c0_54], %93 {strides = array<i32>} : memref<1x4x8x4xf32, #tpu.memory_space<vmem>>, vector<1x1x8x4xf32>,
    %c0_55 = arith.constant 0 : index
    %c4_56 = arith.constant 4 : index
    %c0_57 = arith.constant 0 : index
    %c0_58 = arith.constant 0 : index
    %94 = vector.load %arg2[%c0_55, %c4_56, %c0_57, %c0_58] : memref<1x8x9x8xf32, #tpu.memory_space<vmem>>, vector<1x1x9x8xf32>
    %95 = vector.shape_cast %94 : vector<1x1x9x8xf32> to vector<9x8xf32>
    %96 = vector.extract_strided_slice %95 {offsets = [0, 0], sizes = [8, 8], strides = [1, 1]} : vector<9x8xf32> to vector<8x8xf32>
    %97 = vector.extract_strided_slice %95 {offsets = [1, 0], sizes = [8, 8], strides = [1, 1]} : vector<9x8xf32> to vector<8x8xf32>
    %c0_59 = arith.constant 0 : index
    %c5_60 = arith.constant 5 : index
    %c0_61 = arith.constant 0 : index
    %c0_62 = arith.constant 0 : index
    %98 = vector.load %arg2[%c0_59, %c5_60, %c0_61, %c0_62] : memref<1x8x9x8xf32, #tpu.memory_space<vmem>>, vector<1x1x9x8xf32>
    %99 = vector.shape_cast %98 : vector<1x1x9x8xf32> to vector<9x8xf32>
    %100 = vector.extract_strided_slice %99 {offsets = [0, 0], sizes = [8, 8], strides = [1, 1]} : vector<9x8xf32> to vector<8x8xf32>
    %101 = vector.extract_strided_slice %99 {offsets = [1, 0], sizes = [8, 8], strides = [1, 1]} : vector<9x8xf32> to vector<8x8xf32>
    %c0_63 = arith.constant 0 : index
    %c6 = arith.constant 6 : index
    %c0_64 = arith.constant 0 : index
    %c0_65 = arith.constant 0 : index
    %102 = vector.load %arg2[%c0_63, %c6, %c0_64, %c0_65] : memref<1x8x9x8xf32, #tpu.memory_space<vmem>>, vector<1x1x9x8xf32>
    %103 = vector.shape_cast %102 : vector<1x1x9x8xf32> to vector<9x8xf32>
    %104 = vector.extract_strided_slice %103 {offsets = [0, 0], sizes = [8, 8], strides = [1, 1]} : vector<9x8xf32> to vector<8x8xf32>
    %105 = vector.extract_strided_slice %103 {offsets = [1, 0], sizes = [8, 8], strides = [1, 1]} : vector<9x8xf32> to vector<8x8xf32>
    %c0_66 = arith.constant 0 : index
    %c7 = arith.constant 7 : index
    %c0_67 = arith.constant 0 : index
    %c0_68 = arith.constant 0 : index
    %106 = vector.load %arg2[%c0_66, %c7, %c0_67, %c0_68] : memref<1x8x9x8xf32, #tpu.memory_space<vmem>>, vector<1x1x9x8xf32>
    %107 = vector.shape_cast %106 : vector<1x1x9x8xf32> to vector<9x8xf32>
    %108 = vector.extract_strided_slice %107 {offsets = [0, 0], sizes = [8, 8], strides = [1, 1]} : vector<9x8xf32> to vector<8x8xf32>
    %109 = vector.extract_strided_slice %107 {offsets = [1, 0], sizes = [8, 8], strides = [1, 1]} : vector<9x8xf32> to vector<8x8xf32>
    %cst_69 = arith.constant 0.000000e+00 : f32
    %110 = vector.broadcast %cst_69 : f32 to vector<8x4xf32>
    %111 = vector.extract_strided_slice %0 {offsets = [0, 0], sizes = [8, 4], strides = [1, 1]} : vector<64x4xf32> to vector<8x4xf32>
    %cst_70 = arith.constant dense<0.000000e+00> : vector<8x4xf32>
    %112 = tpu.matmul %96, %111, %cst_70 {dimension_numbers = #tpu.dot_dimension_numbers<[1], [0], [0], [1], [0, 0, 1, 1], [], []>} : vector<8x8xf32>, vector<8x4xf32>, vector<8x4xf32> -> vector<8x4xf32>
    %113 = arith.addf %110, %112 : vector<8x4xf32>
    %114 = vector.extract_strided_slice %0 {offsets = [8, 0], sizes = [8, 4], strides = [1, 1]} : vector<64x4xf32> to vector<8x4xf32>
    %cst_71 = arith.constant dense<0.000000e+00> : vector<8x4xf32>
    %115 = tpu.matmul %97, %114, %cst_71 {dimension_numbers = #tpu.dot_dimension_numbers<[1], [0], [0], [1], [0, 0, 1, 1], [], []>} : vector<8x8xf32>, vector<8x4xf32>, vector<8x4xf32> -> vector<8x4xf32>
    %116 = arith.addf %113, %115 : vector<8x4xf32>
    %117 = vector.extract_strided_slice %0 {offsets = [16, 0], sizes = [8, 4], strides = [1, 1]} : vector<64x4xf32> to vector<8x4xf32>
    %cst_72 = arith.constant dense<0.000000e+00> : vector<8x4xf32>
    %118 = tpu.matmul %100, %117, %cst_72 {dimension_numbers = #tpu.dot_dimension_numbers<[1], [0], [0], [1], [0, 0, 1, 1], [], []>} : vector<8x8xf32>, vector<8x4xf32>, vector<8x4xf32> -> vector<8x4xf32>
    %119 = arith.addf %116, %118 : vector<8x4xf32>
    %120 = vector.extract_strided_slice %0 {offsets = [24, 0], sizes = [8, 4], strides = [1, 1]} : vector<64x4xf32> to vector<8x4xf32>
    %cst_73 = arith.constant dense<0.000000e+00> : vector<8x4xf32>
    %121 = tpu.matmul %101, %120, %cst_73 {dimension_numbers = #tpu.dot_dimension_numbers<[1], [0], [0], [1], [0, 0, 1, 1], [], []>} : vector<8x8xf32>, vector<8x4xf32>, vector<8x4xf32> -> vector<8x4xf32>
    %122 = arith.addf %119, %121 : vector<8x4xf32>
    %123 = vector.extract_strided_slice %0 {offsets = [32, 0], sizes = [8, 4], strides = [1, 1]} : vector<64x4xf32> to vector<8x4xf32>
    %cst_74 = arith.constant dense<0.000000e+00> : vector<8x4xf32>
    %124 = tpu.matmul %104, %123, %cst_74 {dimension_numbers = #tpu.dot_dimension_numbers<[1], [0], [0], [1], [0, 0, 1, 1], [], []>} : vector<8x8xf32>, vector<8x4xf32>, vector<8x4xf32> -> vector<8x4xf32>
    %125 = arith.addf %122, %124 : vector<8x4xf32>
    %126 = vector.extract_strided_slice %0 {offsets = [40, 0], sizes = [8, 4], strides = [1, 1]} : vector<64x4xf32> to vector<8x4xf32>
    %cst_75 = arith.constant dense<0.000000e+00> : vector<8x4xf32>
    %127 = tpu.matmul %105, %126, %cst_75 {dimension_numbers = #tpu.dot_dimension_numbers<[1], [0], [0], [1], [0, 0, 1, 1], [], []>} : vector<8x8xf32>, vector<8x4xf32>, vector<8x4xf32> -> vector<8x4xf32>
    %128 = arith.addf %125, %127 : vector<8x4xf32>
    %129 = vector.extract_strided_slice %0 {offsets = [48, 0], sizes = [8, 4], strides = [1, 1]} : vector<64x4xf32> to vector<8x4xf32>
    %cst_76 = arith.constant dense<0.000000e+00> : vector<8x4xf32>
    %130 = tpu.matmul %108, %129, %cst_76 {dimension_numbers = #tpu.dot_dimension_numbers<[1], [0], [0], [1], [0, 0, 1, 1], [], []>} : vector<8x8xf32>, vector<8x4xf32>, vector<8x4xf32> -> vector<8x4xf32>
    %131 = arith.addf %128, %130 : vector<8x4xf32>
    %132 = vector.extract_strided_slice %0 {offsets = [56, 0], sizes = [8, 4], strides = [1, 1]} : vector<64x4xf32> to vector<8x4xf32>
    %cst_77 = arith.constant dense<0.000000e+00> : vector<8x4xf32>
    %133 = tpu.matmul %109, %132, %cst_77 {dimension_numbers = #tpu.dot_dimension_numbers<[1], [0], [0], [1], [0, 0, 1, 1], [], []>} : vector<8x8xf32>, vector<8x4xf32>, vector<8x4xf32> -> vector<8x4xf32>
    %134 = arith.addf %131, %133 : vector<8x4xf32>
    %135 = vector.broadcast %1 : vector<1x4xf32> to vector<8x4xf32>
    %136 = arith.addf %134, %135 : vector<8x4xf32>
    %c0_78 = arith.constant 0 : index
    %c2_79 = arith.constant 2 : index
    %c0_80 = arith.constant 0 : index
    %c0_81 = arith.constant 0 : index
    %137 = vector.load %arg6[%c0_78, %c2_79, %c0_80, %c0_81] : memref<1x4x8x4xf32, #tpu.memory_space<vmem>>, vector<1x1x8x4xf32>
    %138 = vector.shape_cast %137 : vector<1x1x8x4xf32> to vector<8x4xf32>
    %139 = vector.shape_cast %136 : vector<8x4xf32> to vector<1x1x8x4xf32>
    tpu.vector_store %arg6[%c0_78, %c2_79, %c0_80, %c0_81], %139 {strides = array<i32>} : memref<1x4x8x4xf32, #tpu.memory_space<vmem>>, vector<1x1x8x4xf32>,
    %c0_82 = arith.constant 0 : index
    %c6_83 = arith.constant 6 : index
    %c0_84 = arith.constant 0 : index
    %c0_85 = arith.constant 0 : index
    %140 = vector.load %arg2[%c0_82, %c6_83, %c0_84, %c0_85] : memref<1x8x9x8xf32, #tpu.memory_space<vmem>>, vector<1x1x9x8xf32>
    %141 = vector.shape_cast %140 : vector<1x1x9x8xf32> to vector<9x8xf32>
    %142 = vector.extract_strided_slice %141 {offsets = [0, 0], sizes = [8, 8], strides = [1, 1]} : vector<9x8xf32> to vector<8x8xf32>
    %143 = vector.extract_strided_slice %141 {offsets = [1, 0], sizes = [8, 8], strides = [1, 1]} : vector<9x8xf32> to vector<8x8xf32>
    %c0_86 = arith.constant 0 : index
    %c7_87 = arith.constant 7 : index
    %c0_88 = arith.constant 0 : index
    %c0_89 = arith.constant 0 : index
    %144 = vector.load %arg2[%c0_86, %c7_87, %c0_88, %c0_89] : memref<1x8x9x8xf32, #tpu.memory_space<vmem>>, vector<1x1x9x8xf32>
    %145 = vector.shape_cast %144 : vector<1x1x9x8xf32> to vector<9x8xf32>
    %146 = vector.extract_strided_slice %145 {offsets = [0, 0], sizes = [8, 8], strides = [1, 1]} : vector<9x8xf32> to vector<8x8xf32>
    %147 = vector.extract_strided_slice %145 {offsets = [1, 0], sizes = [8, 8], strides = [1, 1]} : vector<9x8xf32> to vector<8x8xf32>
    %c0_90 = arith.constant 0 : index
    %c0_91 = arith.constant 0 : index
    %c0_92 = arith.constant 0 : index
    %c0_93 = arith.constant 0 : index
    %148 = vector.load %arg3[%c0_90, %c0_91, %c0_92, %c0_93] : memref<1x2x9x8xf32, #tpu.memory_space<vmem>>, vector<1x1x9x8xf32>
    %149 = vector.shape_cast %148 : vector<1x1x9x8xf32> to vector<9x8xf32>
    %150 = vector.extract_strided_slice %149 {offsets = [0, 0], sizes = [8, 8], strides = [1, 1]} : vector<9x8xf32> to vector<8x8xf32>
    %151 = vector.extract_strided_slice %149 {offsets = [1, 0], sizes = [8, 8], strides = [1, 1]} : vector<9x8xf32> to vector<8x8xf32>
    %c0_94 = arith.constant 0 : index
    %c1_95 = arith.constant 1 : index
    %c0_96 = arith.constant 0 : index
    %c0_97 = arith.constant 0 : index
    %152 = vector.load %arg3[%c0_94, %c1_95, %c0_96, %c0_97] : memref<1x2x9x8xf32, #tpu.memory_space<vmem>>, vector<1x1x9x8xf32>
    %153 = vector.shape_cast %152 : vector<1x1x9x8xf32> to vector<9x8xf32>
    %154 = vector.extract_strided_slice %153 {offsets = [0, 0], sizes = [8, 8], strides = [1, 1]} : vector<9x8xf32> to vector<8x8xf32>
    %155 = vector.extract_strided_slice %153 {offsets = [1, 0], sizes = [8, 8], strides = [1, 1]} : vector<9x8xf32> to vector<8x8xf32>
    %cst_98 = arith.constant 0.000000e+00 : f32
    %156 = vector.broadcast %cst_98 : f32 to vector<8x4xf32>
    %157 = vector.extract_strided_slice %0 {offsets = [0, 0], sizes = [8, 4], strides = [1, 1]} : vector<64x4xf32> to vector<8x4xf32>
    %cst_99 = arith.constant dense<0.000000e+00> : vector<8x4xf32>
    %158 = tpu.matmul %142, %157, %cst_99 {dimension_numbers = #tpu.dot_dimension_numbers<[1], [0], [0], [1], [0, 0, 1, 1], [], []>} : vector<8x8xf32>, vector<8x4xf32>, vector<8x4xf32> -> vector<8x4xf32>
    %159 = arith.addf %156, %158 : vector<8x4xf32>
    %160 = vector.extract_strided_slice %0 {offsets = [8, 0], sizes = [8, 4], strides = [1, 1]} : vector<64x4xf32> to vector<8x4xf32>
    %cst_100 = arith.constant dense<0.000000e+00> : vector<8x4xf32>
    %161 = tpu.matmul %143, %160, %cst_100 {dimension_numbers = #tpu.dot_dimension_numbers<[1], [0], [0], [1], [0, 0, 1, 1], [], []>} : vector<8x8xf32>, vector<8x4xf32>, vector<8x4xf32> -> vector<8x4xf32>
    %162 = arith.addf %159, %161 : vector<8x4xf32>
    %163 = vector.extract_strided_slice %0 {offsets = [16, 0], sizes = [8, 4], strides = [1, 1]} : vector<64x4xf32> to vector<8x4xf32>
    %cst_101 = arith.constant dense<0.000000e+00> : vector<8x4xf32>
    %164 = tpu.matmul %146, %163, %cst_101 {dimension_numbers = #tpu.dot_dimension_numbers<[1], [0], [0], [1], [0, 0, 1, 1], [], []>} : vector<8x8xf32>, vector<8x4xf32>, vector<8x4xf32> -> vector<8x4xf32>
    %165 = arith.addf %162, %164 : vector<8x4xf32>
    %166 = vector.extract_strided_slice %0 {offsets = [24, 0], sizes = [8, 4], strides = [1, 1]} : vector<64x4xf32> to vector<8x4xf32>
    %cst_102 = arith.constant dense<0.000000e+00> : vector<8x4xf32>
    %167 = tpu.matmul %147, %166, %cst_102 {dimension_numbers = #tpu.dot_dimension_numbers<[1], [0], [0], [1], [0, 0, 1, 1], [], []>} : vector<8x8xf32>, vector<8x4xf32>, vector<8x4xf32> -> vector<8x4xf32>
    %168 = arith.addf %165, %167 : vector<8x4xf32>
    %169 = vector.extract_strided_slice %0 {offsets = [32, 0], sizes = [8, 4], strides = [1, 1]} : vector<64x4xf32> to vector<8x4xf32>
    %cst_103 = arith.constant dense<0.000000e+00> : vector<8x4xf32>
    %170 = tpu.matmul %150, %169, %cst_103 {dimension_numbers = #tpu.dot_dimension_numbers<[1], [0], [0], [1], [0, 0, 1, 1], [], []>} : vector<8x8xf32>, vector<8x4xf32>, vector<8x4xf32> -> vector<8x4xf32>
    %171 = arith.addf %168, %170 : vector<8x4xf32>
    %172 = vector.extract_strided_slice %0 {offsets = [40, 0], sizes = [8, 4], strides = [1, 1]} : vector<64x4xf32> to vector<8x4xf32>
    %cst_104 = arith.constant dense<0.000000e+00> : vector<8x4xf32>
    %173 = tpu.matmul %151, %172, %cst_104 {dimension_numbers = #tpu.dot_dimension_numbers<[1], [0], [0], [1], [0, 0, 1, 1], [], []>} : vector<8x8xf32>, vector<8x4xf32>, vector<8x4xf32> -> vector<8x4xf32>
    %174 = arith.addf %171, %173 : vector<8x4xf32>
    %175 = vector.extract_strided_slice %0 {offsets = [48, 0], sizes = [8, 4], strides = [1, 1]} : vector<64x4xf32> to vector<8x4xf32>
    %cst_105 = arith.constant dense<0.000000e+00> : vector<8x4xf32>
    %176 = tpu.matmul %154, %175, %cst_105 {dimension_numbers = #tpu.dot_dimension_numbers<[1], [0], [0], [1], [0, 0, 1, 1], [], []>} : vector<8x8xf32>, vector<8x4xf32>, vector<8x4xf32> -> vector<8x4xf32>
    %177 = arith.addf %174, %176 : vector<8x4xf32>
    %178 = vector.extract_strided_slice %0 {offsets = [56, 0], sizes = [8, 4], strides = [1, 1]} : vector<64x4xf32> to vector<8x4xf32>
    %cst_106 = arith.constant dense<0.000000e+00> : vector<8x4xf32>
    %179 = tpu.matmul %155, %178, %cst_106 {dimension_numbers = #tpu.dot_dimension_numbers<[1], [0], [0], [1], [0, 0, 1, 1], [], []>} : vector<8x8xf32>, vector<8x4xf32>, vector<8x4xf32> -> vector<8x4xf32>
    %180 = arith.addf %177, %179 : vector<8x4xf32>
    %181 = vector.broadcast %1 : vector<1x4xf32> to vector<8x4xf32>
    %182 = arith.addf %180, %181 : vector<8x4xf32>
    %c0_107 = arith.constant 0 : index
    %c3_108 = arith.constant 3 : index
    %c0_109 = arith.constant 0 : index
    %c0_110 = arith.constant 0 : index
    %183 = vector.load %arg6[%c0_107, %c3_108, %c0_109, %c0_110] : memref<1x4x8x4xf32, #tpu.memory_space<vmem>>, vector<1x1x8x4xf32>
    %184 = vector.shape_cast %183 : vector<1x1x8x4xf32> to vector<8x4xf32>
    %185 = vector.shape_cast %182 : vector<8x4xf32> to vector<1x1x8x4xf32>
    tpu.vector_store %arg6[%c0_107, %c3_108, %c0_109, %c0_110], %185 {strides = array<i32>} : memref<1x4x8x4xf32, #tpu.memory_space<vmem>>, vector<1x1x8x4xf32>,
    return
  }
  func.func @transform_0(%arg0: i32, %arg1: i32) -> (i32, i32, i32, i32) {
    %c0_i32 = arith.constant 0 : i32
    %c0_i32_0 = arith.constant 0 : i32
    %c0_i32_1 = arith.constant 0 : i32
    return %arg0, %arg1, %c0_i32, %c0_i32_0 : i32, i32, i32, i32
  }
  func.func @transform_1(%arg0: i32, %arg1: i32) -> (i32, i32, i32, i32) {
    %c1_i32 = arith.constant 1 : i32
    %0 = arith.addi %arg1, %c1_i32 : i32
    %c4_i32 = arith.constant 4 : i32
    %1 = arith.muli %c4_i32, %0 : i32
    %c0_i32 = arith.constant 0 : i32
    %c0_i32_0 = arith.constant 0 : i32
    %c0_i32_1 = arith.constant 0 : i32
    return %arg0, %1, %c0_i32, %c0_i32_0 : i32, i32, i32, i32
  }
  func.func @transform_2(%arg0: i32, %arg1: i32) -> (i32, i32) {
    %c0_i32 = arith.constant 0 : i32
    %c0_i32_0 = arith.constant 0 : i32
    %c0_i32_1 = arith.constant 0 : i32
    return %c0_i32, %c0_i32_0 : i32, i32
  }
  func.func @transform_3(%arg0: i32, %arg1: i32) -> (i32, i32) {
    %c0_i32 = arith.constant 0 : i32
    %c0_i32_0 = arith.constant 0 : i32
    %c0_i32_1 = arith.constant 0 : i32
    return %c0_i32, %c0_i32_0 : i32, i32
  }
  func.func @transform_4(%arg0: i32, %arg1: i32) -> (i32, i32, i32, i32) {
    %c0_i32 = arith.constant 0 : i32
    %c0_i32_0 = arith.constant 0 : i32
    %c0_i32_1 = arith.constant 0 : i32
    return %arg0, %arg1, %c0_i32, %c0_i32_0 : i32, i32, i32, i32
  }
}

</mosaic_0001>

<llo_original>
// kernel: downsample_forward.1
$region0: #{downsample_forward.1}
  #allocation0 [shape = 'u32[]', space=smem, size = 0x4, offset = 0x4, fixed_abs, tag = 'smem constant byte address 0x4 - core index']
  #allocation1 [shape = 'u32[144,128]{1,0:T(1,128)}', space=vmem, size = 0x12000, scoped, tag = 'internal scratch']
  %s0 = inlined_call_operand.vmem [shape: f32[2,18,9,8], index: 0, kind: input, shape index: {}, may-alias: {0,1}]
  %s1 = inlined_call_operand.vmem [shape: f32[2,18,9,8], index: 1, kind: input, shape index: {}, may-alias: {0,1}]
  %s2 = inlined_call_operand.vmem [shape: f32[64,4], index: 2, kind: input, shape index: {}]
  %s3 = inlined_call_operand.vmem [shape: f32[1,4], index: 3, kind: input, shape index: {}]
  %s4 = inlined_call_operand.vmem [shape: f32[2,8,8,4], index: 4, kind: output, shape index: {}]
  %s5 = sld [smem:[#allocation0]]
  $region49: #{downsample_forward.1} parent=0
    _
  %s7 = ssub.s32 1, %s5
  %s8 = scalar_select 0, %s7, %s5
  loop: start=0, step=1, limit=6
  $region2: #{downsample_forward.1} parent=0 // loop_pre_header
    _
  $region3: #{downsample_forward.1} parent=0 // loop_header
    %s10 = sphi 0, %s14
    %p11 = scmp.ge.s32.totalorder %s10, 6
    %s17 = sphi 0, %s29
    %s18 = sphi 0, %s25
    %s19 = sphi 0, %s17
    %s20 = sphi 0, %s18
    %s21 = sphi 0, %s19
    %s22 = sphi 0, %s20
    %s34 = sphi 0, %s36
    %s37 = sphi 0, %s34
    %s38 = sphi 0, %s37
    %s54 = sphi 0, %s38
    %s66 = sphi 0, %s68
    %s69 = sphi 0, %s66
    %s70 = sphi 0, %s69
    %s86 = sphi 0, %s70
    %s90 = sphi 0, %s90
    %s92 = sphi 0, %s90
    %s93 = sphi 0, %s92
    %s107 = sphi 0, %s93
    %s111 = sphi 0, %s111
    %s113 = sphi 0, %s111
    %s114 = sphi 0, %s113
    %s128 = sphi 0, %s114
    %s136 = sphi 0, %s138
    %s139 = sphi 0, %s136
    %s140 = sphi 0, %s139
    %s156 = sphi 0, %s140
  $region4: #{downsample_forward.1} parent=0 // loop_header_branch
    %13 = sbr.rel (%p11) target = $region8
  $region5: #{downsample_forward.1} parent=0 // loop_body
    %s15 = ssub.s32 %s10, 1
    %s16 = ssub.s32 %s10, 2
    %s23 = sadd.s32 1, %s18
    %p24 = scmp.ge.s32.totalorder %s23, 2
    %s25 = scalar_select %p24, 0, %s23
    %s26 = sadd.s32 1, %s17
    %s27 = scalar_select %p24, %s26, %s17
    %p28 = scmp.ge.s32.totalorder %s27, 2
    %s29 = scalar_select %p28, 0, %s27
    %s30 = ssub.s32 %s17, %s29
    %s31 = ssub.s32 %s18, %s25
    %s32 = sor.u32 %s30, %s31
    %p33 = scmp.eq.s32.totalorder %s32, 0
    %s35 = sadd.s32 %s34, 1
    %s36 = scalar_select %p33, %s34, %s35
    %p39 = pneg %p33
    %p40 = scmp.eq.s32.totalorder %s10, 3
    %p41 = por %p39, %p40
    %p42 = scmp.ne.s32.totalorder %s34, %s37
    %p43 = scmp.eq.s32.totalorder %s10, 0
    %p44 = por %p42, %p43
    %p45 = scmp.ne.s32.totalorder %s34, %s37
    %p46 = scmp.eq.s32.totalorder %s15, 3
    %p47 = por %p45, %p46
    %p48 = scmp.ne.s32.totalorder %s37, %s38
    %p49 = scmp.eq.s32.totalorder %s15, 0
    %p50 = por %p48, %p49
    %p51 = scmp.ne.s32.totalorder %s37, %s38
    %p52 = scmp.eq.s32.totalorder %s16, 3
    %p53 = por %p51, %p52
    %p55 = scmp.ne.s32.totalorder %s38, %s54
    %p56 = scmp.eq.s32.totalorder %s16, 0
    %p57 = por %p55, %p56
    %s58 = sadd.s32 %s18, 1
    %s59 = smul.u32 %s58, 4
    %s60 = sadd.s32 %s25, 1
    %s61 = smul.u32 %s60, 4
    %s62 = ssub.s32 %s17, %s29
    %s63 = ssub.s32 %s59, %s61
    %s64 = sor.u32 %s62, %s63
    %p65 = scmp.eq.s32.totalorder %s64, 0
    %s67 = sadd.s32 %s66, 1
    %s68 = scalar_select %p65, %s66, %s67
    %p71 = pneg %p65
    %p72 = scmp.eq.s32.totalorder %s10, 3
    %p73 = por %p71, %p72
    %p74 = scmp.ne.s32.totalorder %s66, %s69
    %p75 = scmp.eq.s32.totalorder %s10, 0
    %p76 = por %p74, %p75
    %p77 = scmp.ne.s32.totalorder %s66, %s69
    %p78 = scmp.eq.s32.totalorder %s15, 3
    %p79 = por %p77, %p78
    %p80 = scmp.ne.s32.totalorder %s69, %s70
    %p81 = scmp.eq.s32.totalorder %s15, 0
    %p82 = por %p80, %p81
    %p83 = scmp.ne.s32.totalorder %s69, %s70
    %p84 = scmp.eq.s32.totalorder %s16, 3
    %p85 = por %p83, %p84
    %p87 = scmp.ne.s32.totalorder %s70, %s86
    %p88 = scmp.eq.s32.totalorder %s16, 0
    %p89 = por %p87, %p88
    %s91 = sadd.s32 %s90, 1
    %p94 = scmp.eq.s32.totalorder %s10, 3
    %p95 = scmp.ne.s32.totalorder %s90, %s92
    %p96 = scmp.eq.s32.totalorder %s10, 0
    %p97 = por %p95, %p96
    %p98 = scmp.ne.s32.totalorder %s90, %s92
    %p99 = scmp.eq.s32.totalorder %s15, 3
    %p100 = por %p98, %p99
    %p101 = scmp.ne.s32.totalorder %s92, %s93
    %p102 = scmp.eq.s32.totalorder %s15, 0
    %p103 = por %p101, %p102
    %p104 = scmp.ne.s32.totalorder %s92, %s93
    %p105 = scmp.eq.s32.totalorder %s16, 3
    %p106 = por %p104, %p105
    %p108 = scmp.ne.s32.totalorder %s93, %s107
    %p109 = scmp.eq.s32.totalorder %s16, 0
    %p110 = por %p108, %p109
    %s112 = sadd.s32 %s111, 1
    %p115 = scmp.eq.s32.totalorder %s10, 3
    %p116 = scmp.ne.s32.totalorder %s111, %s113
    %p117 = scmp.eq.s32.totalorder %s10, 0
    %p118 = por %p116, %p117
    %p119 = scmp.ne.s32.totalorder %s111, %s113
    %p120 = scmp.eq.s32.totalorder %s15, 3
    %p121 = por %p119, %p120
    %p122 = scmp.ne.s32.totalorder %s113, %s114
    %p123 = scmp.eq.s32.totalorder %s15, 0
    %p124 = por %p122, %p123
    %p125 = scmp.ne.s32.totalorder %s113, %s114
    %p126 = scmp.eq.s32.totalorder %s16, 3
    %p127 = por %p125, %p126
    %p129 = scmp.ne.s32.totalorder %s114, %s128
    %p130 = scmp.eq.s32.totalorder %s16, 0
    %p131 = por %p129, %p130
    %s132 = ssub.s32 %s17, %s29
    %s133 = ssub.s32 %s18, %s25
    %s134 = sor.u32 %s132, %s133
    %p135 = scmp.eq.s32.totalorder %s134, 0
    %s137 = sadd.s32 %s136, 1
    %s138 = scalar_select %p135, %s136, %s137
    %p141 = pneg %p135
    %p142 = scmp.eq.s32.totalorder %s10, 3
    %p143 = por %p141, %p142
    %p144 = scmp.ne.s32.totalorder %s136, %s139
    %p145 = scmp.eq.s32.totalorder %s10, 0
    %p146 = por %p144, %p145
    %p147 = scmp.ne.s32.totalorder %s136, %s139
    %p148 = scmp.eq.s32.totalorder %s15, 3
    %p149 = por %p147, %p148
    %p150 = scmp.ne.s32.totalorder %s139, %s140
    %p151 = scmp.eq.s32.totalorder %s15, 0
    %p152 = por %p150, %p151
    %p153 = scmp.ne.s32.totalorder %s139, %s140
    %p154 = scmp.eq.s32.totalorder %s16, 3
    %p155 = por %p153, %p154
    %p157 = scmp.ne.s32.totalorder %s140, %s156
    %p158 = scmp.eq.s32.totalorder %s16, 0
    %p159 = por %p157, %p158
    %p160 = scmp.le.s32.totalorder 1, %s10
    %p161 = scmp.lt.s32.totalorder %s10, 5
    %p162 = pnand %p160, %p161
    %p163 = pneg %p162
    // Predicated region
    $region9: #{downsample_forward.1} parent=5 // pred_check
      _
    $region10: #{downsample_forward.1} parent=5 // pred_check_branch
      %165 = sbr.rel (%p162) target = $region12
    $region11: #{downsample_forward.1} parent=5 // pred_region
      %s166 = ssub.s32 %s10, 1
      // Predicated region
      $region13: #{downsample_forward.1} parent=11 // pred_check
        %p167 = pneg %p103
      $region14: #{downsample_forward.1} parent=11 // pred_check_branch
        %169 = sbr.rel (%p167) target = $region16
      $region15: #{downsample_forward.1} parent=11 // pred_region
        _
      $region16: #{downsample_forward.1} parent=11 // pred_fallthru
        _
      // Predicated region
      $region17: #{downsample_forward.1} parent=11 // pred_check
        %p170 = pneg %p124
      $region18: #{downsample_forward.1} parent=11 // pred_check_branch
        %172 = sbr.rel (%p170) target = $region20
      $region19: #{downsample_forward.1} parent=11 // pred_region
        _
      $region20: #{downsample_forward.1} parent=11 // pred_fallthru
        _
    $region12: #{downsample_forward.1} parent=5 // pred_fallthru
      _
    %p173 = scmp.lt.s32.totalorder %s10, 4
    // Predicated region
    $region21: #{downsample_forward.1} parent=5 // pred_check
      %p174 = pneg %p173
    $region22: #{downsample_forward.1} parent=5 // pred_check_branch
      %176 = sbr.rel (%p174) target = $region24
    $region23: #{downsample_forward.1} parent=5 // pred_region
      // Predicated region
      $region25: #{downsample_forward.1} parent=23 // pred_check
        %p177 = pneg %p44
      $region26: #{downsample_forward.1} parent=23 // pred_check_branch
        %179 = sbr.rel (%p177) target = $region28
      $region27: #{downsample_forward.1} parent=23 // pred_region
        %s180 = smul.u32 8, %s18
        %s181 = ssub.s32 18, %s180
        %p182 = scmp.lt.s32.totalorder %s181, 8
        %s183 = scalar_select %p182, %s181, 8
        %s184 = smul.u32 128, %s183
        %s185 = smul.u32 %s184, 2
        %p186 = scmp.lt.s32.totalorder %s17, 1
        %s187 = scalar_select %p186, %s17, 1
        %p188 = scmp.lt.s32.totalorder %s180, 17
        %s189 = scalar_select %p188, %s180, 17
        %s190 = smul.addr %s189, 2
        %s191 = smul.addr %s187, 36
        %s192 = sadd.s32 %s190, %s191
        %s193 = smul.addr %s192, 8
        %s194 = scalar_lea.vmem %s0, %s193
        %s195 = smul.u32 8, %s18
        %s196 = ssub.s32 18, %s195
        %p197 = scmp.lt.s32.totalorder %s196, 8
        %s198 = scalar_select %p197, %s196, 8
        %s199 = smul.u32 128, %s198
        %s200 = smul.u32 %s199, 2
      $region28: #{downsample_forward.1} parent=23 // pred_fallthru
        _
      // Predicated region
      $region29: #{downsample_forward.1} parent=23 // pred_check
        %p201 = pneg %p76
      $region30: #{downsample_forward.1} parent=23 // pred_check_branch
        %203 = sbr.rel (%p201) target = $region32
      $region31: #{downsample_forward.1} parent=23 // pred_region
        %s204 = sadd.s32 %s18, 1
        %s205 = smul.u32 %s204, 4
        %s206 = smul.u32 2, %s205
        %p207 = scmp.lt.s32.totalorder %s17, 1
        %s208 = scalar_select %p207, %s17, 1
        %p209 = scmp.lt.s32.totalorder %s206, 17
        %s210 = scalar_select %p209, %s206, 17
        %s211 = smul.addr %s210, 2
        %s212 = smul.addr %s208, 36
        %s213 = sadd.s32 %s211, %s212
        %s214 = smul.addr %s213, 8
        %s215 = scalar_lea.vmem %s1, %s214
        %s216 = sadd.s32 %s18, 1
        %s217 = smul.u32 %s216, 4
        %s218 = smul.u32 2, %s217
      $region32: #{downsample_forward.1} parent=23 // pred_fallthru
        _
    $region24: #{downsample_forward.1} parent=5 // pred_fallthru
      _
    %p219 = scmp.le.s32.totalorder 1, %s10
    %p220 = scmp.lt.s32.totalorder %s10, 5
    %p221 = pnand %p219, %p220
    %p222 = pneg %p221
    // Predicated region
    $region33: #{downsample_forward.1} parent=5 // pred_check
      _
    $region34: #{downsample_forward.1} parent=5 // pred_check_branch
      %224 = sbr.rel (%p221) target = $region36
    $region35: #{downsample_forward.1} parent=5 // pred_region
      %s225 = ssub.s32 %s10, 1
      %s226 = smul.u32 8, %s20
      %s227 = ssub.s32 18, %s226
      %p228 = scmp.lt.s32.totalorder %s227, 8
      %s229 = scalar_select %p228, %s227, 8
      %s230 = smul.u32 128, %s229
      %s231 = smul.u32 %s230, 2
      %p232 = scmp.lt.s32.totalorder %s19, 1
      %s233 = scalar_select %p232, %s19, 1
      %p234 = scmp.lt.s32.totalorder %s226, 17
      %s235 = scalar_select %p234, %s226, 17
      %s236 = smul.addr %s235, 2
      %s237 = smul.addr %s233, 36
      %s238 = sadd.s32 %s236, %s237
      %s239 = smul.addr %s238, 8
      %s240 = scalar_lea.vmem %s0, %s239
      %p241 = pneg %p50
      %p242 = pneg %p47
      %s243 = sadd.s32 %s20, 1
      %s244 = smul.u32 %s243, 4
      %s245 = smul.u32 2, %s244
      %p246 = scmp.lt.s32.totalorder %s19, 1
      %s247 = scalar_select %p246, %s19, 1
      %p248 = scmp.lt.s32.totalorder %s245, 17
      %s249 = scalar_select %p248, %s245, 17
      %s250 = smul.addr %s249, 2
      %s251 = smul.addr %s247, 36
      %s252 = sadd.s32 %s250, %s251
      %s253 = smul.addr %s252, 8
      %s254 = scalar_lea.vmem %s1, %s253
      %p255 = pneg %p82
      %p256 = pneg %p79
      %p257 = pneg %p103
      %p258 = pneg %p100
      %p259 = pneg %p124
      %p260 = pneg %p121
      %p261 = pneg %p152
      %p262 = pneg %p149
      %s263 = smul.u32 4, %s20
      %p264 = scmp.lt.s32.totalorder %s19, 1
      %s265 = scalar_select %p264, %s19, 1
      %p266 = scmp.lt.s32.totalorder %s263, 7
      %s267 = scalar_select %p266, %s263, 7
      %s268 = smul.addr %s265, 8
      %s269 = sadd.s32 %s267, %s268
      %s270 = smul.addr %s269, 8
      %s271 = scalar_lea.vmem %s4, %s270
      %s272 = smul.u32 8, %s20
      %s273 = ssub.s32 18, %s272
      %p274 = scmp.lt.s32.totalorder %s273, 8
      %s275 = scalar_select %p274, %s273, 8
      %s276 = smul.u32 128, %s275
      %s277 = smul.u32 %s276, 2
      %p278 = scmp.lt.s32.totalorder %s19, 1
      %s279 = scalar_select %p278, %s19, 1
      %p280 = scmp.lt.s32.totalorder %s272, 17
      %s281 = scalar_select %p280, %s272, 17
      %s282 = smul.addr %s281, 2
      %s283 = smul.addr %s279, 36
      %s284 = sadd.s32 %s282, %s283
      %s285 = smul.addr %s284, 8
      %s286 = scalar_lea.vmem %s0, %s285
      %s287 = smul.u32 8, %s20
      %s288 = ssub.s32 18, %s287
      %p289 = scmp.lt.s32.totalorder %s288, 8
      %s290 = scalar_select %p289, %s288, 8
      %s291 = smul.u32 128, %s290
      %s292 = smul.u32 %s291, 2
      %s293 = sadd.s32 %s20, 1
      %s294 = smul.u32 %s293, 4
      %s295 = smul.u32 2, %s294
      %p296 = scmp.lt.s32.totalorder %s19, 1
      %s297 = scalar_select %p296, %s19, 1
      %p298 = scmp.lt.s32.totalorder %s295, 17
      %s299 = scalar_select %p298, %s295, 17
      %s300 = smul.addr %s299, 2
      %s301 = smul.addr %s297, 36
      %s302 = sadd.s32 %s300, %s301
      %s303 = smul.addr %s302, 8
      %s304 = scalar_lea.vmem %s1, %s303
      %s305 = sadd.s32 %s20, 1
      %s306 = smul.u32 %s305, 4
      %s307 = smul.u32 2, %s306
      %s308 = smul.u32 4, %s20
      %p309 = scmp.lt.s32.totalorder %s19, 1
      %s310 = scalar_select %p309, %s19, 1
      %p311 = scmp.lt.s32.totalorder %s308, 7
      %s312 = scalar_select %p311, %s308, 7
      %s313 = smul.addr %s310, 8
      %s314 = sadd.s32 %s312, %s313
      %s315 = smul.addr %s314, 8
      %s316 = scalar_lea.vmem %s4, %s315
      %s317 = smul.u32 4, %s20
      %v318 = vld [vmem:[%s2] sm:$0xff]
      %v319 = vld [vmem:[%s2 + $0x8] sm:$0xff]
      %v320 = vld [vmem:[%s2 + $0x10] sm:$0xff]
      %v321 = vld [vmem:[%s2 + $0x18] sm:$0xff]
      %v322 = vld [vmem:[%s2 + $0x20] sm:$0xff]
      %v323 = vld [vmem:[%s2 + $0x28] sm:$0xff]
      %v324 = vld [vmem:[%s2 + $0x30] sm:$0xff]
      %v325 = vld [vmem:[%s2 + $0x38] sm:$0xff]
      %v326 = vld [vmem:[%s3] sm:$0x1]
      %v327 = vld [vmem:[%s286] sm:$0xff]
      %v328 = vld [vmem:[%s286 + $0x8] sm:$0x1]
      %s329 = scalar_lea.vmem %s286, 16
      %v330 = vld [vmem:[%s329] sm:$0xff]
      %v331 = vld [vmem:[%s329 + $0x8] sm:$0x1]
      %s332 = scalar_lea.vmem %s286, 32
      %v333 = vld [vmem:[%s332] sm:$0xff]
      %v334 = vld [vmem:[%s332 + $0x8] sm:$0x1]
      %s335 = scalar_lea.vmem %s286, 48
      %v336 = vld [vmem:[%s335] sm:$0xff]
      %v337 = vld [vmem:[%s335 + $0x8] sm:$0x1]
      %vm340 = vcmask 1046528
      %v341 = vrot.slane %v327, 1
      %v342 = vrot.slane %v328, 1
      %v343 = vsel %vm340, %v341, %v342
      %vm344 = vcmask 64512
      %v345 = vsel %vm344, %v343, 0
      %347 = vmatprep.subr.mxu0 0.0
      %348 = vmatpush1.msra.mxu0 0.0
      %349 = vmatprep.subr.mxu0 0.0
      %350 = vmatpush1.msra.mxu0 0.0
      %351 = vmatprep.subr.mxu0 0.0
      %352 = vmatpush1.msra.mxu0 0.0
      %353 = vmatprep.subr.mxu0 0.0
      %354 = vmatpush1.msra.mxu0 0.0
      %355 = vmatprep.subr.mxu0 0.0
      %356 = vmatpush1.msra.mxu0 0.0
      %357 = vmatprep.subr.mxu0 0.0
      %358 = vmatpush1.msra.mxu0 0.0
      %359 = vmatprep.subr.mxu0 0.0
      %360 = vmatpush1.msra.mxu0 0.0
      %361 = vmatprep.subr.mxu0 0.0
      %362 = vmatpush1.msra.mxu0 0.0
      %363 = vmatprep.subr.mxu0 0.0
      %364 = vmatpush1.msra.mxu0 0.0
      %365 = vmatprep.subr.mxu0 0.0
      %366 = vmatpush1.msra.mxu0 0.0
      %367 = vmatprep.subr.mxu0 0.0
      %368 = vmatpush1.msra.mxu0 0.0
      %369 = vmatprep.subr.mxu0 0.0
      %370 = vmatpush1.msra.mxu0 0.0
      %371 = vmatprep.subr.mxu0 0.0
      %372 = vmatpush1.msra.mxu0 0.0
      %373 = vmatprep.subr.mxu0 0.0
      %374 = vmatpush1.msra.mxu0 0.0
      %375 = vmatprep.subr.mxu0 0.0
      %376 = vmatpush1.msra.mxu0 0.0
      %377 = vmatprep.subr.mxu0 0.0
      %378 = vmatpush1.msra.mxu0 %v319
      %379 = vmatprep.subr.mxu0 0.0
      %380 = vmatpush2.msra.mxu0 0.0
      %381 = vmatprep.subr.mxu0 0.0
      %382 = vmatpush2.msra.mxu0 0.0
      %383 = vmatprep.subr.mxu0 0.0
      %384 = vmatpush2.msra.mxu0 0.0
      %385 = vmatprep.subr.mxu0 0.0
      %386 = vmatpush2.msra.mxu0 0.0
      %387 = vmatprep.subr.mxu0 0.0
      %388 = vmatpush2.msra.mxu0 0.0
      %389 = vmatprep.subr.mxu0 0.0
      %390 = vmatpush2.msra.mxu0 0.0
      %391 = vmatprep.subr.mxu0 0.0
      %392 = vmatpush2.msra.mxu0 0.0
      %393 = vmatprep.subr.mxu0 0.0
      %394 = vmatpush2.msra.mxu0 0.0
      %395 = vmatprep.subr.mxu0 0.0
      %396 = vmatpush2.msra.mxu0 0.0
      %397 = vmatprep.subr.mxu0 0.0
      %398 = vmatpush2.msra.mxu0 0.0
      %399 = vmatprep.subr.mxu0 0.0
      %400 = vmatpush2.msra.mxu0 0.0
      %401 = vmatprep.subr.mxu0 0.0
      %402 = vmatpush2.msra.mxu0 0.0
      %403 = vmatprep.subr.mxu0 0.0
      %404 = vmatpush2.msra.mxu0 0.0
      %405 = vmatprep.subr.mxu0 0.0
      %406 = vmatpush2.msra.mxu0 0.0
      %407 = vmatprep.subr.mxu0 0.0
      %408 = vmatpush2.msra.mxu0 0.0
      %409 = vmatprep.subr.mxu0 0.0
      %410 = vmatpush2.msra.mxu0 0.0
      %411 = vmatprep.mubr.f32.mxu0 0.0
      %412 = vmatmul.mubr.f32.gmra.mxu0 %v345
      %v413 = vpop.f32.mrf.mxu0
      %v414 = vadd.f32 0.0, %v413
      %v415 = vpop.f32.mrf.mxu0
      %416 = vdwg.mxu0
      %v417 = vsel %vm344, %v327, 0
      %419 = vmatprep.subr.mxu0 0.0
      %420 = vmatpush1.msra.mxu0 0.0
      %421 = vmatprep.subr.mxu0 0.0
      %422 = vmatpush1.msra.mxu0 0.0
      %423 = vmatprep.subr.mxu0 0.0
      %424 = vmatpush1.msra.mxu0 0.0
      %425 = vmatprep.subr.mxu0 0.0
      %426 = vmatpush1.msra.mxu0 0.0
      %427 = vmatprep.subr.mxu0 0.0
      %428 = vmatpush1.msra.mxu0 0.0
      %429 = vmatprep.subr.mxu0 0.0
      %430 = vmatpush1.msra.mxu0 0.0
      %431 = vmatprep.subr.mxu0 0.0
      %432 = vmatpush1.msra.mxu0 0.0
      %433 = vmatprep.subr.mxu0 0.0
      %434 = vmatpush1.msra.mxu0 0.0
      %435 = vmatprep.subr.mxu0 0.0
      %436 = vmatpush1.msra.mxu0 0.0
      %437 = vmatprep.subr.mxu0 0.0
      %438 = vmatpush1.msra.mxu0 0.0
      %439 = vmatprep.subr.mxu0 0.0
      %440 = vmatpush1.msra.mxu0 0.0
      %441 = vmatprep.subr.mxu0 0.0
      %442 = vmatpush1.msra.mxu0 0.0
      %443 = vmatprep.subr.mxu0 0.0
      %444 = vmatpush1.msra.mxu0 0.0
      %445 = vmatprep.subr.mxu0 0.0
      %446 = vmatpush1.msra.mxu0 0.0
      %447 = vmatprep.subr.mxu0 0.0
      %448 = vmatpush1.msra.mxu0 0.0
      %449 = vmatprep.subr.mxu0 0.0
      %450 = vmatpush1.msra.mxu0 %v318
      %451 = vmatprep.subr.mxu0 0.0
      %452 = vmatpush2.msra.mxu0 0.0
      %453 = vmatprep.subr.mxu0 0.0
      %454 = vmatpush2.msra.mxu0 0.0
      %455 = vmatprep.subr.mxu0 0.0
      %456 = vmatpush2.msra.mxu0 0.0
      %457 = vmatprep.subr.mxu0 0.0
      %458 = vmatpush2.msra.mxu0 0.0
      %459 = vmatprep.subr.mxu0 0.0
      %460 = vmatpush2.msra.mxu0 0.0
      %461 = vmatprep.subr.mxu0 0.0
      %462 = vmatpush2.msra.mxu0 0.0
      %463 = vmatprep.subr.mxu0 0.0
      %464 = vmatpush2.msra.mxu0 0.0
      %465 = vmatprep.subr.mxu0 0.0
      %466 = vmatpush2.msra.mxu0 0.0
      %467 = vmatprep.subr.mxu0 0.0
      %468 = vmatpush2.msra.mxu0 0.0
      %469 = vmatprep.subr.mxu0 0.0
      %470 = vmatpush2.msra.mxu0 0.0
      %471 = vmatprep.subr.mxu0 0.0
      %472 = vmatpush2.msra.mxu0 0.0
      %473 = vmatprep.subr.mxu0 0.0
      %474 = vmatpush2.msra.mxu0 0.0
      %475 = vmatprep.subr.mxu0 0.0
      %476 = vmatpush2.msra.mxu0 0.0
      %477 = vmatprep.subr.mxu0 0.0
      %478 = vmatpush2.msra.mxu0 0.0
      %479 = vmatprep.subr.mxu0 0.0
      %480 = vmatpush2.msra.mxu0 0.0
      %481 = vmatprep.subr.mxu0 0.0
      %482 = vmatpush2.msra.mxu0 0.0
      %483 = vmatprep.mubr.f32.mxu0 0.0
      %484 = vmatmul.mubr.f32.gmra.mxu0 %v417
      %v485 = vpop.f32.mrf.mxu0
      %v486 = vadd.f32 %v414, %v485
      %v487 = vpop.f32.mrf.mxu0
      %488 = vdwg.mxu0
      %v490 = vsel %vm344, %v330, 0
      %492 = vmatprep.subr.mxu0 0.0
      %493 = vmatpush1.msra.mxu0 0.0
      %494 = vmatprep.subr.mxu0 0.0
      %495 = vmatpush1.msra.mxu0 0.0
      %496 = vmatprep.subr.mxu0 0.0
      %497 = vmatpush1.msra.mxu0 0.0
      %498 = vmatprep.subr.mxu0 0.0
      %499 = vmatpush1.msra.mxu0 0.0
      %500 = vmatprep.subr.mxu0 0.0
      %501 = vmatpush1.msra.mxu0 0.0
      %502 = vmatprep.subr.mxu0 0.0
      %503 = vmatpush1.msra.mxu0 0.0
      %504 = vmatprep.subr.mxu0 0.0
      %505 = vmatpush1.msra.mxu0 0.0
      %506 = vmatprep.subr.mxu0 0.0
      %507 = vmatpush1.msra.mxu0 0.0
      %508 = vmatprep.subr.mxu0 0.0
      %509 = vmatpush1.msra.mxu0 0.0
      %510 = vmatprep.subr.mxu0 0.0
      %511 = vmatpush1.msra.mxu0 0.0
      %512 = vmatprep.subr.mxu0 0.0
      %513 = vmatpush1.msra.mxu0 0.0
      %514 = vmatprep.subr.mxu0 0.0
      %515 = vmatpush1.msra.mxu0 0.0
      %516 = vmatprep.subr.mxu0 0.0
      %517 = vmatpush1.msra.mxu0 0.0
      %518 = vmatprep.subr.mxu0 0.0
      %519 = vmatpush1.msra.mxu0 0.0
      %520 = vmatprep.subr.mxu0 0.0
      %521 = vmatpush1.msra.mxu0 0.0
      %522 = vmatprep.subr.mxu0 0.0
      %523 = vmatpush1.msra.mxu0 %v320
      %524 = vmatprep.subr.mxu0 0.0
      %525 = vmatpush2.msra.mxu0 0.0
      %526 = vmatprep.subr.mxu0 0.0
      %527 = vmatpush2.msra.mxu0 0.0
      %528 = vmatprep.subr.mxu0 0.0
      %529 = vmatpush2.msra.mxu0 0.0
      %530 = vmatprep.subr.mxu0 0.0
      %531 = vmatpush2.msra.mxu0 0.0
      %532 = vmatprep.subr.mxu0 0.0
      %533 = vmatpush2.msra.mxu0 0.0
      %534 = vmatprep.subr.mxu0 0.0
      %535 = vmatpush2.msra.mxu0 0.0
      %536 = vmatprep.subr.mxu0 0.0
      %537 = vmatpush2.msra.mxu0 0.0
      %538 = vmatprep.subr.mxu0 0.0
      %539 = vmatpush2.msra.mxu0 0.0
      %540 = vmatprep.subr.mxu0 0.0
      %541 = vmatpush2.msra.mxu0 0.0
      %542 = vmatprep.subr.mxu0 0.0
      %543 = vmatpush2.msra.mxu0 0.0
      %544 = vmatprep.subr.mxu0 0.0
      %545 = vmatpush2.msra.mxu0 0.0
      %546 = vmatprep.subr.mxu0 0.0
      %547 = vmatpush2.msra.mxu0 0.0
      %548 = vmatprep.subr.mxu0 0.0
      %549 = vmatpush2.msra.mxu0 0.0
      %550 = vmatprep.subr.mxu0 0.0
      %551 = vmatpush2.msra.mxu0 0.0
      %552 = vmatprep.subr.mxu0 0.0
      %553 = vmatpush2.msra.mxu0 0.0
      %554 = vmatprep.subr.mxu0 0.0
      %555 = vmatpush2.msra.mxu0 0.0
      %556 = vmatprep.mubr.f32.mxu0 0.0
      %557 = vmatmul.mubr.f32.gmra.mxu0 %v490
      %v558 = vpop.f32.mrf.mxu0
      %v559 = vadd.f32 0.0, %v558
      %v560 = vpop.f32.mrf.mxu0
      %561 = vdwg.mxu0
      %v562 = vadd.f32 %v486, %v559
      %v564 = vrot.slane %v330, 1
      %v565 = vrot.slane %v331, 1
      %v566 = vsel %vm340, %v564, %v565
      %v567 = vsel %vm344, %v566, 0
      %569 = vmatprep.subr.mxu0 0.0
      %570 = vmatpush1.msra.mxu0 0.0
      %571 = vmatprep.subr.mxu0 0.0
      %572 = vmatpush1.msra.mxu0 0.0
      %573 = vmatprep.subr.mxu0 0.0
      %574 = vmatpush1.msra.mxu0 0.0
      %575 = vmatprep.subr.mxu0 0.0
      %576 = vmatpush1.msra.mxu0 0.0
      %577 = vmatprep.subr.mxu0 0.0
      %578 = vmatpush1.msra.mxu0 0.0
      %579 = vmatprep.subr.mxu0 0.0
      %580 = vmatpush1.msra.mxu0 0.0
      %581 = vmatprep.subr.mxu0 0.0
      %582 = vmatpush1.msra.mxu0 0.0
      %583 = vmatprep.subr.mxu0 0.0
      %584 = vmatpush1.msra.mxu0 0.0
      %585 = vmatprep.subr.mxu0 0.0
      %586 = vmatpush1.msra.mxu0 0.0
      %587 = vmatprep.subr.mxu0 0.0
      %588 = vmatpush1.msra.mxu0 0.0
      %589 = vmatprep.subr.mxu0 0.0
      %590 = vmatpush1.msra.mxu0 0.0
      %591 = vmatprep.subr.mxu0 0.0
      %592 = vmatpush1.msra.mxu0 0.0
      %593 = vmatprep.subr.mxu0 0.0
      %594 = vmatpush1.msra.mxu0 0.0
      %595 = vmatprep.subr.mxu0 0.0
      %596 = vmatpush1.msra.mxu0 0.0
      %597 = vmatprep.subr.mxu0 0.0
      %598 = vmatpush1.msra.mxu0 0.0
      %599 = vmatprep.subr.mxu0 0.0
      %600 = vmatpush1.msra.mxu0 %v321
      %601 = vmatprep.subr.mxu0 0.0
      %602 = vmatpush2.msra.mxu0 0.0
      %603 = vmatprep.subr.mxu0 0.0
      %604 = vmatpush2.msra.mxu0 0.0
      %605 = vmatprep.subr.mxu0 0.0
      %606 = vmatpush2.msra.mxu0 0.0
      %607 = vmatprep.subr.mxu0 0.0
      %608 = vmatpush2.msra.mxu0 0.0
      %609 = vmatprep.subr.mxu0 0.0
      %610 = vmatpush2.msra.mxu0 0.0
      %611 = vmatprep.subr.mxu0 0.0
      %612 = vmatpush2.msra.mxu0 0.0
      %613 = vmatprep.subr.mxu0 0.0
      %614 = vmatpush2.msra.mxu0 0.0
      %615 = vmatprep.subr.mxu0 0.0
      %616 = vmatpush2.msra.mxu0 0.0
      %617 = vmatprep.subr.mxu0 0.0
      %618 = vmatpush2.msra.mxu0 0.0
      %619 = vmatprep.subr.mxu0 0.0
      %620 = vmatpush2.msra.mxu0 0.0
      %621 = vmatprep.subr.mxu0 0.0
      %622 = vmatpush2.msra.mxu0 0.0
      %623 = vmatprep.subr.mxu0 0.0
      %624 = vmatpush2.msra.mxu0 0.0
      %625 = vmatprep.subr.mxu0 0.0
      %626 = vmatpush2.msra.mxu0 0.0
      %627 = vmatprep.subr.mxu0 0.0
      %628 = vmatpush2.msra.mxu0 0.0
      %629 = vmatprep.subr.mxu0 0.0
      %630 = vmatpush2.msra.mxu0 0.0
      %631 = vmatprep.subr.mxu0 0.0
      %632 = vmatpush2.msra.mxu0 0.0
      %633 = vmatprep.mubr.f32.mxu0 0.0
      %634 = vmatmul.mubr.f32.gmra.mxu0 %v567
      %v635 = vpop.f32.mrf.mxu0
      %v636 = vadd.f32 0.0, %v635
      %v637 = vpop.f32.mrf.mxu0
      %638 = vdwg.mxu0
      %v639 = vadd.f32 %v562, %v636
      %v641 = vsel %vm344, %v333, 0
      %643 = vmatprep.subr.mxu0 0.0
      %644 = vmatpush1.msra.mxu0 0.0
      %645 = vmatprep.subr.mxu0 0.0
      %646 = vmatpush1.msra.mxu0 0.0
      %647 = vmatprep.subr.mxu0 0.0
      %648 = vmatpush1.msra.mxu0 0.0
      %649 = vmatprep.subr.mxu0 0.0
      %650 = vmatpush1.msra.mxu0 0.0
      %651 = vmatprep.subr.mxu0 0.0
      %652 = vmatpush1.msra.mxu0 0.0
      %653 = vmatprep.subr.mxu0 0.0
      %654 = vmatpush1.msra.mxu0 0.0
      %655 = vmatprep.subr.mxu0 0.0
      %656 = vmatpush1.msra.mxu0 0.0
      %657 = vmatprep.subr.mxu0 0.0
      %658 = vmatpush1.msra.mxu0 0.0
      %659 = vmatprep.subr.mxu0 0.0
      %660 = vmatpush1.msra.mxu0 0.0
      %661 = vmatprep.subr.mxu0 0.0
      %662 = vmatpush1.msra.mxu0 0.0
      %663 = vmatprep.subr.mxu0 0.0
      %664 = vmatpush1.msra.mxu0 0.0
      %665 = vmatprep.subr.mxu0 0.0
      %666 = vmatpush1.msra.mxu0 0.0
      %667 = vmatprep.subr.mxu0 0.0
      %668 = vmatpush1.msra.mxu0 0.0
      %669 = vmatprep.subr.mxu0 0.0
      %670 = vmatpush1.msra.mxu0 0.0
      %671 = vmatprep.subr.mxu0 0.0
      %672 = vmatpush1.msra.mxu0 0.0
      %673 = vmatprep.subr.mxu0 0.0
      %674 = vmatpush1.msra.mxu0 %v322
      %675 = vmatprep.subr.mxu0 0.0
      %676 = vmatpush2.msra.mxu0 0.0
      %677 = vmatprep.subr.mxu0 0.0
      %678 = vmatpush2.msra.mxu0 0.0
      %679 = vmatprep.subr.mxu0 0.0
      %680 = vmatpush2.msra.mxu0 0.0
      %681 = vmatprep.subr.mxu0 0.0
      %682 = vmatpush2.msra.mxu0 0.0
      %683 = vmatprep.subr.mxu0 0.0
      %684 = vmatpush2.msra.mxu0 0.0
      %685 = vmatprep.subr.mxu0 0.0
      %686 = vmatpush2.msra.mxu0 0.0
      %687 = vmatprep.subr.mxu0 0.0
      %688 = vmatpush2.msra.mxu0 0.0
      %689 = vmatprep.subr.mxu0 0.0
      %690 = vmatpush2.msra.mxu0 0.0
      %691 = vmatprep.subr.mxu0 0.0
      %692 = vmatpush2.msra.mxu0 0.0
      %693 = vmatprep.subr.mxu0 0.0
      %694 = vmatpush2.msra.mxu0 0.0
      %695 = vmatprep.subr.mxu0 0.0
      %696 = vmatpush2.msra.mxu0 0.0
      %697 = vmatprep.subr.mxu0 0.0
      %698 = vmatpush2.msra.mxu0 0.0
      %699 = vmatprep.subr.mxu0 0.0
      %700 = vmatpush2.msra.mxu0 0.0
      %701 = vmatprep.subr.mxu0 0.0
      %702 = vmatpush2.msra.mxu0 0.0
      %703 = vmatprep.subr.mxu0 0.0
      %704 = vmatpush2.msra.mxu0 0.0
      %705 = vmatprep.subr.mxu0 0.0
      %706 = vmatpush2.msra.mxu0 0.0
      %707 = vmatprep.mubr.f32.mxu0 0.0
      %708 = vmatmul.mubr.f32.gmra.mxu0 %v641
      %v709 = vpop.f32.mrf.mxu0
      %v710 = vadd.f32 0.0, %v709
      %v711 = vpop.f32.mrf.mxu0
      %712 = vdwg.mxu0
      %v713 = vadd.f32 %v639, %v710
      %v715 = vrot.slane %v333, 1
      %v716 = vrot.slane %v334, 1
      %v717 = vsel %vm340, %v715, %v716
      %v718 = vsel %vm344, %v717, 0
      %720 = vmatprep.subr.mxu0 0.0
      %721 = vmatpush1.msra.mxu0 0.0
      %722 = vmatprep.subr.mxu0 0.0
      %723 = vmatpush1.msra.mxu0 0.0
      %724 = vmatprep.subr.mxu0 0.0
      %725 = vmatpush1.msra.mxu0 0.0
      %726 = vmatprep.subr.mxu0 0.0
      %727 = vmatpush1.msra.mxu0 0.0
      %728 = vmatprep.subr.mxu0 0.0
      %729 = vmatpush1.msra.mxu0 0.0
      %730 = vmatprep.subr.mxu0 0.0
      %731 = vmatpush1.msra.mxu0 0.0
      %732 = vmatprep.subr.mxu0 0.0
      %733 = vmatpush1.msra.mxu0 0.0
      %734 = vmatprep.subr.mxu0 0.0
      %735 = vmatpush1.msra.mxu0 0.0
      %736 = vmatprep.subr.mxu0 0.0
      %737 = vmatpush1.msra.mxu0 0.0
      %738 = vmatprep.subr.mxu0 0.0
      %739 = vmatpush1.msra.mxu0 0.0
      %740 = vmatprep.subr.mxu0 0.0
      %741 = vmatpush1.msra.mxu0 0.0
      %742 = vmatprep.subr.mxu0 0.0
      %743 = vmatpush1.msra.mxu0 0.0
      %744 = vmatprep.subr.mxu0 0.0
      %745 = vmatpush1.msra.mxu0 0.0
      %746 = vmatprep.subr.mxu0 0.0
      %747 = vmatpush1.msra.mxu0 0.0
      %748 = vmatprep.subr.mxu0 0.0
      %749 = vmatpush1.msra.mxu0 0.0
      %750 = vmatprep.subr.mxu0 0.0
      %751 = vmatpush1.msra.mxu0 %v323
      %752 = vmatprep.subr.mxu0 0.0
      %753 = vmatpush2.msra.mxu0 0.0
      %754 = vmatprep.subr.mxu0 0.0
      %755 = vmatpush2.msra.mxu0 0.0
      %756 = vmatprep.subr.mxu0 0.0
      %757 = vmatpush2.msra.mxu0 0.0
      %758 = vmatprep.subr.mxu0 0.0
      %759 = vmatpush2.msra.mxu0 0.0
      %760 = vmatprep.subr.mxu0 0.0
      %761 = vmatpush2.msra.mxu0 0.0
      %762 = vmatprep.subr.mxu0 0.0
      %763 = vmatpush2.msra.mxu0 0.0
      %764 = vmatprep.subr.mxu0 0.0
      %765 = vmatpush2.msra.mxu0 0.0
      %766 = vmatprep.subr.mxu0 0.0
      %767 = vmatpush2.msra.mxu0 0.0
      %768 = vmatprep.subr.mxu0 0.0
      %769 = vmatpush2.msra.mxu0 0.0
      %770 = vmatprep.subr.mxu0 0.0
      %771 = vmatpush2.msra.mxu0 0.0
      %772 = vmatprep.subr.mxu0 0.0
      %773 = vmatpush2.msra.mxu0 0.0
      %774 = vmatprep.subr.mxu0 0.0
      %775 = vmatpush2.msra.mxu0 0.0
      %776 = vmatprep.subr.mxu0 0.0
      %777 = vmatpush2.msra.mxu0 0.0
      %778 = vmatprep.subr.mxu0 0.0
      %779 = vmatpush2.msra.mxu0 0.0
      %780 = vmatprep.subr.mxu0 0.0
      %781 = vmatpush2.msra.mxu0 0.0
      %782 = vmatprep.subr.mxu0 0.0
      %783 = vmatpush2.msra.mxu0 0.0
      %784 = vmatprep.mubr.f32.mxu0 0.0
      %785 = vmatmul.mubr.f32.gmra.mxu0 %v718
      %v786 = vpop.f32.mrf.mxu0
      %v787 = vadd.f32 0.0, %v786
      %v788 = vpop.f32.mrf.mxu0
      %789 = vdwg.mxu0
      %v790 = vadd.f32 %v713, %v787
      %v792 = vsel %vm344, %v336, 0
      %794 = vmatprep.subr.mxu0 0.0
      %795 = vmatpush1.msra.mxu0 0.0
      %796 = vmatprep.subr.mxu0 0.0
      %797 = vmatpush1.msra.mxu0 0.0
      %798 = vmatprep.subr.mxu0 0.0
      %799 = vmatpush1.msra.mxu0 0.0
      %800 = vmatprep.subr.mxu0 0.0
      %801 = vmatpush1.msra.mxu0 0.0
      %802 = vmatprep.subr.mxu0 0.0
      %803 = vmatpush1.msra.mxu0 0.0
      %804 = vmatprep.subr.mxu0 0.0
      %805 = vmatpush1.msra.mxu0 0.0
      %806 = vmatprep.subr.mxu0 0.0
      %807 = vmatpush1.msra.mxu0 0.0
      %808 = vmatprep.subr.mxu0 0.0
      %809 = vmatpush1.msra.mxu0 0.0
      %810 = vmatprep.subr.mxu0 0.0
      %811 = vmatpush1.msra.mxu0 0.0
      %812 = vmatprep.subr.mxu0 0.0
      %813 = vmatpush1.msra.mxu0 0.0
      %814 = vmatprep.subr.mxu0 0.0
      %815 = vmatpush1.msra.mxu0 0.0
      %816 = vmatprep.subr.mxu0 0.0
      %817 = vmatpush1.msra.mxu0 0.0
      %818 = vmatprep.subr.mxu0 0.0
      %819 = vmatpush1.msra.mxu0 0.0
      %820 = vmatprep.subr.mxu0 0.0
      %821 = vmatpush1.msra.mxu0 0.0
      %822 = vmatprep.subr.mxu0 0.0
      %823 = vmatpush1.msra.mxu0 0.0
      %824 = vmatprep.subr.mxu0 0.0
      %825 = vmatpush1.msra.mxu0 %v324
      %826 = vmatprep.subr.mxu0 0.0
      %827 = vmatpush2.msra.mxu0 0.0
      %828 = vmatprep.subr.mxu0 0.0
      %829 = vmatpush2.msra.mxu0 0.0
      %830 = vmatprep.subr.mxu0 0.0
      %831 = vmatpush2.msra.mxu0 0.0
      %832 = vmatprep.subr.mxu0 0.0
      %833 = vmatpush2.msra.mxu0 0.0
      %834 = vmatprep.subr.mxu0 0.0
      %835 = vmatpush2.msra.mxu0 0.0
      %836 = vmatprep.subr.mxu0 0.0
      %837 = vmatpush2.msra.mxu0 0.0
      %838 = vmatprep.subr.mxu0 0.0
      %839 = vmatpush2.msra.mxu0 0.0
      %840 = vmatprep.subr.mxu0 0.0
      %841 = vmatpush2.msra.mxu0 0.0
      %842 = vmatprep.subr.mxu0 0.0
      %843 = vmatpush2.msra.mxu0 0.0
      %844 = vmatprep.subr.mxu0 0.0
      %845 = vmatpush2.msra.mxu0 0.0
      %846 = vmatprep.subr.mxu0 0.0
      %847 = vmatpush2.msra.mxu0 0.0
      %848 = vmatprep.subr.mxu0 0.0
      %849 = vmatpush2.msra.mxu0 0.0
      %850 = vmatprep.subr.mxu0 0.0
      %851 = vmatpush2.msra.mxu0 0.0
      %852 = vmatprep.subr.mxu0 0.0
      %853 = vmatpush2.msra.mxu0 0.0
      %854 = vmatprep.subr.mxu0 0.0
      %855 = vmatpush2.msra.mxu0 0.0
      %856 = vmatprep.subr.mxu0 0.0
      %857 = vmatpush2.msra.mxu0 0.0
      %858 = vmatprep.mubr.f32.mxu0 0.0
      %859 = vmatmul.mubr.f32.gmra.mxu0 %v792
      %v860 = vpop.f32.mrf.mxu0
      %v861 = vadd.f32 0.0, %v860
      %v862 = vpop.f32.mrf.mxu0
      %863 = vdwg.mxu0
      %v864 = vadd.f32 %v790, %v861
      %v866 = vrot.slane %v336, 1
      %v867 = vrot.slane %v337, 1
      %v868 = vsel %vm340, %v866, %v867
      %v869 = vsel %vm344, %v868, 0
      %871 = vmatprep.subr.mxu0 0.0
      %872 = vmatpush1.msra.mxu0 0.0
      %873 = vmatprep.subr.mxu0 0.0
      %874 = vmatpush1.msra.mxu0 0.0
      %875 = vmatprep.subr.mxu0 0.0
      %876 = vmatpush1.msra.mxu0 0.0
      %877 = vmatprep.subr.mxu0 0.0
      %878 = vmatpush1.msra.mxu0 0.0
      %879 = vmatprep.subr.mxu0 0.0
      %880 = vmatpush1.msra.mxu0 0.0
      %881 = vmatprep.subr.mxu0 0.0
      %882 = vmatpush1.msra.mxu0 0.0
      %883 = vmatprep.subr.mxu0 0.0
      %884 = vmatpush1.msra.mxu0 0.0
      %885 = vmatprep.subr.mxu0 0.0
      %886 = vmatpush1.msra.mxu0 0.0
      %887 = vmatprep.subr.mxu0 0.0
      %888 = vmatpush1.msra.mxu0 0.0
      %889 = vmatprep.subr.mxu0 0.0
      %890 = vmatpush1.msra.mxu0 0.0
      %891 = vmatprep.subr.mxu0 0.0
      %892 = vmatpush1.msra.mxu0 0.0
      %893 = vmatprep.subr.mxu0 0.0
      %894 = vmatpush1.msra.mxu0 0.0
      %895 = vmatprep.subr.mxu0 0.0
      %896 = vmatpush1.msra.mxu0 0.0
      %897 = vmatprep.subr.mxu0 0.0
      %898 = vmatpush1.msra.mxu0 0.0
      %899 = vmatprep.subr.mxu0 0.0
      %900 = vmatpush1.msra.mxu0 0.0
      %901 = vmatprep.subr.mxu0 0.0
      %902 = vmatpush1.msra.mxu0 %v325
      %903 = vmatprep.subr.mxu0 0.0
      %904 = vmatpush2.msra.mxu0 0.0
      %905 = vmatprep.subr.mxu0 0.0
      %906 = vmatpush2.msra.mxu0 0.0
      %907 = vmatprep.subr.mxu0 0.0
      %908 = vmatpush2.msra.mxu0 0.0
      %909 = vmatprep.subr.mxu0 0.0
      %910 = vmatpush2.msra.mxu0 0.0
      %911 = vmatprep.subr.mxu0 0.0
      %912 = vmatpush2.msra.mxu0 0.0
      %913 = vmatprep.subr.mxu0 0.0
      %914 = vmatpush2.msra.mxu0 0.0
      %915 = vmatprep.subr.mxu0 0.0
      %916 = vmatpush2.msra.mxu0 0.0
      %917 = vmatprep.subr.mxu0 0.0
      %918 = vmatpush2.msra.mxu0 0.0
      %919 = vmatprep.subr.mxu0 0.0
      %920 = vmatpush2.msra.mxu0 0.0
      %921 = vmatprep.subr.mxu0 0.0
      %922 = vmatpush2.msra.mxu0 0.0
      %923 = vmatprep.subr.mxu0 0.0
      %924 = vmatpush2.msra.mxu0 0.0
      %925 = vmatprep.subr.mxu0 0.0
      %926 = vmatpush2.msra.mxu0 0.0
      %927 = vmatprep.subr.mxu0 0.0
      %928 = vmatpush2.msra.mxu0 0.0
      %929 = vmatprep.subr.mxu0 0.0
      %930 = vmatpush2.msra.mxu0 0.0
      %931 = vmatprep.subr.mxu0 0.0
      %932 = vmatpush2.msra.mxu0 0.0
      %933 = vmatprep.subr.mxu0 0.0
      %934 = vmatpush2.msra.mxu0 0.0
      %935 = vmatprep.mubr.f32.mxu0 0.0
      %936 = vmatmul.mubr.f32.gmra.mxu0 %v869
      %v937 = vpop.f32.mrf.mxu0
      %v938 = vadd.f32 0.0, %v937
      %v939 = vpop.f32.mrf.mxu0
      %940 = vdwg.mxu0
      %v941 = vadd.f32 %v864, %v938
      %v943 = vlaneseq
      %v944 = vshrl.u32 %v943, 7
      %v945 = vsub.s32 0, %v944
      %v946 = vrot.slane %v326, %v945
      %v948 = vadd.f32 %v941, %v946
      %vm949 = vcmask 31744
      %950 = vst.msk [vmem:[%s316] sm:$0xff] %vm949, %v948
      %v951 = vld [vmem:[%s332] sm:$0xff]
      %v952 = vld [vmem:[%s332 + $0x8] sm:$0x1]
      %v953 = vld [vmem:[%s335] sm:$0xff]
      %v954 = vld [vmem:[%s335 + $0x8] sm:$0x1]
      %s955 = scalar_lea.vmem %s286, 64
      %v956 = vld [vmem:[%s955] sm:$0xff]
      %v957 = vld [vmem:[%s955 + $0x8] sm:$0x1]
      %s958 = scalar_lea.vmem %s286, 80
      %v959 = vld [vmem:[%s958] sm:$0xff]
      %v960 = vld [vmem:[%s958 + $0x8] sm:$0x1]
      %v963 = vrot.slane %v951, 1
      %v964 = vrot.slane %v952, 1
      %v965 = vsel %vm340, %v963, %v964
      %v966 = vsel %vm344, %v965, 0
      %968 = vmatprep.subr.mxu0 0.0
      %969 = vmatpush1.msra.mxu0 0.0
      %970 = vmatprep.subr.mxu0 0.0
      %971 = vmatpush1.msra.mxu0 0.0
      %972 = vmatprep.subr.mxu0 0.0
      %973 = vmatpush1.msra.mxu0 0.0
      %974 = vmatprep.subr.mxu0 0.0
      %975 = vmatpush1.msra.mxu0 0.0
      %976 = vmatprep.subr.mxu0 0.0
      %977 = vmatpush1.msra.mxu0 0.0
      %978 = vmatprep.subr.mxu0 0.0
      %979 = vmatpush1.msra.mxu0 0.0
      %980 = vmatprep.subr.mxu0 0.0
      %981 = vmatpush1.msra.mxu0 0.0
      %982 = vmatprep.subr.mxu0 0.0
      %983 = vmatpush1.msra.mxu0 0.0
      %984 = vmatprep.subr.mxu0 0.0
      %985 = vmatpush1.msra.mxu0 0.0
      %986 = vmatprep.subr.mxu0 0.0
      %987 = vmatpush1.msra.mxu0 0.0
      %988 = vmatprep.subr.mxu0 0.0
      %989 = vmatpush1.msra.mxu0 0.0
      %990 = vmatprep.subr.mxu0 0.0
      %991 = vmatpush1.msra.mxu0 0.0
      %992 = vmatprep.subr.mxu0 0.0
      %993 = vmatpush1.msra.mxu0 0.0
      %994 = vmatprep.subr.mxu0 0.0
      %995 = vmatpush1.msra.mxu0 0.0
      %996 = vmatprep.subr.mxu0 0.0
      %997 = vmatpush1.msra.mxu0 0.0
      %998 = vmatprep.subr.mxu0 0.0
      %999 = vmatpush1.msra.mxu0 %v319
      %1000 = vmatprep.subr.mxu0 0.0
      %1001 = vmatpush2.msra.mxu0 0.0
      %1002 = vmatprep.subr.mxu0 0.0
      %1003 = vmatpush2.msra.mxu0 0.0
      %1004 = vmatprep.subr.mxu0 0.0
      %1005 = vmatpush2.msra.mxu0 0.0
      %1006 = vmatprep.subr.mxu0 0.0
      %1007 = vmatpush2.msra.mxu0 0.0
      %1008 = vmatprep.subr.mxu0 0.0
      %1009 = vmatpush2.msra.mxu0 0.0
      %1010 = vmatprep.subr.mxu0 0.0
      %1011 = vmatpush2.msra.mxu0 0.0
      %1012 = vmatprep.subr.mxu0 0.0
      %1013 = vmatpush2.msra.mxu0 0.0
      %1014 = vmatprep.subr.mxu0 0.0
      %1015 = vmatpush2.msra.mxu0 0.0
      %1016 = vmatprep.subr.mxu0 0.0
      %1017 = vmatpush2.msra.mxu0 0.0
      %1018 = vmatprep.subr.mxu0 0.0
      %1019 = vmatpush2.msra.mxu0 0.0
      %1020 = vmatprep.subr.mxu0 0.0
      %1021 = vmatpush2.msra.mxu0 0.0
      %1022 = vmatprep.subr.mxu0 0.0
      %1023 = vmatpush2.msra.mxu0 0.0
      %1024 = vmatprep.subr.mxu0 0.0
      %1025 = vmatpush2.msra.mxu0 0.0
      %1026 = vmatprep.subr.mxu0 0.0
      %1027 = vmatpush2.msra.mxu0 0.0
      %1028 = vmatprep.subr.mxu0 0.0
      %1029 = vmatpush2.msra.mxu0 0.0
      %1030 = vmatprep.subr.mxu0 0.0
      %1031 = vmatpush2.msra.mxu0 0.0
      %1032 = vmatprep.mubr.f32.mxu0 0.0
      %1033 = vmatmul.mubr.f32.gmra.mxu0 %v966
      %v1034 = vpop.f32.mrf.mxu0
      %v1035 = vadd.f32 0.0, %v1034
      %v1036 = vpop.f32.mrf.mxu0
      %1037 = vdwg.mxu0
      %v1038 = vsel %vm344, %v951, 0
      %1040 = vmatprep.subr.mxu0 0.0
      %1041 = vmatpush1.msra.mxu0 0.0
      %1042 = vmatprep.subr.mxu0 0.0
      %1043 = vmatpush1.msra.mxu0 0.0
      %1044 = vmatprep.subr.mxu0 0.0
      %1045 = vmatpush1.msra.mxu0 0.0
      %1046 = vmatprep.subr.mxu0 0.0
      %1047 = vmatpush1.msra.mxu0 0.0
      %1048 = vmatprep.subr.mxu0 0.0
      %1049 = vmatpush1.msra.mxu0 0.0
      %1050 = vmatprep.subr.mxu0 0.0
      %1051 = vmatpush1.msra.mxu0 0.0
      %1052 = vmatprep.subr.mxu0 0.0
      %1053 = vmatpush1.msra.mxu0 0.0
      %1054 = vmatprep.subr.mxu0 0.0
      %1055 = vmatpush1.msra.mxu0 0.0
      %1056 = vmatprep.subr.mxu0 0.0
      %1057 = vmatpush1.msra.mxu0 0.0
      %1058 = vmatprep.subr.mxu0 0.0
      %1059 = vmatpush1.msra.mxu0 0.0
      %1060 = vmatprep.subr.mxu0 0.0
      %1061 = vmatpush1.msra.mxu0 0.0
      %1062 = vmatprep.subr.mxu0 0.0
      %1063 = vmatpush1.msra.mxu0 0.0
      %1064 = vmatprep.subr.mxu0 0.0
      %1065 = vmatpush1.msra.mxu0 0.0
      %1066 = vmatprep.subr.mxu0 0.0
      %1067 = vmatpush1.msra.mxu0 0.0
      %1068 = vmatprep.subr.mxu0 0.0
      %1069 = vmatpush1.msra.mxu0 0.0
      %1070 = vmatprep.subr.mxu0 0.0
      %1071 = vmatpush1.msra.mxu0 %v318
      %1072 = vmatprep.subr.mxu0 0.0
      %1073 = vmatpush2.msra.mxu0 0.0
      %1074 = vmatprep.subr.mxu0 0.0
      %1075 = vmatpush2.msra.mxu0 0.0
      %1076 = vmatprep.subr.mxu0 0.0
      %1077 = vmatpush2.msra.mxu0 0.0
      %1078 = vmatprep.subr.mxu0 0.0
      %1079 = vmatpush2.msra.mxu0 0.0
      %1080 = vmatprep.subr.mxu0 0.0
      %1081 = vmatpush2.msra.mxu0 0.0
      %1082 = vmatprep.subr.mxu0 0.0
      %1083 = vmatpush2.msra.mxu0 0.0
      %1084 = vmatprep.subr.mxu0 0.0
      %1085 = vmatpush2.msra.mxu0 0.0
      %1086 = vmatprep.subr.mxu0 0.0
      %1087 = vmatpush2.msra.mxu0 0.0
      %1088 = vmatprep.subr.mxu0 0.0
      %1089 = vmatpush2.msra.mxu0 0.0
      %1090 = vmatprep.subr.mxu0 0.0
      %1091 = vmatpush2.msra.mxu0 0.0
      %1092 = vmatprep.subr.mxu0 0.0
      %1093 = vmatpush2.msra.mxu0 0.0
      %1094 = vmatprep.subr.mxu0 0.0
      %1095 = vmatpush2.msra.mxu0 0.0
      %1096 = vmatprep.subr.mxu0 0.0
      %1097 = vmatpush2.msra.mxu0 0.0
      %1098 = vmatprep.subr.mxu0 0.0
      %1099 = vmatpush2.msra.mxu0 0.0
      %1100 = vmatprep.subr.mxu0 0.0
      %1101 = vmatpush2.msra.mxu0 0.0
      %1102 = vmatprep.subr.mxu0 0.0
      %1103 = vmatpush2.msra.mxu0 0.0
      %1104 = vmatprep.mubr.f32.mxu0 0.0
      %1105 = vmatmul.mubr.f32.gmra.mxu0 %v1038
      %v1106 = vpop.f32.mrf.mxu0
      %v1107 = vadd.f32 %v1035, %v1106
      %v1108 = vpop.f32.mrf.mxu0
      %1109 = vdwg.mxu0
      %v1111 = vsel %vm344, %v953, 0
      %1113 = vmatprep.subr.mxu0 0.0
      %1114 = vmatpush1.msra.mxu0 0.0
      %1115 = vmatprep.subr.mxu0 0.0
      %1116 = vmatpush1.msra.mxu0 0.0
      %1117 = vmatprep.subr.mxu0 0.0
      %1118 = vmatpush1.msra.mxu0 0.0
      %1119 = vmatprep.subr.mxu0 0.0
      %1120 = vmatpush1.msra.mxu0 0.0
      %1121 = vmatprep.subr.mxu0 0.0
      %1122 = vmatpush1.msra.mxu0 0.0
      %1123 = vmatprep.subr.mxu0 0.0
      %1124 = vmatpush1.msra.mxu0 0.0
      %1125 = vmatprep.subr.mxu0 0.0
      %1126 = vmatpush1.msra.mxu0 0.0
      %1127 = vmatprep.subr.mxu0 0.0
      %1128 = vmatpush1.msra.mxu0 0.0
      %1129 = vmatprep.subr.mxu0 0.0
      %1130 = vmatpush1.msra.mxu0 0.0
      %1131 = vmatprep.subr.mxu0 0.0
      %1132 = vmatpush1.msra.mxu0 0.0
      %1133 = vmatprep.subr.mxu0 0.0
      %1134 = vmatpush1.msra.mxu0 0.0
      %1135 = vmatprep.subr.mxu0 0.0
      %1136 = vmatpush1.msra.mxu0 0.0
      %1137 = vmatprep.subr.mxu0 0.0
      %1138 = vmatpush1.msra.mxu0 0.0
      %1139 = vmatprep.subr.mxu0 0.0
      %1140 = vmatpush1.msra.mxu0 0.0
      %1141 = vmatprep.subr.mxu0 0.0
      %1142 = vmatpush1.msra.mxu0 0.0
      %1143 = vmatprep.subr.mxu0 0.0
      %1144 = vmatpush1.msra.mxu0 %v320
      %1145 = vmatprep.subr.mxu0 0.0
      %1146 = vmatpush2.msra.mxu0 0.0
      %1147 = vmatprep.subr.mxu0 0.0
      %1148 = vmatpush2.msra.mxu0 0.0
      %1149 = vmatprep.subr.mxu0 0.0
      %1150 = vmatpush2.msra.mxu0 0.0
      %1151 = vmatprep.subr.mxu0 0.0
      %1152 = vmatpush2.msra.mxu0 0.0
      %1153 = vmatprep.subr.mxu0 0.0
      %1154 = vmatpush2.msra.mxu0 0.0
      %1155 = vmatprep.subr.mxu0 0.0
      %1156 = vmatpush2.msra.mxu0 0.0
      %1157 = vmatprep.subr.mxu0 0.0
      %1158 = vmatpush2.msra.mxu0 0.0
      %1159 = vmatprep.subr.mxu0 0.0
      %1160 = vmatpush2.msra.mxu0 0.0
      %1161 = vmatprep.subr.mxu0 0.0
      %1162 = vmatpush2.msra.mxu0 0.0
      %1163 = vmatprep.subr.mxu0 0.0
      %1164 = vmatpush2.msra.mxu0 0.0
      %1165 = vmatprep.subr.mxu0 0.0
      %1166 = vmatpush2.msra.mxu0 0.0
      %1167 = vmatprep.subr.mxu0 0.0
      %1168 = vmatpush2.msra.mxu0 0.0
      %1169 = vmatprep.subr.mxu0 0.0
      %1170 = vmatpush2.msra.mxu0 0.0
      %1171 = vmatprep.subr.mxu0 0.0
      %1172 = vmatpush2.msra.mxu0 0.0
      %1173 = vmatprep.subr.mxu0 0.0
      %1174 = vmatpush2.msra.mxu0 0.0
      %1175 = vmatprep.subr.mxu0 0.0
      %1176 = vmatpush2.msra.mxu0 0.0
      %1177 = vmatprep.mubr.f32.mxu0 0.0
      %1178 = vmatmul.mubr.f32.gmra.mxu0 %v1111
      %v1179 = vpop.f32.mrf.mxu0
      %v1180 = vadd.f32 0.0, %v1179
      %v1181 = vpop.f32.mrf.mxu0
      %1182 = vdwg.mxu0
      %v1183 = vadd.f32 %v1107, %v1180
      %v1185 = vrot.slane %v953, 1
      %v1186 = vrot.slane %v954, 1
      %v1187 = vsel %vm340, %v1185, %v1186
      %v1188 = vsel %vm344, %v1187, 0
      %1190 = vmatprep.subr.mxu0 0.0
      %1191 = vmatpush1.msra.mxu0 0.0
      %1192 = vmatprep.subr.mxu0 0.0
      %1193 = vmatpush1.msra.mxu0 0.0
      %1194 = vmatprep.subr.mxu0 0.0
      %1195 = vmatpush1.msra.mxu0 0.0
      %1196 = vmatprep.subr.mxu0 0.0
      %1197 = vmatpush1.msra.mxu0 0.0
      %1198 = vmatprep.subr.mxu0 0.0
      %1199 = vmatpush1.msra.mxu0 0.0
      %1200 = vmatprep.subr.mxu0 0.0
      %1201 = vmatpush1.msra.mxu0 0.0
      %1202 = vmatprep.subr.mxu0 0.0
      %1203 = vmatpush1.msra.mxu0 0.0
      %1204 = vmatprep.subr.mxu0 0.0
      %1205 = vmatpush1.msra.mxu0 0.0
      %1206 = vmatprep.subr.mxu0 0.0
      %1207 = vmatpush1.msra.mxu0 0.0
      %1208 = vmatprep.subr.mxu0 0.0
      %1209 = vmatpush1.msra.mxu0 0.0
      %1210 = vmatprep.subr.mxu0 0.0
      %1211 = vmatpush1.msra.mxu0 0.0
      %1212 = vmatprep.subr.mxu0 0.0
      %1213 = vmatpush1.msra.mxu0 0.0
      %1214 = vmatprep.subr.mxu0 0.0
      %1215 = vmatpush1.msra.mxu0 0.0
      %1216 = vmatprep.subr.mxu0 0.0
      %1217 = vmatpush1.msra.mxu0 0.0
      %1218 = vmatprep.subr.mxu0 0.0
      %1219 = vmatpush1.msra.mxu0 0.0
      %1220 = vmatprep.subr.mxu0 0.0
      %1221 = vmatpush1.msra.mxu0 %v321
      %1222 = vmatprep.subr.mxu0 0.0
      %1223 = vmatpush2.msra.mxu0 0.0
      %1224 = vmatprep.subr.mxu0 0.0
      %1225 = vmatpush2.msra.mxu0 0.0
      %1226 = vmatprep.subr.mxu0 0.0
      %1227 = vmatpush2.msra.mxu0 0.0
      %1228 = vmatprep.subr.mxu0 0.0
      %1229 = vmatpush2.msra.mxu0 0.0
      %1230 = vmatprep.subr.mxu0 0.0
      %1231 = vmatpush2.msra.mxu0 0.0
      %1232 = vmatprep.subr.mxu0 0.0
      %1233 = vmatpush2.msra.mxu0 0.0
      %1234 = vmatprep.subr.mxu0 0.0
      %1235 = vmatpush2.msra.mxu0 0.0
      %1236 = vmatprep.subr.mxu0 0.0
      %1237 = vmatpush2.msra.mxu0 0.0
      %1238 = vmatprep.subr.mxu0 0.0
      %1239 = vmatpush2.msra.mxu0 0.0
      %1240 = vmatprep.subr.mxu0 0.0
      %1241 = vmatpush2.msra.mxu0 0.0
      %1242 = vmatprep.subr.mxu0 0.0
      %1243 = vmatpush2.msra.mxu0 0.0
      %1244 = vmatprep.subr.mxu0 0.0
      %1245 = vmatpush2.msra.mxu0 0.0
      %1246 = vmatprep.subr.mxu0 0.0
      %1247 = vmatpush2.msra.mxu0 0.0
      %1248 = vmatprep.subr.mxu0 0.0
      %1249 = vmatpush2.msra.mxu0 0.0
      %1250 = vmatprep.subr.mxu0 0.0
      %1251 = vmatpush2.msra.mxu0 0.0
      %1252 = vmatprep.subr.mxu0 0.0
      %1253 = vmatpush2.msra.mxu0 0.0
      %1254 = vmatprep.mubr.f32.mxu0 0.0
      %1255 = vmatmul.mubr.f32.gmra.mxu0 %v1188
      %v1256 = vpop.f32.mrf.mxu0
      %v1257 = vadd.f32 0.0, %v1256
      %v1258 = vpop.f32.mrf.mxu0
      %1259 = vdwg.mxu0
      %v1260 = vadd.f32 %v1183, %v1257
      %v1262 = vsel %vm344, %v956, 0
      %1264 = vmatprep.subr.mxu0 0.0
      %1265 = vmatpush1.msra.mxu0 0.0
      %1266 = vmatprep.subr.mxu0 0.0
      %1267 = vmatpush1.msra.mxu0 0.0
      %1268 = vmatprep.subr.mxu0 0.0
      %1269 = vmatpush1.msra.mxu0 0.0
      %1270 = vmatprep.subr.mxu0 0.0
      %1271 = vmatpush1.msra.mxu0 0.0
      %1272 = vmatprep.subr.mxu0 0.0
      %1273 = vmatpush1.msra.mxu0 0.0
      %1274 = vmatprep.subr.mxu0 0.0
      %1275 = vmatpush1.msra.mxu0 0.0
      %1276 = vmatprep.subr.mxu0 0.0
      %1277 = vmatpush1.msra.mxu0 0.0
      %1278 = vmatprep.subr.mxu0 0.0
      %1279 = vmatpush1.msra.mxu0 0.0
      %1280 = vmatprep.subr.mxu0 0.0
      %1281 = vmatpush1.msra.mxu0 0.0
      %1282 = vmatprep.subr.mxu0 0.0
      %1283 = vmatpush1.msra.mxu0 0.0
      %1284 = vmatprep.subr.mxu0 0.0
      %1285 = vmatpush1.msra.mxu0 0.0
      %1286 = vmatprep.subr.mxu0 0.0
      %1287 = vmatpush1.msra.mxu0 0.0
      %1288 = vmatprep.subr.mxu0 0.0
      %1289 = vmatpush1.msra.mxu0 0.0
      %1290 = vmatprep.subr.mxu0 0.0
      %1291 = vmatpush1.msra.mxu0 0.0
      %1292 = vmatprep.subr.mxu0 0.0
      %1293 = vmatpush1.msra.mxu0 0.0
      %1294 = vmatprep.subr.mxu0 0.0
      %1295 = vmatpush1.msra.mxu0 %v322
      %1296 = vmatprep.subr.mxu0 0.0
      %1297 = vmatpush2.msra.mxu0 0.0
      %1298 = vmatprep.subr.mxu0 0.0
      %1299 = vmatpush2.msra.mxu0 0.0
      %1300 = vmatprep.subr.mxu0 0.0
      %1301 = vmatpush2.msra.mxu0 0.0
      %1302 = vmatprep.subr.mxu0 0.0
      %1303 = vmatpush2.msra.mxu0 0.0
      %1304 = vmatprep.subr.mxu0 0.0
      %1305 = vmatpush2.msra.mxu0 0.0
      %1306 = vmatprep.subr.mxu0 0.0
      %1307 = vmatpush2.msra.mxu0 0.0
      %1308 = vmatprep.subr.mxu0 0.0
      %1309 = vmatpush2.msra.mxu0 0.0
      %1310 = vmatprep.subr.mxu0 0.0
      %1311 = vmatpush2.msra.mxu0 0.0
      %1312 = vmatprep.subr.mxu0 0.0
      %1313 = vmatpush2.msra.mxu0 0.0
      %1314 = vmatprep.subr.mxu0 0.0
      %1315 = vmatpush2.msra.mxu0 0.0
      %1316 = vmatprep.subr.mxu0 0.0
      %1317 = vmatpush2.msra.mxu0 0.0
      %1318 = vmatprep.subr.mxu0 0.0
      %1319 = vmatpush2.msra.mxu0 0.0
      %1320 = vmatprep.subr.mxu0 0.0
      %1321 = vmatpush2.msra.mxu0 0.0
      %1322 = vmatprep.subr.mxu0 0.0
      %1323 = vmatpush2.msra.mxu0 0.0
      %1324 = vmatprep.subr.mxu0 0.0
      %1325 = vmatpush2.msra.mxu0 0.0
      %1326 = vmatprep.subr.mxu0 0.0
      %1327 = vmatpush2.msra.mxu0 0.0
      %1328 = vmatprep.mubr.f32.mxu0 0.0
      %1329 = vmatmul.mubr.f32.gmra.mxu0 %v1262
      %v1330 = vpop.f32.mrf.mxu0
      %v1331 = vadd.f32 0.0, %v1330
      %v1332 = vpop.f32.mrf.mxu0
      %1333 = vdwg.mxu0
      %v1334 = vadd.f32 %v1260, %v1331
      %v1336 = vrot.slane %v956, 1
      %v1337 = vrot.slane %v957, 1
      %v1338 = vsel %vm340, %v1336, %v1337
      %v1339 = vsel %vm344, %v1338, 0
      %1341 = vmatprep.subr.mxu0 0.0
      %1342 = vmatpush1.msra.mxu0 0.0
      %1343 = vmatprep.subr.mxu0 0.0
      %1344 = vmatpush1.msra.mxu0 0.0
      %1345 = vmatprep.subr.mxu0 0.0
      %1346 = vmatpush1.msra.mxu0 0.0
      %1347 = vmatprep.subr.mxu0 0.0
      %1348 = vmatpush1.msra.mxu0 0.0
      %1349 = vmatprep.subr.mxu0 0.0
      %1350 = vmatpush1.msra.mxu0 0.0
      %1351 = vmatprep.subr.mxu0 0.0
      %1352 = vmatpush1.msra.mxu0 0.0
      %1353 = vmatprep.subr.mxu0 0.0
      %1354 = vmatpush1.msra.mxu0 0.0
      %1355 = vmatprep.subr.mxu0 0.0
      %1356 = vmatpush1.msra.mxu0 0.0
      %1357 = vmatprep.subr.mxu0 0.0
      %1358 = vmatpush1.msra.mxu0 0.0
      %1359 = vmatprep.subr.mxu0 0.0
      %1360 = vmatpush1.msra.mxu0 0.0
      %1361 = vmatprep.subr.mxu0 0.0
      %1362 = vmatpush1.msra.mxu0 0.0
      %1363 = vmatprep.subr.mxu0 0.0
      %1364 = vmatpush1.msra.mxu0 0.0
      %1365 = vmatprep.subr.mxu0 0.0
      %1366 = vmatpush1.msra.mxu0 0.0
      %1367 = vmatprep.subr.mxu0 0.0
      %1368 = vmatpush1.msra.mxu0 0.0
      %1369 = vmatprep.subr.mxu0 0.0
      %1370 = vmatpush1.msra.mxu0 0.0
      %1371 = vmatprep.subr.mxu0 0.0
      %1372 = vmatpush1.msra.mxu0 %v323
      %1373 = vmatprep.subr.mxu0 0.0
      %1374 = vmatpush2.msra.mxu0 0.0
      %1375 = vmatprep.subr.mxu0 0.0
      %1376 = vmatpush2.msra.mxu0 0.0
      %1377 = vmatprep.subr.mxu0 0.0
      %1378 = vmatpush2.msra.mxu0 0.0
      %1379 = vmatprep.subr.mxu0 0.0
      %1380 = vmatpush2.msra.mxu0 0.0
      %1381 = vmatprep.subr.mxu0 0.0
      %1382 = vmatpush2.msra.mxu0 0.0
      %1383 = vmatprep.subr.mxu0 0.0
      %1384 = vmatpush2.msra.mxu0 0.0
      %1385 = vmatprep.subr.mxu0 0.0
      %1386 = vmatpush2.msra.mxu0 0.0
      %1387 = vmatprep.subr.mxu0 0.0
      %1388 = vmatpush2.msra.mxu0 0.0
      %1389 = vmatprep.subr.mxu0 0.0
      %1390 = vmatpush2.msra.mxu0 0.0
      %1391 = vmatprep.subr.mxu0 0.0
      %1392 = vmatpush2.msra.mxu0 0.0
      %1393 = vmatprep.subr.mxu0 0.0
      %1394 = vmatpush2.msra.mxu0 0.0
      %1395 = vmatprep.subr.mxu0 0.0
      %1396 = vmatpush2.msra.mxu0 0.0
      %1397 = vmatprep.subr.mxu0 0.0
      %1398 = vmatpush2.msra.mxu0 0.0
      %1399 = vmatprep.subr.mxu0 0.0
      %1400 = vmatpush2.msra.mxu0 0.0
      %1401 = vmatprep.subr.mxu0 0.0
      %1402 = vmatpush2.msra.mxu0 0.0
      %1403 = vmatprep.subr.mxu0 0.0
      %1404 = vmatpush2.msra.mxu0 0.0
      %1405 = vmatprep.mubr.f32.mxu0 0.0
      %1406 = vmatmul.mubr.f32.gmra.mxu0 %v1339
      %v1407 = vpop.f32.mrf.mxu0
      %v1408 = vadd.f32 0.0, %v1407
      %v1409 = vpop.f32.mrf.mxu0
      %1410 = vdwg.mxu0
      %v1411 = vadd.f32 %v1334, %v1408
      %v1413 = vsel %vm344, %v959, 0
      %1415 = vmatprep.subr.mxu0 0.0
      %1416 = vmatpush1.msra.mxu0 0.0
      %1417 = vmatprep.subr.mxu0 0.0
      %1418 = vmatpush1.msra.mxu0 0.0
      %1419 = vmatprep.subr.mxu0 0.0
      %1420 = vmatpush1.msra.mxu0 0.0
      %1421 = vmatprep.subr.mxu0 0.0
      %1422 = vmatpush1.msra.mxu0 0.0
      %1423 = vmatprep.subr.mxu0 0.0
      %1424 = vmatpush1.msra.mxu0 0.0
      %1425 = vmatprep.subr.mxu0 0.0
      %1426 = vmatpush1.msra.mxu0 0.0
      %1427 = vmatprep.subr.mxu0 0.0
      %1428 = vmatpush1.msra.mxu0 0.0
      %1429 = vmatprep.subr.mxu0 0.0
      %1430 = vmatpush1.msra.mxu0 0.0
      %1431 = vmatprep.subr.mxu0 0.0
      %1432 = vmatpush1.msra.mxu0 0.0
      %1433 = vmatprep.subr.mxu0 0.0
      %1434 = vmatpush1.msra.mxu0 0.0
      %1435 = vmatprep.subr.mxu0 0.0
      %1436 = vmatpush1.msra.mxu0 0.0
      %1437 = vmatprep.subr.mxu0 0.0
      %1438 = vmatpush1.msra.mxu0 0.0
      %1439 = vmatprep.subr.mxu0 0.0
      %1440 = vmatpush1.msra.mxu0 0.0
      %1441 = vmatprep.subr.mxu0 0.0
      %1442 = vmatpush1.msra.mxu0 0.0
      %1443 = vmatprep.subr.mxu0 0.0
      %1444 = vmatpush1.msra.mxu0 0.0
      %1445 = vmatprep.subr.mxu0 0.0
      %1446 = vmatpush1.msra.mxu0 %v324
      %1447 = vmatprep.subr.mxu0 0.0
      %1448 = vmatpush2.msra.mxu0 0.0
      %1449 = vmatprep.subr.mxu0 0.0
      %1450 = vmatpush2.msra.mxu0 0.0
      %1451 = vmatprep.subr.mxu0 0.0
      %1452 = vmatpush2.msra.mxu0 0.0
      %1453 = vmatprep.subr.mxu0 0.0
      %1454 = vmatpush2.msra.mxu0 0.0
      %1455 = vmatprep.subr.mxu0 0.0
      %1456 = vmatpush2.msra.mxu0 0.0
      %1457 = vmatprep.subr.mxu0 0.0
      %1458 = vmatpush2.msra.mxu0 0.0
      %1459 = vmatprep.subr.mxu0 0.0
      %1460 = vmatpush2.msra.mxu0 0.0
      %1461 = vmatprep.subr.mxu0 0.0
      %1462 = vmatpush2.msra.mxu0 0.0
      %1463 = vmatprep.subr.mxu0 0.0
      %1464 = vmatpush2.msra.mxu0 0.0
      %1465 = vmatprep.subr.mxu0 0.0
      %1466 = vmatpush2.msra.mxu0 0.0
      %1467 = vmatprep.subr.mxu0 0.0
      %1468 = vmatpush2.msra.mxu0 0.0
      %1469 = vmatprep.subr.mxu0 0.0
      %1470 = vmatpush2.msra.mxu0 0.0
      %1471 = vmatprep.subr.mxu0 0.0
      %1472 = vmatpush2.msra.mxu0 0.0
      %1473 = vmatprep.subr.mxu0 0.0
      %1474 = vmatpush2.msra.mxu0 0.0
      %1475 = vmatprep.subr.mxu0 0.0
      %1476 = vmatpush2.msra.mxu0 0.0
      %1477 = vmatprep.subr.mxu0 0.0
      %1478 = vmatpush2.msra.mxu0 0.0
      %1479 = vmatprep.mubr.f32.mxu0 0.0
      %1480 = vmatmul.mubr.f32.gmra.mxu0 %v1413
      %v1481 = vpop.f32.mrf.mxu0
      %v1482 = vadd.f32 0.0, %v1481
      %v1483 = vpop.f32.mrf.mxu0
      %1484 = vdwg.mxu0
      %v1485 = vadd.f32 %v1411, %v1482
      %v1487 = vrot.slane %v959, 1
      %v1488 = vrot.slane %v960, 1
      %v1489 = vsel %vm340, %v1487, %v1488
      %v1490 = vsel %vm344, %v1489, 0
      %1492 = vmatprep.subr.mxu0 0.0
      %1493 = vmatpush1.msra.mxu0 0.0
      %1494 = vmatprep.subr.mxu0 0.0
      %1495 = vmatpush1.msra.mxu0 0.0
      %1496 = vmatprep.subr.mxu0 0.0
      %1497 = vmatpush1.msra.mxu0 0.0
      %1498 = vmatprep.subr.mxu0 0.0
      %1499 = vmatpush1.msra.mxu0 0.0
      %1500 = vmatprep.subr.mxu0 0.0
      %1501 = vmatpush1.msra.mxu0 0.0
      %1502 = vmatprep.subr.mxu0 0.0
      %1503 = vmatpush1.msra.mxu0 0.0
      %1504 = vmatprep.subr.mxu0 0.0
      %1505 = vmatpush1.msra.mxu0 0.0
      %1506 = vmatprep.subr.mxu0 0.0
      %1507 = vmatpush1.msra.mxu0 0.0
      %1508 = vmatprep.subr.mxu0 0.0
      %1509 = vmatpush1.msra.mxu0 0.0
      %1510 = vmatprep.subr.mxu0 0.0
      %1511 = vmatpush1.msra.mxu0 0.0
      %1512 = vmatprep.subr.mxu0 0.0
      %1513 = vmatpush1.msra.mxu0 0.0
      %1514 = vmatprep.subr.mxu0 0.0
      %1515 = vmatpush1.msra.mxu0 0.0
      %1516 = vmatprep.subr.mxu0 0.0
      %1517 = vmatpush1.msra.mxu0 0.0
      %1518 = vmatprep.subr.mxu0 0.0
      %1519 = vmatpush1.msra.mxu0 0.0
      %1520 = vmatprep.subr.mxu0 0.0
      %1521 = vmatpush1.msra.mxu0 0.0
      %1522 = vmatprep.subr.mxu0 0.0
      %1523 = vmatpush1.msra.mxu0 %v325
      %1524 = vmatprep.subr.mxu0 0.0
      %1525 = vmatpush2.msra.mxu0 0.0
      %1526 = vmatprep.subr.mxu0 0.0
      %1527 = vmatpush2.msra.mxu0 0.0
      %1528 = vmatprep.subr.mxu0 0.0
      %1529 = vmatpush2.msra.mxu0 0.0
      %1530 = vmatprep.subr.mxu0 0.0
      %1531 = vmatpush2.msra.mxu0 0.0
      %1532 = vmatprep.subr.mxu0 0.0
      %1533 = vmatpush2.msra.mxu0 0.0
      %1534 = vmatprep.subr.mxu0 0.0
      %1535 = vmatpush2.msra.mxu0 0.0
      %1536 = vmatprep.subr.mxu0 0.0
      %1537 = vmatpush2.msra.mxu0 0.0
      %1538 = vmatprep.subr.mxu0 0.0
      %1539 = vmatpush2.msra.mxu0 0.0
      %1540 = vmatprep.subr.mxu0 0.0
      %1541 = vmatpush2.msra.mxu0 0.0
      %1542 = vmatprep.subr.mxu0 0.0
      %1543 = vmatpush2.msra.mxu0 0.0
      %1544 = vmatprep.subr.mxu0 0.0
      %1545 = vmatpush2.msra.mxu0 0.0
      %1546 = vmatprep.subr.mxu0 0.0
      %1547 = vmatpush2.msra.mxu0 0.0
      %1548 = vmatprep.subr.mxu0 0.0
      %1549 = vmatpush2.msra.mxu0 0.0
      %1550 = vmatprep.subr.mxu0 0.0
      %1551 = vmatpush2.msra.mxu0 0.0
      %1552 = vmatprep.subr.mxu0 0.0
      %1553 = vmatpush2.msra.mxu0 0.0
      %1554 = vmatprep.subr.mxu0 0.0
      %1555 = vmatpush2.msra.mxu0 0.0
      %1556 = vmatprep.mubr.f32.mxu0 0.0
      %1557 = vmatmul.mubr.f32.gmra.mxu0 %v1490
      %v1558 = vpop.f32.mrf.mxu0
      %v1559 = vadd.f32 0.0, %v1558
      %v1560 = vpop.f32.mrf.mxu0
      %1561 = vdwg.mxu0
      %v1562 = vadd.f32 %v1485, %v1559
      %v1563 = vadd.f32 %v1562, %v946
      %s1564 = scalar_lea.vmem %s316, 8
      %1565 = vst.msk [vmem:[%s1564] sm:$0xff] %vm949, %v1563
      %v1566 = vld [vmem:[%s955] sm:$0xff]
      %v1567 = vld [vmem:[%s955 + $0x8] sm:$0x1]
      %v1568 = vld [vmem:[%s958] sm:$0xff]
      %v1569 = vld [vmem:[%s958 + $0x8] sm:$0x1]
      %s1570 = scalar_lea.vmem %s286, 96
      %v1571 = vld [vmem:[%s1570] sm:$0xff]
      %v1572 = vld [vmem:[%s1570 + $0x8] sm:$0x1]
      %s1573 = scalar_lea.vmem %s286, 112
      %v1574 = vld [vmem:[%s1573] sm:$0xff]
      %v1575 = vld [vmem:[%s1573 + $0x8] sm:$0x1]
      %v1578 = vrot.slane %v1566, 1
      %v1579 = vrot.slane %v1567, 1
      %v1580 = vsel %vm340, %v1578, %v1579
      %v1581 = vsel %vm344, %v1580, 0
      %1583 = vmatprep.subr.mxu0 0.0
      %1584 = vmatpush1.msra.mxu0 0.0
      %1585 = vmatprep.subr.mxu0 0.0
      %1586 = vmatpush1.msra.mxu0 0.0
      %1587 = vmatprep.subr.mxu0 0.0
      %1588 = vmatpush1.msra.mxu0 0.0
      %1589 = vmatprep.subr.mxu0 0.0
      %1590 = vmatpush1.msra.mxu0 0.0
      %1591 = vmatprep.subr.mxu0 0.0
      %1592 = vmatpush1.msra.mxu0 0.0
      %1593 = vmatprep.subr.mxu0 0.0
      %1594 = vmatpush1.msra.mxu0 0.0
      %1595 = vmatprep.subr.mxu0 0.0
      %1596 = vmatpush1.msra.mxu0 0.0
      %1597 = vmatprep.subr.mxu0 0.0
      %1598 = vmatpush1.msra.mxu0 0.0
      %1599 = vmatprep.subr.mxu0 0.0
      %1600 = vmatpush1.msra.mxu0 0.0
      %1601 = vmatprep.subr.mxu0 0.0
      %1602 = vmatpush1.msra.mxu0 0.0
      %1603 = vmatprep.subr.mxu0 0.0
      %1604 = vmatpush1.msra.mxu0 0.0
      %1605 = vmatprep.subr.mxu0 0.0
      %1606 = vmatpush1.msra.mxu0 0.0
      %1607 = vmatprep.subr.mxu0 0.0
      %1608 = vmatpush1.msra.mxu0 0.0
      %1609 = vmatprep.subr.mxu0 0.0
      %1610 = vmatpush1.msra.mxu0 0.0
      %1611 = vmatprep.subr.mxu0 0.0
      %1612 = vmatpush1.msra.mxu0 0.0
      %1613 = vmatprep.subr.mxu0 0.0
      %1614 = vmatpush1.msra.mxu0 %v319
      %1615 = vmatprep.subr.mxu0 0.0
      %1616 = vmatpush2.msra.mxu0 0.0
      %1617 = vmatprep.subr.mxu0 0.0
      %1618 = vmatpush2.msra.mxu0 0.0
      %1619 = vmatprep.subr.mxu0 0.0
      %1620 = vmatpush2.msra.mxu0 0.0
      %1621 = vmatprep.subr.mxu0 0.0
      %1622 = vmatpush2.msra.mxu0 0.0
      %1623 = vmatprep.subr.mxu0 0.0
      %1624 = vmatpush2.msra.mxu0 0.0
      %1625 = vmatprep.subr.mxu0 0.0
      %1626 = vmatpush2.msra.mxu0 0.0
      %1627 = vmatprep.subr.mxu0 0.0
      %1628 = vmatpush2.msra.mxu0 0.0
      %1629 = vmatprep.subr.mxu0 0.0
      %1630 = vmatpush2.msra.mxu0 0.0
      %1631 = vmatprep.subr.mxu0 0.0
      %1632 = vmatpush2.msra.mxu0 0.0
      %1633 = vmatprep.subr.mxu0 0.0
      %1634 = vmatpush2.msra.mxu0 0.0
      %1635 = vmatprep.subr.mxu0 0.0
      %1636 = vmatpush2.msra.mxu0 0.0
      %1637 = vmatprep.subr.mxu0 0.0
      %1638 = vmatpush2.msra.mxu0 0.0
      %1639 = vmatprep.subr.mxu0 0.0
      %1640 = vmatpush2.msra.mxu0 0.0
      %1641 = vmatprep.subr.mxu0 0.0
      %1642 = vmatpush2.msra.mxu0 0.0
      %1643 = vmatprep.subr.mxu0 0.0
      %1644 = vmatpush2.msra.mxu0 0.0
      %1645 = vmatprep.subr.mxu0 0.0
      %1646 = vmatpush2.msra.mxu0 0.0
      %1647 = vmatprep.mubr.f32.mxu0 0.0
      %1648 = vmatmul.mubr.f32.gmra.mxu0 %v1581
      %v1649 = vpop.f32.mrf.mxu0
      %v1650 = vadd.f32 0.0, %v1649
      %v1651 = vpop.f32.mrf.mxu0
      %1652 = vdwg.mxu0
      %v1653 = vsel %vm344, %v1566, 0
      %1655 = vmatprep.subr.mxu0 0.0
      %1656 = vmatpush1.msra.mxu0 0.0
      %1657 = vmatprep.subr.mxu0 0.0
      %1658 = vmatpush1.msra.mxu0 0.0
      %1659 = vmatprep.subr.mxu0 0.0
      %1660 = vmatpush1.msra.mxu0 0.0
      %1661 = vmatprep.subr.mxu0 0.0
      %1662 = vmatpush1.msra.mxu0 0.0
      %1663 = vmatprep.subr.mxu0 0.0
      %1664 = vmatpush1.msra.mxu0 0.0
      %1665 = vmatprep.subr.mxu0 0.0
      %1666 = vmatpush1.msra.mxu0 0.0
      %1667 = vmatprep.subr.mxu0 0.0
      %1668 = vmatpush1.msra.mxu0 0.0
      %1669 = vmatprep.subr.mxu0 0.0
      %1670 = vmatpush1.msra.mxu0 0.0
      %1671 = vmatprep.subr.mxu0 0.0
      %1672 = vmatpush1.msra.mxu0 0.0
      %1673 = vmatprep.subr.mxu0 0.0
      %1674 = vmatpush1.msra.mxu0 0.0
      %1675 = vmatprep.subr.mxu0 0.0
      %1676 = vmatpush1.msra.mxu0 0.0
      %1677 = vmatprep.subr.mxu0 0.0
      %1678 = vmatpush1.msra.mxu0 0.0
      %1679 = vmatprep.subr.mxu0 0.0
      %1680 = vmatpush1.msra.mxu0 0.0
      %1681 = vmatprep.subr.mxu0 0.0
      %1682 = vmatpush1.msra.mxu0 0.0
      %1683 = vmatprep.subr.mxu0 0.0
      %1684 = vmatpush1.msra.mxu0 0.0
      %1685 = vmatprep.subr.mxu0 0.0
      %1686 = vmatpush1.msra.mxu0 %v318
      %1687 = vmatprep.subr.mxu0 0.0
      %1688 = vmatpush2.msra.mxu0 0.0
      %1689 = vmatprep.subr.mxu0 0.0
      %1690 = vmatpush2.msra.mxu0 0.0
      %1691 = vmatprep.subr.mxu0 0.0
      %1692 = vmatpush2.msra.mxu0 0.0
      %1693 = vmatprep.subr.mxu0 0.0
      %1694 = vmatpush2.msra.mxu0 0.0
      %1695 = vmatprep.subr.mxu0 0.0
      %1696 = vmatpush2.msra.mxu0 0.0
      %1697 = vmatprep.subr.mxu0 0.0
      %1698 = vmatpush2.msra.mxu0 0.0
      %1699 = vmatprep.subr.mxu0 0.0
      %1700 = vmatpush2.msra.mxu0 0.0
      %1701 = vmatprep.subr.mxu0 0.0
      %1702 = vmatpush2.msra.mxu0 0.0
      %1703 = vmatprep.subr.mxu0 0.0
      %1704 = vmatpush2.msra.mxu0 0.0
      %1705 = vmatprep.subr.mxu0 0.0
      %1706 = vmatpush2.msra.mxu0 0.0
      %1707 = vmatprep.subr.mxu0 0.0
      %1708 = vmatpush2.msra.mxu0 0.0
      %1709 = vmatprep.subr.mxu0 0.0
      %1710 = vmatpush2.msra.mxu0 0.0
      %1711 = vmatprep.subr.mxu0 0.0
      %1712 = vmatpush2.msra.mxu0 0.0
      %1713 = vmatprep.subr.mxu0 0.0
      %1714 = vmatpush2.msra.mxu0 0.0
      %1715 = vmatprep.subr.mxu0 0.0
      %1716 = vmatpush2.msra.mxu0 0.0
      %1717 = vmatprep.subr.mxu0 0.0
      %1718 = vmatpush2.msra.mxu0 0.0
      %1719 = vmatprep.mubr.f32.mxu0 0.0
      %1720 = vmatmul.mubr.f32.gmra.mxu0 %v1653
      %v1721 = vpop.f32.mrf.mxu0
      %v1722 = vadd.f32 %v1650, %v1721
      %v1723 = vpop.f32.mrf.mxu0
      %1724 = vdwg.mxu0
      %v1726 = vsel %vm344, %v1568, 0
      %1728 = vmatprep.subr.mxu0 0.0
      %1729 = vmatpush1.msra.mxu0 0.0
      %1730 = vmatprep.subr.mxu0 0.0
      %1731 = vmatpush1.msra.mxu0 0.0
      %1732 = vmatprep.subr.mxu0 0.0
      %1733 = vmatpush1.msra.mxu0 0.0
      %1734 = vmatprep.subr.mxu0 0.0
      %1735 = vmatpush1.msra.mxu0 0.0
      %1736 = vmatprep.subr.mxu0 0.0
      %1737 = vmatpush1.msra.mxu0 0.0
      %1738 = vmatprep.subr.mxu0 0.0
      %1739 = vmatpush1.msra.mxu0 0.0
      %1740 = vmatprep.subr.mxu0 0.0
      %1741 = vmatpush1.msra.mxu0 0.0
      %1742 = vmatprep.subr.mxu0 0.0
      %1743 = vmatpush1.msra.mxu0 0.0
      %1744 = vmatprep.subr.mxu0 0.0
      %1745 = vmatpush1.msra.mxu0 0.0
      %1746 = vmatprep.subr.mxu0 0.0
      %1747 = vmatpush1.msra.mxu0 0.0
      %1748 = vmatprep.subr.mxu0 0.0
      %1749 = vmatpush1.msra.mxu0 0.0
      %1750 = vmatprep.subr.mxu0 0.0
      %1751 = vmatpush1.msra.mxu0 0.0
      %1752 = vmatprep.subr.mxu0 0.0
      %1753 = vmatpush1.msra.mxu0 0.0
      %1754 = vmatprep.subr.mxu0 0.0
      %1755 = vmatpush1.msra.mxu0 0.0
      %1756 = vmatprep.subr.mxu0 0.0
      %1757 = vmatpush1.msra.mxu0 0.0
      %1758 = vmatprep.subr.mxu0 0.0
      %1759 = vmatpush1.msra.mxu0 %v320
      %1760 = vmatprep.subr.mxu0 0.0
      %1761 = vmatpush2.msra.mxu0 0.0
      %1762 = vmatprep.subr.mxu0 0.0
      %1763 = vmatpush2.msra.mxu0 0.0
      %1764 = vmatprep.subr.mxu0 0.0
      %1765 = vmatpush2.msra.mxu0 0.0
      %1766 = vmatprep.subr.mxu0 0.0
      %1767 = vmatpush2.msra.mxu0 0.0
      %1768 = vmatprep.subr.mxu0 0.0
      %1769 = vmatpush2.msra.mxu0 0.0
      %1770 = vmatprep.subr.mxu0 0.0
      %1771 = vmatpush2.msra.mxu0 0.0
      %1772 = vmatprep.subr.mxu0 0.0
      %1773 = vmatpush2.msra.mxu0 0.0
      %1774 = vmatprep.subr.mxu0 0.0
      %1775 = vmatpush2.msra.mxu0 0.0
      %1776 = vmatprep.subr.mxu0 0.0
      %1777 = vmatpush2.msra.mxu0 0.0
      %1778 = vmatprep.subr.mxu0 0.0
      %1779 = vmatpush2.msra.mxu0 0.0
      %1780 = vmatprep.subr.mxu0 0.0
      %1781 = vmatpush2.msra.mxu0 0.0
      %1782 = vmatprep.subr.mxu0 0.0
      %1783 = vmatpush2.msra.mxu0 0.0
      %1784 = vmatprep.subr.mxu0 0.0
      %1785 = vmatpush2.msra.mxu0 0.0
      %1786 = vmatprep.subr.mxu0 0.0
      %1787 = vmatpush2.msra.mxu0 0.0
      %1788 = vmatprep.subr.mxu0 0.0
      %1789 = vmatpush2.msra.mxu0 0.0
      %1790 = vmatprep.subr.mxu0 0.0
      %1791 = vmatpush2.msra.mxu0 0.0
      %1792 = vmatprep.mubr.f32.mxu0 0.0
      %1793 = vmatmul.mubr.f32.gmra.mxu0 %v1726
      %v1794 = vpop.f32.mrf.mxu0
      %v1795 = vadd.f32 0.0, %v1794
      %v1796 = vpop.f32.mrf.mxu0
      %1797 = vdwg.mxu0
      %v1798 = vadd.f32 %v1722, %v1795
      %v1800 = vrot.slane %v1568, 1
      %v1801 = vrot.slane %v1569, 1
      %v1802 = vsel %vm340, %v1800, %v1801
      %v1803 = vsel %vm344, %v1802, 0
      %1805 = vmatprep.subr.mxu0 0.0
      %1806 = vmatpush1.msra.mxu0 0.0
      %1807 = vmatprep.subr.mxu0 0.0
      %1808 = vmatpush1.msra.mxu0 0.0
      %1809 = vmatprep.subr.mxu0 0.0
      %1810 = vmatpush1.msra.mxu0 0.0
      %1811 = vmatprep.subr.mxu0 0.0
      %1812 = vmatpush1.msra.mxu0 0.0
      %1813 = vmatprep.subr.mxu0 0.0
      %1814 = vmatpush1.msra.mxu0 0.0
      %1815 = vmatprep.subr.mxu0 0.0
      %1816 = vmatpush1.msra.mxu0 0.0
      %1817 = vmatprep.subr.mxu0 0.0
      %1818 = vmatpush1.msra.mxu0 0.0
      %1819 = vmatprep.subr.mxu0 0.0
      %1820 = vmatpush1.msra.mxu0 0.0
      %1821 = vmatprep.subr.mxu0 0.0
      %1822 = vmatpush1.msra.mxu0 0.0
      %1823 = vmatprep.subr.mxu0 0.0
      %1824 = vmatpush1.msra.mxu0 0.0
      %1825 = vmatprep.subr.mxu0 0.0
      %1826 = vmatpush1.msra.mxu0 0.0
      %1827 = vmatprep.subr.mxu0 0.0
      %1828 = vmatpush1.msra.mxu0 0.0
      %1829 = vmatprep.subr.mxu0 0.0
      %1830 = vmatpush1.msra.mxu0 0.0
      %1831 = vmatprep.subr.mxu0 0.0
      %1832 = vmatpush1.msra.mxu0 0.0
      %1833 = vmatprep.subr.mxu0 0.0
      %1834 = vmatpush1.msra.mxu0 0.0
      %1835 = vmatprep.subr.mxu0 0.0
      %1836 = vmatpush1.msra.mxu0 %v321
      %1837 = vmatprep.subr.mxu0 0.0
      %1838 = vmatpush2.msra.mxu0 0.0
      %1839 = vmatprep.subr.mxu0 0.0
      %1840 = vmatpush2.msra.mxu0 0.0
      %1841 = vmatprep.subr.mxu0 0.0
      %1842 = vmatpush2.msra.mxu0 0.0
      %1843 = vmatprep.subr.mxu0 0.0
      %1844 = vmatpush2.msra.mxu0 0.0
      %1845 = vmatprep.subr.mxu0 0.0
      %1846 = vmatpush2.msra.mxu0 0.0
      %1847 = vmatprep.subr.mxu0 0.0
      %1848 = vmatpush2.msra.mxu0 0.0
      %1849 = vmatprep.subr.mxu0 0.0
      %1850 = vmatpush2.msra.mxu0 0.0
      %1851 = vmatprep.subr.mxu0 0.0
      %1852 = vmatpush2.msra.mxu0 0.0
      %1853 = vmatprep.subr.mxu0 0.0
      %1854 = vmatpush2.msra.mxu0 0.0
      %1855 = vmatprep.subr.mxu0 0.0
      %1856 = vmatpush2.msra.mxu0 0.0
      %1857 = vmatprep.subr.mxu0 0.0
      %1858 = vmatpush2.msra.mxu0 0.0
      %1859 = vmatprep.subr.mxu0 0.0
      %1860 = vmatpush2.msra.mxu0 0.0
      %1861 = vmatprep.subr.mxu0 0.0
      %1862 = vmatpush2.msra.mxu0 0.0
      %1863 = vmatprep.subr.mxu0 0.0
      %1864 = vmatpush2.msra.mxu0 0.0
      %1865 = vmatprep.subr.mxu0 0.0
      %1866 = vmatpush2.msra.mxu0 0.0
      %1867 = vmatprep.subr.mxu0 0.0
      %1868 = vmatpush2.msra.mxu0 0.0
      %1869 = vmatprep.mubr.f32.mxu0 0.0
      %1870 = vmatmul.mubr.f32.gmra.mxu0 %v1803
      %v1871 = vpop.f32.mrf.mxu0
      %v1872 = vadd.f32 0.0, %v1871
      %v1873 = vpop.f32.mrf.mxu0
      %1874 = vdwg.mxu0
      %v1875 = vadd.f32 %v1798, %v1872
      %v1877 = vsel %vm344, %v1571, 0
      %1879 = vmatprep.subr.mxu0 0.0
      %1880 = vmatpush1.msra.mxu0 0.0
      %1881 = vmatprep.subr.mxu0 0.0
      %1882 = vmatpush1.msra.mxu0 0.0
      %1883 = vmatprep.subr.mxu0 0.0
      %1884 = vmatpush1.msra.mxu0 0.0
      %1885 = vmatprep.subr.mxu0 0.0
      %1886 = vmatpush1.msra.mxu0 0.0
      %1887 = vmatprep.subr.mxu0 0.0
      %1888 = vmatpush1.msra.mxu0 0.0
      %1889 = vmatprep.subr.mxu0 0.0
      %1890 = vmatpush1.msra.mxu0 0.0
      %1891 = vmatprep.subr.mxu0 0.0
      %1892 = vmatpush1.msra.mxu0 0.0
      %1893 = vmatprep.subr.mxu0 0.0
      %1894 = vmatpush1.msra.mxu0 0.0
      %1895 = vmatprep.subr.mxu0 0.0
      %1896 = vmatpush1.msra.mxu0 0.0
      %1897 = vmatprep.subr.mxu0 0.0
      %1898 = vmatpush1.msra.mxu0 0.0
      %1899 = vmatprep.subr.mxu0 0.0
      %1900 = vmatpush1.msra.mxu0 0.0
      %1901 = vmatprep.subr.mxu0 0.0
      %1902 = vmatpush1.msra.mxu0 0.0
      %1903 = vmatprep.subr.mxu0 0.0
      %1904 = vmatpush1.msra.mxu0 0.0
      %1905 = vmatprep.subr.mxu0 0.0
      %1906 = vmatpush1.msra.mxu0 0.0
      %1907 = vmatprep.subr.mxu0 0.0
      %1908 = vmatpush1.msra.mxu0 0.0
      %1909 = vmatprep.subr.mxu0 0.0
      %1910 = vmatpush1.msra.mxu0 %v322
      %1911 = vmatprep.subr.mxu0 0.0
      %1912 = vmatpush2.msra.mxu0 0.0
      %1913 = vmatprep.subr.mxu0 0.0
      %1914 = vmatpush2.msra.mxu0 0.0
      %1915 = vmatprep.subr.mxu0 0.0
      %1916 = vmatpush2.msra.mxu0 0.0
      %1917 = vmatprep.subr.mxu0 0.0
      %1918 = vmatpush2.msra.mxu0 0.0
      %1919 = vmatprep.subr.mxu0 0.0
      %1920 = vmatpush2.msra.mxu0 0.0
      %1921 = vmatprep.subr.mxu0 0.0
      %1922 = vmatpush2.msra.mxu0 0.0
      %1923 = vmatprep.subr.mxu0 0.0
      %1924 = vmatpush2.msra.mxu0 0.0
      %1925 = vmatprep.subr.mxu0 0.0
      %1926 = vmatpush2.msra.mxu0 0.0
      %1927 = vmatprep.subr.mxu0 0.0
      %1928 = vmatpush2.msra.mxu0 0.0
      %1929 = vmatprep.subr.mxu0 0.0
      %1930 = vmatpush2.msra.mxu0 0.0
      %1931 = vmatprep.subr.mxu0 0.0
      %1932 = vmatpush2.msra.mxu0 0.0
      %1933 = vmatprep.subr.mxu0 0.0
      %1934 = vmatpush2.msra.mxu0 0.0
      %1935 = vmatprep.subr.mxu0 0.0
      %1936 = vmatpush2.msra.mxu0 0.0
      %1937 = vmatprep.subr.mxu0 0.0
      %1938 = vmatpush2.msra.mxu0 0.0
      %1939 = vmatprep.subr.mxu0 0.0
      %1940 = vmatpush2.msra.mxu0 0.0
      %1941 = vmatprep.subr.mxu0 0.0
      %1942 = vmatpush2.msra.mxu0 0.0
      %1943 = vmatprep.mubr.f32.mxu0 0.0
      %1944 = vmatmul.mubr.f32.gmra.mxu0 %v1877
      %v1945 = vpop.f32.mrf.mxu0
      %v1946 = vadd.f32 0.0, %v1945
      %v1947 = vpop.f32.mrf.mxu0
      %1948 = vdwg.mxu0
      %v1949 = vadd.f32 %v1875, %v1946
      %v1951 = vrot.slane %v1571, 1
      %v1952 = vrot.slane %v1572, 1
      %v1953 = vsel %vm340, %v1951, %v1952
      %v1954 = vsel %vm344, %v1953, 0
      %1956 = vmatprep.subr.mxu0 0.0
      %1957 = vmatpush1.msra.mxu0 0.0
      %1958 = vmatprep.subr.mxu0 0.0
      %1959 = vmatpush1.msra.mxu0 0.0
      %1960 = vmatprep.subr.mxu0 0.0
      %1961 = vmatpush1.msra.mxu0 0.0
      %1962 = vmatprep.subr.mxu0 0.0
      %1963 = vmatpush1.msra.mxu0 0.0
      %1964 = vmatprep.subr.mxu0 0.0
      %1965 = vmatpush1.msra.mxu0 0.0
      %1966 = vmatprep.subr.mxu0 0.0
      %1967 = vmatpush1.msra.mxu0 0.0
      %1968 = vmatprep.subr.mxu0 0.0
      %1969 = vmatpush1.msra.mxu0 0.0
      %1970 = vmatprep.subr.mxu0 0.0
      %1971 = vmatpush1.msra.mxu0 0.0
      %1972 = vmatprep.subr.mxu0 0.0
      %1973 = vmatpush1.msra.mxu0 0.0
      %1974 = vmatprep.subr.mxu0 0.0
      %1975 = vmatpush1.msra.mxu0 0.0
      %1976 = vmatprep.subr.mxu0 0.0
      %1977 = vmatpush1.msra.mxu0 0.0
      %1978 = vmatprep.subr.mxu0 0.0
      %1979 = vmatpush1.msra.mxu0 0.0
      %1980 = vmatprep.subr.mxu0 0.0
      %1981 = vmatpush1.msra.mxu0 0.0
      %1982 = vmatprep.subr.mxu0 0.0
      %1983 = vmatpush1.msra.mxu0 0.0
      %1984 = vmatprep.subr.mxu0 0.0
      %1985 = vmatpush1.msra.mxu0 0.0
      %1986 = vmatprep.subr.mxu0 0.0
      %1987 = vmatpush1.msra.mxu0 %v323
      %1988 = vmatprep.subr.mxu0 0.0
      %1989 = vmatpush2.msra.mxu0 0.0
      %1990 = vmatprep.subr.mxu0 0.0
      %1991 = vmatpush2.msra.mxu0 0.0
      %1992 = vmatprep.subr.mxu0 0.0
      %1993 = vmatpush2.msra.mxu0 0.0
      %1994 = vmatprep.subr.mxu0 0.0
      %1995 = vmatpush2.msra.mxu0 0.0
      %1996 = vmatprep.subr.mxu0 0.0
      %1997 = vmatpush2.msra.mxu0 0.0
      %1998 = vmatprep.subr.mxu0 0.0
      %1999 = vmatpush2.msra.mxu0 0.0
      %2000 = vmatprep.subr.mxu0 0.0
      %2001 = vmatpush2.msra.mxu0 0.0
      %2002 = vmatprep.subr.mxu0 0.0
      %2003 = vmatpush2.msra.mxu0 0.0
      %2004 = vmatprep.subr.mxu0 0.0
      %2005 = vmatpush2.msra.mxu0 0.0
      %2006 = vmatprep.subr.mxu0 0.0
      %2007 = vmatpush2.msra.mxu0 0.0
      %2008 = vmatprep.subr.mxu0 0.0
      %2009 = vmatpush2.msra.mxu0 0.0
      %2010 = vmatprep.subr.mxu0 0.0
      %2011 = vmatpush2.msra.mxu0 0.0
      %2012 = vmatprep.subr.mxu0 0.0
      %2013 = vmatpush2.msra.mxu0 0.0
      %2014 = vmatprep.subr.mxu0 0.0
      %2015 = vmatpush2.msra.mxu0 0.0
      %2016 = vmatprep.subr.mxu0 0.0
      %2017 = vmatpush2.msra.mxu0 0.0
      %2018 = vmatprep.subr.mxu0 0.0
      %2019 = vmatpush2.msra.mxu0 0.0
      %2020 = vmatprep.mubr.f32.mxu0 0.0
      %2021 = vmatmul.mubr.f32.gmra.mxu0 %v1954
      %v2022 = vpop.f32.mrf.mxu0
      %v2023 = vadd.f32 0.0, %v2022
      %v2024 = vpop.f32.mrf.mxu0
      %2025 = vdwg.mxu0
      %v2026 = vadd.f32 %v1949, %v2023
      %v2028 = vsel %vm344, %v1574, 0
      %2030 = vmatprep.subr.mxu0 0.0
      %2031 = vmatpush1.msra.mxu0 0.0
      %2032 = vmatprep.subr.mxu0 0.0
      %2033 = vmatpush1.msra.mxu0 0.0
      %2034 = vmatprep.subr.mxu0 0.0
      %2035 = vmatpush1.msra.mxu0 0.0
      %2036 = vmatprep.subr.mxu0 0.0
      %2037 = vmatpush1.msra.mxu0 0.0
      %2038 = vmatprep.subr.mxu0 0.0
      %2039 = vmatpush1.msra.mxu0 0.0
      %2040 = vmatprep.subr.mxu0 0.0
      %2041 = vmatpush1.msra.mxu0 0.0
      %2042 = vmatprep.subr.mxu0 0.0
      %2043 = vmatpush1.msra.mxu0 0.0
      %2044 = vmatprep.subr.mxu0 0.0
      %2045 = vmatpush1.msra.mxu0 0.0
      %2046 = vmatprep.subr.mxu0 0.0
      %2047 = vmatpush1.msra.mxu0 0.0
      %2048 = vmatprep.subr.mxu0 0.0
      %2049 = vmatpush1.msra.mxu0 0.0
      %2050 = vmatprep.subr.mxu0 0.0
      %2051 = vmatpush1.msra.mxu0 0.0
      %2052 = vmatprep.subr.mxu0 0.0
      %2053 = vmatpush1.msra.mxu0 0.0
      %2054 = vmatprep.subr.mxu0 0.0
      %2055 = vmatpush1.msra.mxu0 0.0
      %2056 = vmatprep.subr.mxu0 0.0
      %2057 = vmatpush1.msra.mxu0 0.0
      %2058 = vmatprep.subr.mxu0 0.0
      %2059 = vmatpush1.msra.mxu0 0.0
      %2060 = vmatprep.subr.mxu0 0.0
      %2061 = vmatpush1.msra.mxu0 %v324
      %2062 = vmatprep.subr.mxu0 0.0
      %2063 = vmatpush2.msra.mxu0 0.0
      %2064 = vmatprep.subr.mxu0 0.0
      %2065 = vmatpush2.msra.mxu0 0.0
      %2066 = vmatprep.subr.mxu0 0.0
      %2067 = vmatpush2.msra.mxu0 0.0
      %2068 = vmatprep.subr.mxu0 0.0
      %2069 = vmatpush2.msra.mxu0 0.0
      %2070 = vmatprep.subr.mxu0 0.0
      %2071 = vmatpush2.msra.mxu0 0.0
      %2072 = vmatprep.subr.mxu0 0.0
      %2073 = vmatpush2.msra.mxu0 0.0
      %2074 = vmatprep.subr.mxu0 0.0
      %2075 = vmatpush2.msra.mxu0 0.0
      %2076 = vmatprep.subr.mxu0 0.0
      %2077 = vmatpush2.msra.mxu0 0.0
      %2078 = vmatprep.subr.mxu0 0.0
      %2079 = vmatpush2.msra.mxu0 0.0
      %2080 = vmatprep.subr.mxu0 0.0
      %2081 = vmatpush2.msra.mxu0 0.0
      %2082 = vmatprep.subr.mxu0 0.0
      %2083 = vmatpush2.msra.mxu0 0.0
      %2084 = vmatprep.subr.mxu0 0.0
      %2085 = vmatpush2.msra.mxu0 0.0
      %2086 = vmatprep.subr.mxu0 0.0
      %2087 = vmatpush2.msra.mxu0 0.0
      %2088 = vmatprep.subr.mxu0 0.0
      %2089 = vmatpush2.msra.mxu0 0.0
      %2090 = vmatprep.subr.mxu0 0.0
      %2091 = vmatpush2.msra.mxu0 0.0
      %2092 = vmatprep.subr.mxu0 0.0
      %2093 = vmatpush2.msra.mxu0 0.0
      %2094 = vmatprep.mubr.f32.mxu0 0.0
      %2095 = vmatmul.mubr.f32.gmra.mxu0 %v2028
      %v2096 = vpop.f32.mrf.mxu0
      %v2097 = vadd.f32 0.0, %v2096
      %v2098 = vpop.f32.mrf.mxu0
      %2099 = vdwg.mxu0
      %v2100 = vadd.f32 %v2026, %v2097
      %v2102 = vrot.slane %v1574, 1
      %v2103 = vrot.slane %v1575, 1
      %v2104 = vsel %vm340, %v2102, %v2103
      %v2105 = vsel %vm344, %v2104, 0
      %2107 = vmatprep.subr.mxu0 0.0
      %2108 = vmatpush1.msra.mxu0 0.0
      %2109 = vmatprep.subr.mxu0 0.0
      %2110 = vmatpush1.msra.mxu0 0.0
      %2111 = vmatprep.subr.mxu0 0.0
      %2112 = vmatpush1.msra.mxu0 0.0
      %2113 = vmatprep.subr.mxu0 0.0
      %2114 = vmatpush1.msra.mxu0 0.0
      %2115 = vmatprep.subr.mxu0 0.0
      %2116 = vmatpush1.msra.mxu0 0.0
      %2117 = vmatprep.subr.mxu0 0.0
      %2118 = vmatpush1.msra.mxu0 0.0
      %2119 = vmatprep.subr.mxu0 0.0
      %2120 = vmatpush1.msra.mxu0 0.0
      %2121 = vmatprep.subr.mxu0 0.0
      %2122 = vmatpush1.msra.mxu0 0.0
      %2123 = vmatprep.subr.mxu0 0.0
      %2124 = vmatpush1.msra.mxu0 0.0
      %2125 = vmatprep.subr.mxu0 0.0
      %2126 = vmatpush1.msra.mxu0 0.0
      %2127 = vmatprep.subr.mxu0 0.0
      %2128 = vmatpush1.msra.mxu0 0.0
      %2129 = vmatprep.subr.mxu0 0.0
      %2130 = vmatpush1.msra.mxu0 0.0
      %2131 = vmatprep.subr.mxu0 0.0
      %2132 = vmatpush1.msra.mxu0 0.0
      %2133 = vmatprep.subr.mxu0 0.0
      %2134 = vmatpush1.msra.mxu0 0.0
      %2135 = vmatprep.subr.mxu0 0.0
      %2136 = vmatpush1.msra.mxu0 0.0
      %2137 = vmatprep.subr.mxu0 0.0
      %2138 = vmatpush1.msra.mxu0 %v325
      %2139 = vmatprep.subr.mxu0 0.0
      %2140 = vmatpush2.msra.mxu0 0.0
      %2141 = vmatprep.subr.mxu0 0.0
      %2142 = vmatpush2.msra.mxu0 0.0
      %2143 = vmatprep.subr.mxu0 0.0
      %2144 = vmatpush2.msra.mxu0 0.0
      %2145 = vmatprep.subr.mxu0 0.0
      %2146 = vmatpush2.msra.mxu0 0.0
      %2147 = vmatprep.subr.mxu0 0.0
      %2148 = vmatpush2.msra.mxu0 0.0
      %2149 = vmatprep.subr.mxu0 0.0
      %2150 = vmatpush2.msra.mxu0 0.0
      %2151 = vmatprep.subr.mxu0 0.0
      %2152 = vmatpush2.msra.mxu0 0.0
      %2153 = vmatprep.subr.mxu0 0.0
      %2154 = vmatpush2.msra.mxu0 0.0
      %2155 = vmatprep.subr.mxu0 0.0
      %2156 = vmatpush2.msra.mxu0 0.0
      %2157 = vmatprep.subr.mxu0 0.0
      %2158 = vmatpush2.msra.mxu0 0.0
      %2159 = vmatprep.subr.mxu0 0.0
      %2160 = vmatpush2.msra.mxu0 0.0
      %2161 = vmatprep.subr.mxu0 0.0
      %2162 = vmatpush2.msra.mxu0 0.0
      %2163 = vmatprep.subr.mxu0 0.0
      %2164 = vmatpush2.msra.mxu0 0.0
      %2165 = vmatprep.subr.mxu0 0.0
      %2166 = vmatpush2.msra.mxu0 0.0
      %2167 = vmatprep.subr.mxu0 0.0
      %2168 = vmatpush2.msra.mxu0 0.0
      %2169 = vmatprep.subr.mxu0 0.0
      %2170 = vmatpush2.msra.mxu0 0.0
      %2171 = vmatprep.mubr.f32.mxu0 0.0
      %2172 = vmatmul.mubr.f32.gmra.mxu0 %v2105
      %v2173 = vpop.f32.mrf.mxu0
      %v2174 = vadd.f32 0.0, %v2173
      %v2175 = vpop.f32.mrf.mxu0
      %2176 = vdwg.mxu0
      %v2177 = vadd.f32 %v2100, %v2174
      %v2178 = vadd.f32 %v2177, %v946
      %s2179 = scalar_lea.vmem %s316, 16
      %2180 = vst.msk [vmem:[%s2179] sm:$0xff] %vm949, %v2178
      %v2181 = vld [vmem:[%s1570] sm:$0xff]
      %v2182 = vld [vmem:[%s1570 + $0x8] sm:$0x1]
      %v2183 = vld [vmem:[%s1573] sm:$0xff]
      %v2184 = vld [vmem:[%s1573 + $0x8] sm:$0x1]
      %v2185 = vld [vmem:[%s304] sm:$0xff]
      %v2186 = vld [vmem:[%s304 + $0x8] sm:$0x1]
      %s2187 = scalar_lea.vmem %s304, 16
      %v2188 = vld [vmem:[%s2187] sm:$0xff]
      %v2189 = vld [vmem:[%s2187 + $0x8] sm:$0x1]
      %v2192 = vrot.slane %v2181, 1
      %v2193 = vrot.slane %v2182, 1
      %v2194 = vsel %vm340, %v2192, %v2193
      %v2195 = vsel %vm344, %v2194, 0
      %2197 = vmatprep.subr.mxu0 0.0
      %2198 = vmatpush1.msra.mxu0 0.0
      %2199 = vmatprep.subr.mxu0 0.0
      %2200 = vmatpush1.msra.mxu0 0.0
      %2201 = vmatprep.subr.mxu0 0.0
      %2202 = vmatpush1.msra.mxu0 0.0
      %2203 = vmatprep.subr.mxu0 0.0
      %2204 = vmatpush1.msra.mxu0 0.0
      %2205 = vmatprep.subr.mxu0 0.0
      %2206 = vmatpush1.msra.mxu0 0.0
      %2207 = vmatprep.subr.mxu0 0.0
      %2208 = vmatpush1.msra.mxu0 0.0
      %2209 = vmatprep.subr.mxu0 0.0
      %2210 = vmatpush1.msra.mxu0 0.0
      %2211 = vmatprep.subr.mxu0 0.0
      %2212 = vmatpush1.msra.mxu0 0.0
      %2213 = vmatprep.subr.mxu0 0.0
      %2214 = vmatpush1.msra.mxu0 0.0
      %2215 = vmatprep.subr.mxu0 0.0
      %2216 = vmatpush1.msra.mxu0 0.0
      %2217 = vmatprep.subr.mxu0 0.0
      %2218 = vmatpush1.msra.mxu0 0.0
      %2219 = vmatprep.subr.mxu0 0.0
      %2220 = vmatpush1.msra.mxu0 0.0
      %2221 = vmatprep.subr.mxu0 0.0
      %2222 = vmatpush1.msra.mxu0 0.0
      %2223 = vmatprep.subr.mxu0 0.0
      %2224 = vmatpush1.msra.mxu0 0.0
      %2225 = vmatprep.subr.mxu0 0.0
      %2226 = vmatpush1.msra.mxu0 0.0
      %2227 = vmatprep.subr.mxu0 0.0
      %2228 = vmatpush1.msra.mxu0 %v319
      %2229 = vmatprep.subr.mxu0 0.0
      %2230 = vmatpush2.msra.mxu0 0.0
      %2231 = vmatprep.subr.mxu0 0.0
      %2232 = vmatpush2.msra.mxu0 0.0
      %2233 = vmatprep.subr.mxu0 0.0
      %2234 = vmatpush2.msra.mxu0 0.0
      %2235 = vmatprep.subr.mxu0 0.0
      %2236 = vmatpush2.msra.mxu0 0.0
      %2237 = vmatprep.subr.mxu0 0.0
      %2238 = vmatpush2.msra.mxu0 0.0
      %2239 = vmatprep.subr.mxu0 0.0
      %2240 = vmatpush2.msra.mxu0 0.0
      %2241 = vmatprep.subr.mxu0 0.0
      %2242 = vmatpush2.msra.mxu0 0.0
      %2243 = vmatprep.subr.mxu0 0.0
      %2244 = vmatpush2.msra.mxu0 0.0
      %2245 = vmatprep.subr.mxu0 0.0
      %2246 = vmatpush2.msra.mxu0 0.0
      %2247 = vmatprep.subr.mxu0 0.0
      %2248 = vmatpush2.msra.mxu0 0.0
      %2249 = vmatprep.subr.mxu0 0.0
      %2250 = vmatpush2.msra.mxu0 0.0
      %2251 = vmatprep.subr.mxu0 0.0
      %2252 = vmatpush2.msra.mxu0 0.0
      %2253 = vmatprep.subr.mxu0 0.0
      %2254 = vmatpush2.msra.mxu0 0.0
      %2255 = vmatprep.subr.mxu0 0.0
      %2256 = vmatpush2.msra.mxu0 0.0
      %2257 = vmatprep.subr.mxu0 0.0
      %2258 = vmatpush2.msra.mxu0 0.0
      %2259 = vmatprep.subr.mxu0 0.0
      %2260 = vmatpush2.msra.mxu0 0.0
      %2261 = vmatprep.mubr.f32.mxu0 0.0
      %2262 = vmatmul.mubr.f32.gmra.mxu0 %v2195
      %v2263 = vpop.f32.mrf.mxu0
      %v2264 = vadd.f32 0.0, %v2263
      %v2265 = vpop.f32.mrf.mxu0
      %2266 = vdwg.mxu0
      %v2267 = vsel %vm344, %v2181, 0
      %2269 = vmatprep.subr.mxu0 0.0
      %2270 = vmatpush1.msra.mxu0 0.0
      %2271 = vmatprep.subr.mxu0 0.0
      %2272 = vmatpush1.msra.mxu0 0.0
      %2273 = vmatprep.subr.mxu0 0.0
      %2274 = vmatpush1.msra.mxu0 0.0
      %2275 = vmatprep.subr.mxu0 0.0
      %2276 = vmatpush1.msra.mxu0 0.0
      %2277 = vmatprep.subr.mxu0 0.0
      %2278 = vmatpush1.msra.mxu0 0.0
      %2279 = vmatprep.subr.mxu0 0.0
      %2280 = vmatpush1.msra.mxu0 0.0
      %2281 = vmatprep.subr.mxu0 0.0
      %2282 = vmatpush1.msra.mxu0 0.0
      %2283 = vmatprep.subr.mxu0 0.0
      %2284 = vmatpush1.msra.mxu0 0.0
      %2285 = vmatprep.subr.mxu0 0.0
      %2286 = vmatpush1.msra.mxu0 0.0
      %2287 = vmatprep.subr.mxu0 0.0
      %2288 = vmatpush1.msra.mxu0 0.0
      %2289 = vmatprep.subr.mxu0 0.0
      %2290 = vmatpush1.msra.mxu0 0.0
      %2291 = vmatprep.subr.mxu0 0.0
      %2292 = vmatpush1.msra.mxu0 0.0
      %2293 = vmatprep.subr.mxu0 0.0
      %2294 = vmatpush1.msra.mxu0 0.0
      %2295 = vmatprep.subr.mxu0 0.0
      %2296 = vmatpush1.msra.mxu0 0.0
      %2297 = vmatprep.subr.mxu0 0.0
      %2298 = vmatpush1.msra.mxu0 0.0
      %2299 = vmatprep.subr.mxu0 0.0
      %2300 = vmatpush1.msra.mxu0 %v318
      %2301 = vmatprep.subr.mxu0 0.0
      %2302 = vmatpush2.msra.mxu0 0.0
      %2303 = vmatprep.subr.mxu0 0.0
      %2304 = vmatpush2.msra.mxu0 0.0
      %2305 = vmatprep.subr.mxu0 0.0
      %2306 = vmatpush2.msra.mxu0 0.0
      %2307 = vmatprep.subr.mxu0 0.0
      %2308 = vmatpush2.msra.mxu0 0.0
      %2309 = vmatprep.subr.mxu0 0.0
      %2310 = vmatpush2.msra.mxu0 0.0
      %2311 = vmatprep.subr.mxu0 0.0
      %2312 = vmatpush2.msra.mxu0 0.0
      %2313 = vmatprep.subr.mxu0 0.0
      %2314 = vmatpush2.msra.mxu0 0.0
      %2315 = vmatprep.subr.mxu0 0.0
      %2316 = vmatpush2.msra.mxu0 0.0
      %2317 = vmatprep.subr.mxu0 0.0
      %2318 = vmatpush2.msra.mxu0 0.0
      %2319 = vmatprep.subr.mxu0 0.0
      %2320 = vmatpush2.msra.mxu0 0.0
      %2321 = vmatprep.subr.mxu0 0.0
      %2322 = vmatpush2.msra.mxu0 0.0
      %2323 = vmatprep.subr.mxu0 0.0
      %2324 = vmatpush2.msra.mxu0 0.0
      %2325 = vmatprep.subr.mxu0 0.0
      %2326 = vmatpush2.msra.mxu0 0.0
      %2327 = vmatprep.subr.mxu0 0.0
      %2328 = vmatpush2.msra.mxu0 0.0
      %2329 = vmatprep.subr.mxu0 0.0
      %2330 = vmatpush2.msra.mxu0 0.0
      %2331 = vmatprep.subr.mxu0 0.0
      %2332 = vmatpush2.msra.mxu0 0.0
      %2333 = vmatprep.mubr.f32.mxu0 0.0
      %2334 = vmatmul.mubr.f32.gmra.mxu0 %v2267
      %v2335 = vpop.f32.mrf.mxu0
      %v2336 = vadd.f32 %v2264, %v2335
      %v2337 = vpop.f32.mrf.mxu0
      %2338 = vdwg.mxu0
      %v2340 = vsel %vm344, %v2183, 0
      %2342 = vmatprep.subr.mxu0 0.0
      %2343 = vmatpush1.msra.mxu0 0.0
      %2344 = vmatprep.subr.mxu0 0.0
      %2345 = vmatpush1.msra.mxu0 0.0
      %2346 = vmatprep.subr.mxu0 0.0
      %2347 = vmatpush1.msra.mxu0 0.0
      %2348 = vmatprep.subr.mxu0 0.0
      %2349 = vmatpush1.msra.mxu0 0.0
      %2350 = vmatprep.subr.mxu0 0.0
      %2351 = vmatpush1.msra.mxu0 0.0
      %2352 = vmatprep.subr.mxu0 0.0
      %2353 = vmatpush1.msra.mxu0 0.0
      %2354 = vmatprep.subr.mxu0 0.0
      %2355 = vmatpush1.msra.mxu0 0.0
      %2356 = vmatprep.subr.mxu0 0.0
      %2357 = vmatpush1.msra.mxu0 0.0
      %2358 = vmatprep.subr.mxu0 0.0
      %2359 = vmatpush1.msra.mxu0 0.0
      %2360 = vmatprep.subr.mxu0 0.0
      %2361 = vmatpush1.msra.mxu0 0.0
      %2362 = vmatprep.subr.mxu0 0.0
      %2363 = vmatpush1.msra.mxu0 0.0
      %2364 = vmatprep.subr.mxu0 0.0
      %2365 = vmatpush1.msra.mxu0 0.0
      %2366 = vmatprep.subr.mxu0 0.0
      %2367 = vmatpush1.msra.mxu0 0.0
      %2368 = vmatprep.subr.mxu0 0.0
      %2369 = vmatpush1.msra.mxu0 0.0
      %2370 = vmatprep.subr.mxu0 0.0
      %2371 = vmatpush1.msra.mxu0 0.0
      %2372 = vmatprep.subr.mxu0 0.0
      %2373 = vmatpush1.msra.mxu0 %v320
      %2374 = vmatprep.subr.mxu0 0.0
      %2375 = vmatpush2.msra.mxu0 0.0
      %2376 = vmatprep.subr.mxu0 0.0
      %2377 = vmatpush2.msra.mxu0 0.0
      %2378 = vmatprep.subr.mxu0 0.0
      %2379 = vmatpush2.msra.mxu0 0.0
      %2380 = vmatprep.subr.mxu0 0.0
      %2381 = vmatpush2.msra.mxu0 0.0
      %2382 = vmatprep.subr.mxu0 0.0
      %2383 = vmatpush2.msra.mxu0 0.0
      %2384 = vmatprep.subr.mxu0 0.0
      %2385 = vmatpush2.msra.mxu0 0.0
      %2386 = vmatprep.subr.mxu0 0.0
      %2387 = vmatpush2.msra.mxu0 0.0
      %2388 = vmatprep.subr.mxu0 0.0
      %2389 = vmatpush2.msra.mxu0 0.0
      %2390 = vmatprep.subr.mxu0 0.0
      %2391 = vmatpush2.msra.mxu0 0.0
      %2392 = vmatprep.subr.mxu0 0.0
      %2393 = vmatpush2.msra.mxu0 0.0
      %2394 = vmatprep.subr.mxu0 0.0
      %2395 = vmatpush2.msra.mxu0 0.0
      %2396 = vmatprep.subr.mxu0 0.0
      %2397 = vmatpush2.msra.mxu0 0.0
      %2398 = vmatprep.subr.mxu0 0.0
      %2399 = vmatpush2.msra.mxu0 0.0
      %2400 = vmatprep.subr.mxu0 0.0
      %2401 = vmatpush2.msra.mxu0 0.0
      %2402 = vmatprep.subr.mxu0 0.0
      %2403 = vmatpush2.msra.mxu0 0.0
      %2404 = vmatprep.subr.mxu0 0.0
      %2405 = vmatpush2.msra.mxu0 0.0
      %2406 = vmatprep.mubr.f32.mxu0 0.0
      %2407 = vmatmul.mubr.f32.gmra.mxu0 %v2340
      %v2408 = vpop.f32.mrf.mxu0
      %v2409 = vadd.f32 0.0, %v2408
      %v2410 = vpop.f32.mrf.mxu0
      %2411 = vdwg.mxu0
      %v2412 = vadd.f32 %v2336, %v2409
      %v2414 = vrot.slane %v2183, 1
      %v2415 = vrot.slane %v2184, 1
      %v2416 = vsel %vm340, %v2414, %v2415
      %v2417 = vsel %vm344, %v2416, 0
      %2419 = vmatprep.subr.mxu0 0.0
      %2420 = vmatpush1.msra.mxu0 0.0
      %2421 = vmatprep.subr.mxu0 0.0
      %2422 = vmatpush1.msra.mxu0 0.0
      %2423 = vmatprep.subr.mxu0 0.0
      %2424 = vmatpush1.msra.mxu0 0.0
      %2425 = vmatprep.subr.mxu0 0.0
      %2426 = vmatpush1.msra.mxu0 0.0
      %2427 = vmatprep.subr.mxu0 0.0
      %2428 = vmatpush1.msra.mxu0 0.0
      %2429 = vmatprep.subr.mxu0 0.0
      %2430 = vmatpush1.msra.mxu0 0.0
      %2431 = vmatprep.subr.mxu0 0.0
      %2432 = vmatpush1.msra.mxu0 0.0
      %2433 = vmatprep.subr.mxu0 0.0
      %2434 = vmatpush1.msra.mxu0 0.0
      %2435 = vmatprep.subr.mxu0 0.0
      %2436 = vmatpush1.msra.mxu0 0.0
      %2437 = vmatprep.subr.mxu0 0.0
      %2438 = vmatpush1.msra.mxu0 0.0
      %2439 = vmatprep.subr.mxu0 0.0
      %2440 = vmatpush1.msra.mxu0 0.0
      %2441 = vmatprep.subr.mxu0 0.0
      %2442 = vmatpush1.msra.mxu0 0.0
      %2443 = vmatprep.subr.mxu0 0.0
      %2444 = vmatpush1.msra.mxu0 0.0
      %2445 = vmatprep.subr.mxu0 0.0
      %2446 = vmatpush1.msra.mxu0 0.0
      %2447 = vmatprep.subr.mxu0 0.0
      %2448 = vmatpush1.msra.mxu0 0.0
      %2449 = vmatprep.subr.mxu0 0.0
      %2450 = vmatpush1.msra.mxu0 %v321
      %2451 = vmatprep.subr.mxu0 0.0
      %2452 = vmatpush2.msra.mxu0 0.0
      %2453 = vmatprep.subr.mxu0 0.0
      %2454 = vmatpush2.msra.mxu0 0.0
      %2455 = vmatprep.subr.mxu0 0.0
      %2456 = vmatpush2.msra.mxu0 0.0
      %2457 = vmatprep.subr.mxu0 0.0
      %2458 = vmatpush2.msra.mxu0 0.0
      %2459 = vmatprep.subr.mxu0 0.0
      %2460 = vmatpush2.msra.mxu0 0.0
      %2461 = vmatprep.subr.mxu0 0.0
      %2462 = vmatpush2.msra.mxu0 0.0
      %2463 = vmatprep.subr.mxu0 0.0
      %2464 = vmatpush2.msra.mxu0 0.0
      %2465 = vmatprep.subr.mxu0 0.0
      %2466 = vmatpush2.msra.mxu0 0.0
      %2467 = vmatprep.subr.mxu0 0.0
      %2468 = vmatpush2.msra.mxu0 0.0
      %2469 = vmatprep.subr.mxu0 0.0
      %2470 = vmatpush2.msra.mxu0 0.0
      %2471 = vmatprep.subr.mxu0 0.0
      %2472 = vmatpush2.msra.mxu0 0.0
      %2473 = vmatprep.subr.mxu0 0.0
      %2474 = vmatpush2.msra.mxu0 0.0
      %2475 = vmatprep.subr.mxu0 0.0
      %2476 = vmatpush2.msra.mxu0 0.0
      %2477 = vmatprep.subr.mxu0 0.0
      %2478 = vmatpush2.msra.mxu0 0.0
      %2479 = vmatprep.subr.mxu0 0.0
      %2480 = vmatpush2.msra.mxu0 0.0
      %2481 = vmatprep.subr.mxu0 0.0
      %2482 = vmatpush2.msra.mxu0 0.0
      %2483 = vmatprep.mubr.f32.mxu0 0.0
      %2484 = vmatmul.mubr.f32.gmra.mxu0 %v2417
      %v2485 = vpop.f32.mrf.mxu0
      %v2486 = vadd.f32 0.0, %v2485
      %v2487 = vpop.f32.mrf.mxu0
      %2488 = vdwg.mxu0
      %v2489 = vadd.f32 %v2412, %v2486
      %v2491 = vsel %vm344, %v2185, 0
      %2493 = vmatprep.subr.mxu0 0.0
      %2494 = vmatpush1.msra.mxu0 0.0
      %2495 = vmatprep.subr.mxu0 0.0
      %2496 = vmatpush1.msra.mxu0 0.0
      %2497 = vmatprep.subr.mxu0 0.0
      %2498 = vmatpush1.msra.mxu0 0.0
      %2499 = vmatprep.subr.mxu0 0.0
      %2500 = vmatpush1.msra.mxu0 0.0
      %2501 = vmatprep.subr.mxu0 0.0
      %2502 = vmatpush1.msra.mxu0 0.0
      %2503 = vmatprep.subr.mxu0 0.0
      %2504 = vmatpush1.msra.mxu0 0.0
      %2505 = vmatprep.subr.mxu0 0.0
      %2506 = vmatpush1.msra.mxu0 0.0
      %2507 = vmatprep.subr.mxu0 0.0
      %2508 = vmatpush1.msra.mxu0 0.0
      %2509 = vmatprep.subr.mxu0 0.0
      %2510 = vmatpush1.msra.mxu0 0.0
      %2511 = vmatprep.subr.mxu0 0.0
      %2512 = vmatpush1.msra.mxu0 0.0
      %2513 = vmatprep.subr.mxu0 0.0
      %2514 = vmatpush1.msra.mxu0 0.0
      %2515 = vmatprep.subr.mxu0 0.0
      %2516 = vmatpush1.msra.mxu0 0.0
      %2517 = vmatprep.subr.mxu0 0.0
      %2518 = vmatpush1.msra.mxu0 0.0
      %2519 = vmatprep.subr.mxu0 0.0
      %2520 = vmatpush1.msra.mxu0 0.0
      %2521 = vmatprep.subr.mxu0 0.0
      %2522 = vmatpush1.msra.mxu0 0.0
      %2523 = vmatprep.subr.mxu0 0.0
      %2524 = vmatpush1.msra.mxu0 %v322
      %2525 = vmatprep.subr.mxu0 0.0
      %2526 = vmatpush2.msra.mxu0 0.0
      %2527 = vmatprep.subr.mxu0 0.0
      %2528 = vmatpush2.msra.mxu0 0.0
      %2529 = vmatprep.subr.mxu0 0.0
      %2530 = vmatpush2.msra.mxu0 0.0
      %2531 = vmatprep.subr.mxu0 0.0
      %2532 = vmatpush2.msra.mxu0 0.0
      %2533 = vmatprep.subr.mxu0 0.0
      %2534 = vmatpush2.msra.mxu0 0.0
      %2535 = vmatprep.subr.mxu0 0.0
      %2536 = vmatpush2.msra.mxu0 0.0
      %2537 = vmatprep.subr.mxu0 0.0
      %2538 = vmatpush2.msra.mxu0 0.0
      %2539 = vmatprep.subr.mxu0 0.0
      %2540 = vmatpush2.msra.mxu0 0.0
      %2541 = vmatprep.subr.mxu0 0.0
      %2542 = vmatpush2.msra.mxu0 0.0
      %2543 = vmatprep.subr.mxu0 0.0
      %2544 = vmatpush2.msra.mxu0 0.0
      %2545 = vmatprep.subr.mxu0 0.0
      %2546 = vmatpush2.msra.mxu0 0.0
      %2547 = vmatprep.subr.mxu0 0.0
      %2548 = vmatpush2.msra.mxu0 0.0
      %2549 = vmatprep.subr.mxu0 0.0
      %2550 = vmatpush2.msra.mxu0 0.0
      %2551 = vmatprep.subr.mxu0 0.0
      %2552 = vmatpush2.msra.mxu0 0.0
      %2553 = vmatprep.subr.mxu0 0.0
      %2554 = vmatpush2.msra.mxu0 0.0
      %2555 = vmatprep.subr.mxu0 0.0
      %2556 = vmatpush2.msra.mxu0 0.0
      %2557 = vmatprep.mubr.f32.mxu0 0.0
      %2558 = vmatmul.mubr.f32.gmra.mxu0 %v2491
      %v2559 = vpop.f32.mrf.mxu0
      %v2560 = vadd.f32 0.0, %v2559
      %v2561 = vpop.f32.mrf.mxu0
      %2562 = vdwg.mxu0
      %v2563 = vadd.f32 %v2489, %v2560
      %v2565 = vrot.slane %v2185, 1
      %v2566 = vrot.slane %v2186, 1
      %v2567 = vsel %vm340, %v2565, %v2566
      %v2568 = vsel %vm344, %v2567, 0
      %2570 = vmatprep.subr.mxu0 0.0
      %2571 = vmatpush1.msra.mxu0 0.0
      %2572 = vmatprep.subr.mxu0 0.0
      %2573 = vmatpush1.msra.mxu0 0.0
      %2574 = vmatprep.subr.mxu0 0.0
      %2575 = vmatpush1.msra.mxu0 0.0
      %2576 = vmatprep.subr.mxu0 0.0
      %2577 = vmatpush1.msra.mxu0 0.0
      %2578 = vmatprep.subr.mxu0 0.0
      %2579 = vmatpush1.msra.mxu0 0.0
      %2580 = vmatprep.subr.mxu0 0.0
      %2581 = vmatpush1.msra.mxu0 0.0
      %2582 = vmatprep.subr.mxu0 0.0
      %2583 = vmatpush1.msra.mxu0 0.0
      %2584 = vmatprep.subr.mxu0 0.0
      %2585 = vmatpush1.msra.mxu0 0.0
      %2586 = vmatprep.subr.mxu0 0.0
      %2587 = vmatpush1.msra.mxu0 0.0
      %2588 = vmatprep.subr.mxu0 0.0
      %2589 = vmatpush1.msra.mxu0 0.0
      %2590 = vmatprep.subr.mxu0 0.0
      %2591 = vmatpush1.msra.mxu0 0.0
      %2592 = vmatprep.subr.mxu0 0.0
      %2593 = vmatpush1.msra.mxu0 0.0
      %2594 = vmatprep.subr.mxu0 0.0
      %2595 = vmatpush1.msra.mxu0 0.0
      %2596 = vmatprep.subr.mxu0 0.0
      %2597 = vmatpush1.msra.mxu0 0.0
      %2598 = vmatprep.subr.mxu0 0.0
      %2599 = vmatpush1.msra.mxu0 0.0
      %2600 = vmatprep.subr.mxu0 0.0
      %2601 = vmatpush1.msra.mxu0 %v323
      %2602 = vmatprep.subr.mxu0 0.0
      %2603 = vmatpush2.msra.mxu0 0.0
      %2604 = vmatprep.subr.mxu0 0.0
      %2605 = vmatpush2.msra.mxu0 0.0
      %2606 = vmatprep.subr.mxu0 0.0
      %2607 = vmatpush2.msra.mxu0 0.0
      %2608 = vmatprep.subr.mxu0 0.0
      %2609 = vmatpush2.msra.mxu0 0.0
      %2610 = vmatprep.subr.mxu0 0.0
      %2611 = vmatpush2.msra.mxu0 0.0
      %2612 = vmatprep.subr.mxu0 0.0
      %2613 = vmatpush2.msra.mxu0 0.0
      %2614 = vmatprep.subr.mxu0 0.0
      %2615 = vmatpush2.msra.mxu0 0.0
      %2616 = vmatprep.subr.mxu0 0.0
      %2617 = vmatpush2.msra.mxu0 0.0
      %2618 = vmatprep.subr.mxu0 0.0
      %2619 = vmatpush2.msra.mxu0 0.0
      %2620 = vmatprep.subr.mxu0 0.0
      %2621 = vmatpush2.msra.mxu0 0.0
      %2622 = vmatprep.subr.mxu0 0.0
      %2623 = vmatpush2.msra.mxu0 0.0
      %2624 = vmatprep.subr.mxu0 0.0
      %2625 = vmatpush2.msra.mxu0 0.0
      %2626 = vmatprep.subr.mxu0 0.0
      %2627 = vmatpush2.msra.mxu0 0.0
      %2628 = vmatprep.subr.mxu0 0.0
      %2629 = vmatpush2.msra.mxu0 0.0
      %2630 = vmatprep.subr.mxu0 0.0
      %2631 = vmatpush2.msra.mxu0 0.0
      %2632 = vmatprep.subr.mxu0 0.0
      %2633 = vmatpush2.msra.mxu0 0.0
      %2634 = vmatprep.mubr.f32.mxu0 0.0
      %2635 = vmatmul.mubr.f32.gmra.mxu0 %v2568
      %v2636 = vpop.f32.mrf.mxu0
      %v2637 = vadd.f32 0.0, %v2636
      %v2638 = vpop.f32.mrf.mxu0
      %2639 = vdwg.mxu0
      %v2640 = vadd.f32 %v2563, %v2637
      %v2642 = vsel %vm344, %v2188, 0
      %2644 = vmatprep.subr.mxu0 0.0
      %2645 = vmatpush1.msra.mxu0 0.0
      %2646 = vmatprep.subr.mxu0 0.0
      %2647 = vmatpush1.msra.mxu0 0.0
      %2648 = vmatprep.subr.mxu0 0.0
      %2649 = vmatpush1.msra.mxu0 0.0
      %2650 = vmatprep.subr.mxu0 0.0
      %2651 = vmatpush1.msra.mxu0 0.0
      %2652 = vmatprep.subr.mxu0 0.0
      %2653 = vmatpush1.msra.mxu0 0.0
      %2654 = vmatprep.subr.mxu0 0.0
      %2655 = vmatpush1.msra.mxu0 0.0
      %2656 = vmatprep.subr.mxu0 0.0
      %2657 = vmatpush1.msra.mxu0 0.0
      %2658 = vmatprep.subr.mxu0 0.0
      %2659 = vmatpush1.msra.mxu0 0.0
      %2660 = vmatprep.subr.mxu0 0.0
      %2661 = vmatpush1.msra.mxu0 0.0
      %2662 = vmatprep.subr.mxu0 0.0
      %2663 = vmatpush1.msra.mxu0 0.0
      %2664 = vmatprep.subr.mxu0 0.0
      %2665 = vmatpush1.msra.mxu0 0.0
      %2666 = vmatprep.subr.mxu0 0.0
      %2667 = vmatpush1.msra.mxu0 0.0
      %2668 = vmatprep.subr.mxu0 0.0
      %2669 = vmatpush1.msra.mxu0 0.0
      %2670 = vmatprep.subr.mxu0 0.0
      %2671 = vmatpush1.msra.mxu0 0.0
      %2672 = vmatprep.subr.mxu0 0.0
      %2673 = vmatpush1.msra.mxu0 0.0
      %2674 = vmatprep.subr.mxu0 0.0
      %2675 = vmatpush1.msra.mxu0 %v324
      %2676 = vmatprep.subr.mxu0 0.0
      %2677 = vmatpush2.msra.mxu0 0.0
      %2678 = vmatprep.subr.mxu0 0.0
      %2679 = vmatpush2.msra.mxu0 0.0
      %2680 = vmatprep.subr.mxu0 0.0
      %2681 = vmatpush2.msra.mxu0 0.0
      %2682 = vmatprep.subr.mxu0 0.0
      %2683 = vmatpush2.msra.mxu0 0.0
      %2684 = vmatprep.subr.mxu0 0.0
      %2685 = vmatpush2.msra.mxu0 0.0
      %2686 = vmatprep.subr.mxu0 0.0
      %2687 = vmatpush2.msra.mxu0 0.0
      %2688 = vmatprep.subr.mxu0 0.0
      %2689 = vmatpush2.msra.mxu0 0.0
      %2690 = vmatprep.subr.mxu0 0.0
      %2691 = vmatpush2.msra.mxu0 0.0
      %2692 = vmatprep.subr.mxu0 0.0
      %2693 = vmatpush2.msra.mxu0 0.0
      %2694 = vmatprep.subr.mxu0 0.0
      %2695 = vmatpush2.msra.mxu0 0.0
      %2696 = vmatprep.subr.mxu0 0.0
      %2697 = vmatpush2.msra.mxu0 0.0
      %2698 = vmatprep.subr.mxu0 0.0
      %2699 = vmatpush2.msra.mxu0 0.0
      %2700 = vmatprep.subr.mxu0 0.0
      %2701 = vmatpush2.msra.mxu0 0.0
      %2702 = vmatprep.subr.mxu0 0.0
      %2703 = vmatpush2.msra.mxu0 0.0
      %2704 = vmatprep.subr.mxu0 0.0
      %2705 = vmatpush2.msra.mxu0 0.0
      %2706 = vmatprep.subr.mxu0 0.0
      %2707 = vmatpush2.msra.mxu0 0.0
      %2708 = vmatprep.mubr.f32.mxu0 0.0
      %2709 = vmatmul.mubr.f32.gmra.mxu0 %v2642
      %v2710 = vpop.f32.mrf.mxu0
      %v2711 = vadd.f32 0.0, %v2710
      %v2712 = vpop.f32.mrf.mxu0
      %2713 = vdwg.mxu0
      %v2714 = vadd.f32 %v2640, %v2711
      %v2716 = vrot.slane %v2188, 1
      %v2717 = vrot.slane %v2189, 1
      %v2718 = vsel %vm340, %v2716, %v2717
      %v2719 = vsel %vm344, %v2718, 0
      %2721 = vmatprep.subr.mxu0 0.0
      %2722 = vmatpush1.msra.mxu0 0.0
      %2723 = vmatprep.subr.mxu0 0.0
      %2724 = vmatpush1.msra.mxu0 0.0
      %2725 = vmatprep.subr.mxu0 0.0
      %2726 = vmatpush1.msra.mxu0 0.0
      %2727 = vmatprep.subr.mxu0 0.0
      %2728 = vmatpush1.msra.mxu0 0.0
      %2729 = vmatprep.subr.mxu0 0.0
      %2730 = vmatpush1.msra.mxu0 0.0
      %2731 = vmatprep.subr.mxu0 0.0
      %2732 = vmatpush1.msra.mxu0 0.0
      %2733 = vmatprep.subr.mxu0 0.0
      %2734 = vmatpush1.msra.mxu0 0.0
      %2735 = vmatprep.subr.mxu0 0.0
      %2736 = vmatpush1.msra.mxu0 0.0
      %2737 = vmatprep.subr.mxu0 0.0
      %2738 = vmatpush1.msra.mxu0 0.0
      %2739 = vmatprep.subr.mxu0 0.0
      %2740 = vmatpush1.msra.mxu0 0.0
      %2741 = vmatprep.subr.mxu0 0.0
      %2742 = vmatpush1.msra.mxu0 0.0
      %2743 = vmatprep.subr.mxu0 0.0
      %2744 = vmatpush1.msra.mxu0 0.0
      %2745 = vmatprep.subr.mxu0 0.0
      %2746 = vmatpush1.msra.mxu0 0.0
      %2747 = vmatprep.subr.mxu0 0.0
      %2748 = vmatpush1.msra.mxu0 0.0
      %2749 = vmatprep.subr.mxu0 0.0
      %2750 = vmatpush1.msra.mxu0 0.0
      %2751 = vmatprep.subr.mxu0 0.0
      %2752 = vmatpush1.msra.mxu0 %v325
      %2753 = vmatprep.subr.mxu0 0.0
      %2754 = vmatpush2.msra.mxu0 0.0
      %2755 = vmatprep.subr.mxu0 0.0
      %2756 = vmatpush2.msra.mxu0 0.0
      %2757 = vmatprep.subr.mxu0 0.0
      %2758 = vmatpush2.msra.mxu0 0.0
      %2759 = vmatprep.subr.mxu0 0.0
      %2760 = vmatpush2.msra.mxu0 0.0
      %2761 = vmatprep.subr.mxu0 0.0
      %2762 = vmatpush2.msra.mxu0 0.0
      %2763 = vmatprep.subr.mxu0 0.0
      %2764 = vmatpush2.msra.mxu0 0.0
      %2765 = vmatprep.subr.mxu0 0.0
      %2766 = vmatpush2.msra.mxu0 0.0
      %2767 = vmatprep.subr.mxu0 0.0
      %2768 = vmatpush2.msra.mxu0 0.0
      %2769 = vmatprep.subr.mxu0 0.0
      %2770 = vmatpush2.msra.mxu0 0.0
      %2771 = vmatprep.subr.mxu0 0.0
      %2772 = vmatpush2.msra.mxu0 0.0
      %2773 = vmatprep.subr.mxu0 0.0
      %2774 = vmatpush2.msra.mxu0 0.0
      %2775 = vmatprep.subr.mxu0 0.0
      %2776 = vmatpush2.msra.mxu0 0.0
      %2777 = vmatprep.subr.mxu0 0.0
      %2778 = vmatpush2.msra.mxu0 0.0
      %2779 = vmatprep.subr.mxu0 0.0
      %2780 = vmatpush2.msra.mxu0 0.0
      %2781 = vmatprep.subr.mxu0 0.0
      %2782 = vmatpush2.msra.mxu0 0.0
      %2783 = vmatprep.subr.mxu0 0.0
      %2784 = vmatpush2.msra.mxu0 0.0
      %2785 = vmatprep.mubr.f32.mxu0 0.0
      %2786 = vmatmul.mubr.f32.gmra.mxu0 %v2719
      %v2787 = vpop.f32.mrf.mxu0
      %v2788 = vadd.f32 0.0, %v2787
      %v2789 = vpop.f32.mrf.mxu0
      %2790 = vdwg.mxu0
      %v2791 = vadd.f32 %v2714, %v2788
      %v2792 = vadd.f32 %v2791, %v946
      %s2793 = scalar_lea.vmem %s316, 24
      %2794 = vst.msk [vmem:[%s2793] sm:$0xff] %vm949, %v2792
      %s2795 = smul.u32 4, %s20
      %p2796 = scmp.lt.s32.totalorder %s19, 1
      %s2797 = scalar_select %p2796, %s19, 1
      %p2798 = scmp.lt.s32.totalorder %s2795, 7
      %s2799 = scalar_select %p2798, %s2795, 7
      %s2800 = smul.addr %s2797, 8
      %s2801 = sadd.s32 %s2799, %s2800
      %s2802 = smul.addr %s2801, 8
      %s2803 = scalar_lea.vmem %s4, %s2802
      // Predicated region
      $region37: #{downsample_forward.1} parent=35 // pred_check
        %p2804 = pneg %p149
      $region38: #{downsample_forward.1} parent=35 // pred_check_branch
        %2806 = sbr.rel (%p2804) target = $region40
      $region39: #{downsample_forward.1} parent=35 // pred_region
        %s2807 = smul.u32 4, %s20
      $region40: #{downsample_forward.1} parent=35 // pred_fallthru
        _
    $region36: #{downsample_forward.1} parent=5 // pred_fallthru
      _
    %p2808 = scmp.le.s32.totalorder 2, %s10
    // Predicated region
    $region41: #{downsample_forward.1} parent=5 // pred_check
      %p2809 = pneg %p2808
    $region42: #{downsample_forward.1} parent=5 // pred_check_branch
      %2811 = sbr.rel (%p2809) target = $region44
    $region43: #{downsample_forward.1} parent=5 // pred_region
      %s2812 = ssub.s32 %s10, 2
      // Predicated region
      $region45: #{downsample_forward.1} parent=43 // pred_check
        %p2813 = pneg %p155
      $region46: #{downsample_forward.1} parent=43 // pred_check_branch
        %2815 = sbr.rel (%p2813) target = $region48
      $region47: #{downsample_forward.1} parent=43 // pred_region
        %s2816 = smul.u32 4, %s22
        %p2817 = scmp.lt.s32.totalorder %s21, 1
        %s2818 = scalar_select %p2817, %s21, 1
        %p2819 = scmp.lt.s32.totalorder %s2816, 7
        %s2820 = scalar_select %p2819, %s2816, 7
        %s2821 = smul.addr %s2818, 8
        %s2822 = sadd.s32 %s2820, %s2821
        %s2823 = smul.addr %s2822, 8
        %s2824 = scalar_lea.vmem %s4, %s2823
      $region48: #{downsample_forward.1} parent=43 // pred_fallthru
        _
    $region44: #{downsample_forward.1} parent=5 // pred_fallthru
      _
  $region6: #{downsample_forward.1} parent=0 // loop_footer
    %s14 = sadd.s32 1, %s10
  $region7: #{downsample_forward.1} parent=0 // loop_footer_branch
    %9 = sbr.rel target = $region3
  $region8: #{downsample_forward.1} parent=0 // loop_exit
    _

</llo_original>
